<compile_context>
chip_gen: v5e
topology: v5e:2x2
jax: 0.10.0
libtpu: 0.0.40
codegen_flags: <defaults>
</compile_context>

<pallas_src>
import math

import jax
import jax.numpy as jnp
from jax import lax
from jax.experimental import pallas as pl
from jax.experimental.pallas import tpu as pltpu


def _round_up(v, m):
    return ((v + m - 1) // m) * m


# ---------------------------------------------------------------------------
# Fused Bottleneck block: one pallas_call, grid over batch.
# ---------------------------------------------------------------------------
def bottleneck_block(x, p, H, W, prepadded):
    """One fused Bottleneck block.

    x : [N, Hh, Wh, Cinp] bf16 (already in padded layout, chained blocks)  or
        [N, H,  W,  Cinp] bf16 (stage entry; this wrapper pads / polyphase-splits).
    The output is written directly in the zero-padded layout the next
    stride-1/pad-1 block consumes: [N, Hout+2, round_up(round_up(Wout,8)+2,8),
    Coutp] bf16 with the valid data at offset (1, 1) and an exactly-zero ring.
    Returns (out, Hout, Wout).
    """
    N = x.shape[0]
    s, d, has_down = p["stride"], p["dilation"], p["has_down"]
    assert s in (1, 2)
    # torch: the downsample-branch ConvBnAct pads by `dilation`; the plain
    # branch literally passes padding=1 (only shape-consistent for dilation==1).
    pad = d if has_down else 1
    if not has_down:
        assert d == 1, "non-downsample Bottleneck requires dilation==1 (as in torch)"
    Cinp, Cbp = p["wa"].shape
    Coutp = p["wc"].shape[1]
    if not has_down:
        assert Cinp == Coutp

    Hout = (H + 2 * pad - 2 * d - 1) // s + 1
    Wout = (W + 2 * pad - 2 * d - 1) // s + 1
    Wout_k = _round_up(Wout, 8)
    Mout = Hout * Wout_k
    P = s * s                                  # polyphase planes (1 or 4)
    Hh = max(-(-(H + 2 * pad) // s), Hout + (2 * d) // s)
    Wh = _round_up(max(-(-(W + 2 * pad) // s), Wout_k + (2 * d) // s), 8)
    # padded layout the NEXT (stride-1, pad-1) block expects
    Hn = Hout + 2
    Wn = _round_up(Wout_k + 2, 8)

    if prepadded:
        assert s == 1 and pad == 1 and d == 1
        assert x.shape == (N, Hh, Wh, Cinp), (x.shape, (N, Hh, Wh, Cinp))
        xin = x
    else:
        Htot, Wtot = s * Hh, s * Wh
        x_pad = jnp.pad(x, ((0, 0), (pad, Htot - H - pad),
                            (pad, Wtot - W - pad), (0, 0)))
        if s == 1:
            xin = x_pad
        else:   # polyphase split: pure rearrangement, once per stage
            xin = jnp.stack([x_pad[:, a::s, b::s, :]
                             for a in range(s) for b in range(s)], axis=1)

    # static tap -> (phase, row-shift, col-shift) mapping (trace-time Python)
    taps = []
    for ky in range(3):
        for kx in range(3):
            oy, ox = ky * d, kx * d
            taps.append(((oy % s) * s + (ox % s), oy // s, ox // s))
    f0, sy0, sx0 = (pad % s) * s + (pad % s), pad // s, pad // s
    relu_b = not has_down
    wb_diag = p["wb_diag"]
    nblk = Cbp // 128

    def kernel(*refs):
        if has_down:
            (x_ref, wa_ref, ba_ref, wb_ref, bb_ref, wc_ref, bc_ref,
             wd_ref, bd_ref, o_ref, ya_ref) = refs
        else:
            (x_ref, wa_ref, ba_ref, wb_ref, bb_ref, wc_ref, bc_ref,
             o_ref, ya_ref) = refs
            wd_ref = bd_ref = None

        def xplane(f):
            return x_ref[f] if P > 1 else x_ref[...]

        # hoisted weight / bias loads (JAX does not CSE these in unrolled loops)
        wa = wa_ref[...]
        ba = ba_ref[...]
        bb = bb_ref[...]
        bc = bc_ref[...]

        # ---- convA (1x1, BN folded into weight, ReLU) per phase plane; then
        # zero the spatial-pad ring with narrow stores so convB's shifted taps
        # see exact zero padding (convA of a zero input is relu(bias) != 0). ----
        for f in range(P):
            a, b = f // s, f % s
            xf = xplane(f).reshape(Hh * Wh, Cinp)
            ya = jnp.dot(xf, wa, preferred_element_type=jnp.float32)
            ya = jnp.maximum(ya + ba, 0.0).reshape(Hh, Wh, Cbp)
            ya_ref[f] = ya.astype(jnp.bfloat16)
            lo_r = max(0, -(-(pad - a) // s))
            hi_r = min(Hh, -(-(pad + H - a) // s))
            lo_c = max(0, -(-(pad - b) // s))
            hi_c = min(Wh, -(-(pad + W - b) // s))
            if lo_r > 0:
                ya_ref[f, 0:lo_r, :, :] = jnp.zeros((lo_r, Wh, Cbp), jnp.bfloat16)
            if hi_r < Hh:
                ya_ref[f, hi_r:Hh, :, :] = jnp.zeros((Hh - hi_r, Wh, Cbp), jnp.bfloat16)
            if lo_c > 0:
                ya_ref[f, lo_r:hi_r, 0:lo_c, :] = jnp.zeros((hi_r - lo_r, lo_c, Cbp), jnp.bfloat16)
            if hi_c < Wh:
                ya_ref[f, lo_r:hi_r, hi_c:Wh, :] = jnp.zeros((hi_r - lo_r, Wh - hi_c, Cbp), jnp.bfloat16)

        # ---- convB: 3x3 grouped conv as 9 shifted-window MXU matmuls,
        # accumulated in f32.  Diagonal 128-blocks when the groups allow. ----
        def tap(f, sy, sx, c0, c1):
            return ya_ref[f, sy:sy + Hout, sx:sx + Wout_k, c0:c1].reshape(Mout, c1 - c0)

        if wb_diag:
            parts = []
            for blk in range(nblk):
                acc = None
                for t, (f, sy, sx) in enumerate(taps):
                    dd = jnp.dot(tap(f, sy, sx, blk * 128, (blk + 1) * 128),
                                 wb_ref[t, blk], preferred_element_type=jnp.float32)
                    acc = dd if acc is None else acc + dd
                parts.append(acc)
            yb = parts[0] if nblk == 1 else jnp.concatenate(parts, axis=-1)
        else:
            acc = None
            for t, (f, sy, sx) in enumerate(taps):
                dd = jnp.dot(tap(f, sy, sx, 0, Cbp), wb_ref[t],
                             preferred_element_type=jnp.float32)
                acc = dd if acc is None else acc + dd
            yb = acc
        yb = yb + bb
        if relu_b:
            yb = jnp.maximum(yb, 0.0)
        yb = yb.astype(jnp.bfloat16)

        # ---- convC (1x1, BN folded, no activation) ----
        yc = jnp.dot(yb, wc_ref[...], preferred_element_type=jnp.float32) + bc

        # ---- shortcut: identity or fused strided 1x1 downsample + BN ----
        if P > 1:
            xs = x_ref[f0, sy0:sy0 + Hout, sx0:sx0 + Wout_k, :].reshape(Mout, Cinp)
        else:
            xs = x_ref[sy0:sy0 + Hout, sx0:sx0 + Wout_k, :].reshape(Mout, Cinp)
        if has_down:
            sc = jnp.dot(xs, wd_ref[...], preferred_element_type=jnp.float32) + bd_ref[...]
        else:
            sc = xs

        # ---- residual add + final ReLU, written directly in the next block's
        # padded layout (interior at offset (1,1); ring zeroed with narrow stores). ----
        y = jnp.maximum(yc + sc, 0.0).reshape(Hout, Wout_k, Coutp).astype(o_ref.dtype)
        o_ref[1:1 + Hout, 1:1 + Wout_k, :] = y
        zrow = jnp.zeros((1, Wn, Coutp), o_ref.dtype)
        o_ref[0:1, :, :] = zrow
        o_ref[1 + Hout:Hn, :, :] = zrow
        o_ref[1:1 + Hout, 0:1, :] = jnp.zeros((Hout, 1, Coutp), o_ref.dtype)
        o_ref[1:1 + Hout, 1 + Wout_k:Wn, :] = jnp.zeros((Hout, Wn - 1 - Wout_k, Coutp), o_ref.dtype)
        if Wout_k > Wout:   # width round-up columns -> exact zeros for the next block
            o_ref[1:1 + Hout, 1 + Wout:1 + Wout_k, :] = jnp.zeros(
                (Hout, Wout_k - Wout, Coutp), o_ref.dtype)

    # ---- specs / call ----
    if s == 1:
        x_spec = pl.BlockSpec((None, Hh, Wh, Cinp), lambda n: (n, 0, 0, 0))
    else:
        x_spec = pl.BlockSpec((None, P, Hh, Wh, Cinp), lambda n: (n, 0, 0, 0, 0))
    if wb_diag:
        wb_spec = pl.BlockSpec((9, nblk, 128, 128), lambda n: (0, 0, 0, 0))
        wb_bytes = 9 * nblk * 128 * 128 * 2
    else:
        wb_spec = pl.BlockSpec((9, Cbp, Cbp), lambda n: (0, 0, 0))
        wb_bytes = 9 * Cbp * Cbp * 2
    in_specs = [x_spec,
                pl.BlockSpec((Cinp, Cbp), lambda n: (0, 0)),
                pl.BlockSpec((1, Cbp), lambda n: (0, 0)),
                wb_spec,
                pl.BlockSpec((1, Cbp), lambda n: (0, 0)),
                pl.BlockSpec((Cbp, Coutp), lambda n: (0, 0)),
                pl.BlockSpec((1, Coutp), lambda n: (0, 0))]
    args = [xin, p["wa"], p["ba"], p["wb"], p["bb"], p["wc"], p["bc"]]
    if has_down:
        in_specs += [pl.BlockSpec((Cinp, Coutp), lambda n: (0, 0)),
                     pl.BlockSpec((1, Coutp), lambda n: (0, 0))]
        args += [p["wd"], p["bd"]]

    # VMEM budget from the actual per-step working set (48 MiB cap for v7x headroom).
    x_blk = (P if s > 1 else 1) * Hh * Wh * Cinp * 2
    out_blk = Hn * Wn * Coutp * 2
    w_bytes = (Cinp * Cbp + Cbp * Coutp + (Cinp * Coutp if has_down else 0)) * 2 + wb_bytes
    scr_bytes = P * Hh * Wh * Cbp * 2
    live_f32 = (Hh * Wh * Cbp + Mout * Cbp + 2 * Mout * Coutp) * 4
    est = 2 * (x_blk + out_blk + w_bytes) + scr_bytes + live_f32
    vmem_limit = int(min(max(2 * est + (4 << 20), 16 << 20), 48 << 20))

    out = pl.pallas_call(
        kernel,
        out_shape=jax.ShapeDtypeStruct((N, Hn, Wn, Coutp), jnp.bfloat16),
        grid_spec=pltpu.PrefetchScalarGridSpec(
            num_scalar_prefetch=0,
            grid=(N,),
            in_specs=in_specs,
            out_specs=pl.BlockSpec((None, Hn, Wn, Coutp), lambda n: (n, 0, 0, 0)),
            scratch_shapes=[pltpu.VMEM((P, Hh, Wh, Cbp), jnp.bfloat16)],
        ),
        compiler_params=pltpu.CompilerParams(
            dimension_semantics=("parallel",),
            vmem_limit_bytes=vmem_limit),
    )(*args)
    return out, Hout, Wout


def regstage_apply(x_nchw, blocks):
    """Run the whole RegStage.  Input NCHW f32, output NCHW f32."""
    x = jnp.transpose(x_nchw, (0, 2, 3, 1)).astype(jnp.bfloat16)   # NCHW -> NHWC
    N, H, W, cin0 = x.shape
    cinp0 = blocks[0]["wa"].shape[0]
    x = jnp.pad(x, ((0, 0), (0, 0), (0, 0), (0, cinp0 - cin0)))
    prepadded = False
    for p in blocks:
        x, H, W = bottleneck_block(x, p, H, W, prepadded)
        prepadded = True                 # outputs stay in the padded bf16 layout
    out_chs = blocks[-1]["out_chs"]
    y = x[:, 1:1 + H, 1:1 + W, :out_chs].astype(jnp.float32)
    return jnp.transpose(y, (0, 3, 1, 2))                          # NHWC -> NCHW


# ---------------------------------------------------------------------------
# Parameter construction (deterministic, synthetic; BN folded, bf16 weights).
# ---------------------------------------------------------------------------
def _fold_bn(key, cout):
    kg, kb, km, kv = jax.random.split(key, 4)
    gamma = 1.0 + 0.1 * jax.random.normal(kg, (cout,), jnp.float32)
    beta = 0.1 * jax.random.normal(kb, (cout,), jnp.float32)
    mean = 0.1 * jax.random.normal(km, (cout,), jnp.float32)
    var = 1.0 + 0.1 * jnp.abs(jax.random.normal(kv, (cout,), jnp.float32))
    scale = gamma / jnp.sqrt(var + 1e-5)
    return scale, beta - mean * scale


def _conv1x1_bn(key, cin, cout, cin_p, cout_p):
    kw, kbn = jax.random.split(key)
    w = jax.random.normal(kw, (cin, cout), jnp.float32) / math.sqrt(cin)
    scale, bias = _fold_bn(kbn, cout)
    w = w * scale[None, :]
    w = jnp.pad(w, ((0, cin_p - cin), (0, cout_p - cout))).astype(jnp.bfloat16)
    return w, jnp.pad(bias, (0, cout_p - cout)).reshape(1, cout_p)


def _conv3x3_bn_grouped(key, chs, groups, chs_p):
    kw, kbn = jax.random.split(key)
    cg = chs // groups
    wg = jax.random.normal(kw, (3, 3, groups, cg, cg), jnp.float32) / math.sqrt(9 * cg)
    w = jnp.zeros((3, 3, chs, chs), jnp.float32)
    for g in range(groups):  # exact block-diagonal grouped weights
        w = w.at[:, :, g * cg:(g + 1) * cg, g * cg:(g + 1) * cg].set(wg[:, :, g])
    scale, bias = _fold_bn(kbn, chs)
    w = w * scale[None, None, None, :]
    w = jnp.pad(w, ((0, 0), (0, 0), (0, chs_p - chs), (0, chs_p - chs)))
    w_full = w.astype(jnp.bfloat16)                       # (3,3,chs_p,chs_p), reference only
    w9 = w_full.reshape(9, chs_p, chs_p)
    # 128-wide diagonal-block packing is exact when no group straddles a 128 boundary.
    diag_ok = all((g * cg) // 128 == ((g + 1) * cg - 1) // 128 for g in range(groups))
    if diag_ok:
        nblk = chs_p // 128
        wb = jnp.stack([w9[:, b * 128:(b + 1) * 128, b * 128:(b + 1) * 128]
                        for b in range(nblk)], axis=1)    # (9, nblk, 128, 128)
    else:
        wb = w9                                            # dense fallback (9, Cbp, Cbp)
    return wb, jnp.pad(bias, (0, chs_p - chs)).reshape(1, chs_p), diag_ok, w_full


def build_regstage_params(key, in_chs, out_chs, stride, dilation, depth,
                          bottle_ratio, group_width):
    blocks = []
    first_dilation = 1 if dilation in (1, 2) else 2
    for i in range(depth):
        block_stride = stride if i == 0 else 1
        block_in = in_chs if i == 0 else out_chs
        block_dil = first_dilation if i == 0 else dilation
        bott = int(round(out_chs * bottle_ratio))
        assert bott % group_width == 0, "bottleneck channels must be divisible by group_width"
        groups = bott // group_width
        has_down = (block_in != out_chs) or (block_stride != 1)
        cin_p = _round_up(block_in, 128)
        cb_p = _round_up(bott, 128)
        cout_p = _round_up(out_chs, 128)
        key, ka, kb_, kc, kd = jax.random.split(key, 5)
        wa, ba = _conv1x1_bn(ka, block_in, bott, cin_p, cb_p)
        wb, bb, wb_diag, wb_full = _conv3x3_bn_grouped(kb_, bott, groups, cb_p)
        wc, bc = _conv1x1_bn(kc, bott, out_chs, cb_p, cout_p)
        p = dict(stride=block_stride, dilation=block_dil, has_down=has_down,
                 in_chs=block_in, out_chs=out_chs, bott=bott,
                 wa=wa, ba=ba, wb=wb, wb_diag=wb_diag, wb_full=wb_full,
                 bb=bb, wc=wc, bc=bc)
        if has_down:
            p["wd"], p["bd"] = _conv1x1_bn(kd, block_in, out_chs, cin_p, cout_p)
        blocks.append(p)
    return blocks


# ---------------------------------------------------------------------------
# Pure-JAX reference (lax.conv, f32 HIGHEST) mirroring the kernel's bf16
# rounding points (including bf16 inter-block activations), for a tight check.
# ---------------------------------------------------------------------------
def _rb(x):
    return x.astype(jnp.bfloat16).astype(jnp.float32)


def _ref_conv(x, w, stride=1, dilation=1, pad=0):
    return lax.conv_general_dilated(
        x, w, (stride, stride), ((pad, pad), (pad, pad)),
        rhs_dilation=(dilation, dilation),
        dimension_numbers=("NHWC", "HWIO", "NHWC"),
        precision=lax.Precision.HIGHEST)


def ref_regstage(x_nchw, blocks):
    x = _rb(jnp.transpose(x_nchw, (0, 2, 3, 1)).astype(jnp.float32))
    for p in blocks:
        cin, cout, cb = p["in_chs"], p["out_chs"], p["bott"]
        s, d = p["stride"], p["dilation"]
        pad_b = d if p["has_down"] else 1
        wa = p["wa"][:cin, :cb].astype(jnp.float32)[None, None]
        wb = p["wb_full"][:, :, :cb, :cb].astype(jnp.float32)
        wc = p["wc"][:cb, :cout].astype(jnp.float32)[None, None]
        ya = jnp.maximum(_ref_conv(x, wa) + p["ba"][0, :cb], 0.0)
        yb = _ref_conv(_rb(ya), wb, stride=s, dilation=d, pad=pad_b) + p["bb"][0, :cb]
        if not p["has_down"]:
            yb = jnp.maximum(yb, 0.0)
        yc = _ref_conv(_rb(yb), wc) + p["bc"][0, :cout]
        if p["has_down"]:
            wd = p["wd"][:cin, :cout].astype(jnp.float32)[None, None]
            sc = _ref_conv(x, wd, stride=s) + p["bd"][0, :cout]
        else:
            sc = x
        x = _rb(jnp.maximum(yc + sc, 0.0))   # mirrors the kernel's bf16 block output
    return jnp.transpose(x, (0, 3, 1, 2))


# ---------------------------------------------------------------------------
if __name__ == "__main__":
    key = jax.random.PRNGKey(0)
    kx, kp = jax.random.split(key)

    # RegStage(in_chs=8, out_chs=16, stride=2, dilation=1, depth=2,
    #          bottle_ratio=1.0, group_width=8)   [se_ratio defaults to 0.0]
    N, in_chs, H = 2, 8, 16
    out_chs, stride, dilation, depth = 16, 2, 1, 2
    bottle_ratio, group_width = 1.0, 8

    x_nchw = jax.random.normal(kx, (N, in_chs, H, H), jnp.float32)
    blocks = build_regstage_params(kp, in_chs, out_chs, stride, dilation,
                                   depth, bottle_ratio, group_width)

    y = jax.block_until_ready(regstage_apply(x_nchw, blocks))
    assert y.shape == (N, out_chs, H // stride, H // stride), y.shape

    y_ref = jax.block_until_ready(ref_regstage(x_nchw, blocks))
    err = float(jnp.max(jnp.abs(y - y_ref)))
    assert err < 1e-2, f"max abs error vs reference: {err}"

    print("KERNEL_OK")
</pallas_src>

<mosaic_0001>
module attributes {stable_mosaic.version = 11 : i64} {
  func.func @kernel(%arg0: i32, %arg1: memref<1x4x9x16x128xbf16, #tpu.memory_space<vmem>>, %arg2: memref<128x128xbf16, #tpu.memory_space<vmem>>, %arg3: memref<1x128xf32, #tpu.memory_space<vmem>>, %arg4: memref<9x1x128x128xbf16, #tpu.memory_space<vmem>>, %arg5: memref<1x128xf32, #tpu.memory_space<vmem>>, %arg6: memref<128x128xbf16, #tpu.memory_space<vmem>>, %arg7: memref<1x128xf32, #tpu.memory_space<vmem>>, %arg8: memref<128x128xbf16, #tpu.memory_space<vmem>>, %arg9: memref<1x128xf32, #tpu.memory_space<vmem>>, %arg10: memref<1x10x16x128xbf16, #tpu.memory_space<vmem>>, %arg11: memref<4x9x16x128xbf16, #tpu.memory_space<vmem>>) attributes {dimension_semantics = [#tpu.dimension_semantics<parallel>], iteration_bounds = array<i64: 2>, scalar_prefetch = 0 : i64, scratch_operands = 1 : i64, tpu.core_type = #tpu.core_type<tc>, window_params = [{transform_indices = @transform_0, window_bounds = array<i64: 1, 4, 9, 16, 128>}, {pipeline_mode = #tpu.pipeline_mode<synchronous>, transform_indices = @transform_1, window_bounds = array<i64: 128, 128>}, {pipeline_mode = #tpu.pipeline_mode<synchronous>, transform_indices = @transform_2, window_bounds = array<i64: 1, 128>}, {pipeline_mode = #tpu.pipeline_mode<synchronous>, transform_indices = @transform_3, window_bounds = array<i64: 9, 1, 128, 128>}, {pipeline_mode = #tpu.pipeline_mode<synchronous>, transform_indices = @transform_4, window_bounds = array<i64: 1, 128>}, {pipeline_mode = #tpu.pipeline_mode<synchronous>, transform_indices = @transform_5, window_bounds = array<i64: 128, 128>}, {pipeline_mode = #tpu.pipeline_mode<synchronous>, transform_indices = @transform_6, window_bounds = array<i64: 1, 128>}, {pipeline_mode = #tpu.pipeline_mode<synchronous>, transform_indices = @transform_7, window_bounds = array<i64: 128, 128>}, {pipeline_mode = #tpu.pipeline_mode<synchronous>, transform_indices = @transform_8, window_bounds = array<i64: 1, 128>}, {transform_indices = @transform_9, window_bounds = array<i64: 1, 10, 16, 128>}]} {
    %c0 = arith.constant 0 : index
    %c0_0 = arith.constant 0 : index
    %0 = vector.load %arg2[%c0, %c0_0] : memref<128x128xbf16, #tpu.memory_space<vmem>>, vector<128x128xbf16>
    %c0_1 = arith.constant 0 : index
    %c0_2 = arith.constant 0 : index
    %1 = vector.load %arg3[%c0_1, %c0_2] : memref<1x128xf32, #tpu.memory_space<vmem>>, vector<1x128xf32>
    %c0_3 = arith.constant 0 : index
    %c0_4 = arith.constant 0 : index
    %2 = vector.load %arg5[%c0_3, %c0_4] : memref<1x128xf32, #tpu.memory_space<vmem>>, vector<1x128xf32>
    %c0_5 = arith.constant 0 : index
    %c0_6 = arith.constant 0 : index
    %3 = vector.load %arg7[%c0_5, %c0_6] : memref<1x128xf32, #tpu.memory_space<vmem>>, vector<1x128xf32>
    %c0_7 = arith.constant 0 : index
    %c0_8 = arith.constant 0 : index
    %c0_9 = arith.constant 0 : index
    %c0_10 = arith.constant 0 : index
    %c0_11 = arith.constant 0 : index
    %4 = vector.load %arg1[%c0_7, %c0_8, %c0_9, %c0_10, %c0_11] : memref<1x4x9x16x128xbf16, #tpu.memory_space<vmem>>, vector<1x1x9x16x128xbf16>
    %5 = vector.shape_cast %4 : vector<1x1x9x16x128xbf16> to vector<9x16x128xbf16>
    %6 = vector.shape_cast %5 : vector<9x16x128xbf16> to vector<144x128xbf16>
    %cst = arith.constant dense<0.000000e+00> : vector<144x128xf32>
    %7 = tpu.matmul %6, %0, %cst {dimension_numbers = #tpu.dot_dimension_numbers<[1], [0], [0], [1], [0, 0, 1, 1], [], []>} : vector<144x128xbf16>, vector<128x128xbf16>, vector<144x128xf32> -> vector<144x128xf32>
    %8 = vector.broadcast %1 : vector<1x128xf32> to vector<144x128xf32>
    %9 = arith.addf %7, %8 : vector<144x128xf32>
    %cst_12 = arith.constant 0.000000e+00 : f32
    %10 = vector.broadcast %cst_12 : f32 to vector<144x128xf32>
    %11 = arith.maximumf %9, %10 : vector<144x128xf32>
    %12 = vector.shape_cast %11 : vector<144x128xf32> to vector<9x16x128xf32>
    %13 = arith.truncf %12 : vector<9x16x128xf32> to vector<9x16x128xbf16>
    %c0_13 = arith.constant 0 : index
    %c0_14 = arith.constant 0 : index
    %c0_15 = arith.constant 0 : index
    %c0_16 = arith.constant 0 : index
    %14 = vector.load %arg11[%c0_13, %c0_14, %c0_15, %c0_16] : memref<4x9x16x128xbf16, #tpu.memory_space<vmem>>, vector<1x9x16x128xbf16>
    %15 = vector.shape_cast %14 : vector<1x9x16x128xbf16> to vector<9x16x128xbf16>
    %16 = vector.shape_cast %13 : vector<9x16x128xbf16> to vector<1x9x16x128xbf16>
    tpu.vector_store %arg11[%c0_13, %c0_14, %c0_15, %c0_16], %16 {strides = array<i32>} : memref<4x9x16x128xbf16, #tpu.memory_space<vmem>>, vector<1x9x16x128xbf16>,
    %cst_17 = arith.constant 0.000000e+00 : bf16
    %17 = vector.broadcast %cst_17 : bf16 to vector<1x16x128xbf16>
    %c0_18 = arith.constant 0 : index
    %c0_19 = arith.constant 0 : index
    %c0_20 = arith.constant 0 : index
    %c0_21 = arith.constant 0 : index
    %18 = vector.load %arg11[%c0_18, %c0_19, %c0_20, %c0_21] : memref<4x9x16x128xbf16, #tpu.memory_space<vmem>>, vector<1x1x16x128xbf16>
    %19 = vector.shape_cast %18 : vector<1x1x16x128xbf16> to vector<1x16x128xbf16>
    %20 = vector.shape_cast %17 : vector<1x16x128xbf16> to vector<1x1x16x128xbf16>
    tpu.vector_store %arg11[%c0_18, %c0_19, %c0_20, %c0_21], %20 {strides = array<i32>} : memref<4x9x16x128xbf16, #tpu.memory_space<vmem>>, vector<1x1x16x128xbf16>,
    %cst_22 = arith.constant 0.000000e+00 : bf16
    %21 = vector.broadcast %cst_22 : bf16 to vector<8x1x128xbf16>
    %c0_23 = arith.constant 0 : index
    %c1 = arith.constant 1 : index
    %c0_24 = arith.constant 0 : index
    %c0_25 = arith.constant 0 : index
    %22 = vector.load %arg11[%c0_23, %c1, %c0_24, %c0_25] : memref<4x9x16x128xbf16, #tpu.memory_space<vmem>>, vector<1x8x1x128xbf16>
    %23 = vector.shape_cast %22 : vector<1x8x1x128xbf16> to vector<8x1x128xbf16>
    %24 = vector.shape_cast %21 : vector<8x1x128xbf16> to vector<1x8x1x128xbf16>
    tpu.vector_store %arg11[%c0_23, %c1, %c0_24, %c0_25], %24 {strides = array<i32>} : memref<4x9x16x128xbf16, #tpu.memory_space<vmem>>, vector<1x8x1x128xbf16>,
    %cst_26 = arith.constant 0.000000e+00 : bf16
    %25 = vector.broadcast %cst_26 : bf16 to vector<8x7x128xbf16>
    %c0_27 = arith.constant 0 : index
    %c1_28 = arith.constant 1 : index
    %c9 = arith.constant 9 : index
    %c0_29 = arith.constant 0 : index
    %26 = vector.load %arg11[%c0_27, %c1_28, %c9, %c0_29] : memref<4x9x16x128xbf16, #tpu.memory_space<vmem>>, vector<1x8x7x128xbf16>
    %27 = vector.shape_cast %26 : vector<1x8x7x128xbf16> to vector<8x7x128xbf16>
    %28 = vector.shape_cast %25 : vector<8x7x128xbf16> to vector<1x8x7x128xbf16>
    tpu.vector_store %arg11[%c0_27, %c1_28, %c9, %c0_29], %28 {strides = array<i32>} : memref<4x9x16x128xbf16, #tpu.memory_space<vmem>>, vector<1x8x7x128xbf16>,
    %c0_30 = arith.constant 0 : index
    %c1_31 = arith.constant 1 : index
    %c0_32 = arith.constant 0 : index
    %c0_33 = arith.constant 0 : index
    %c0_34 = arith.constant 0 : index
    %29 = vector.load %arg1[%c0_30, %c1_31, %c0_32, %c0_33, %c0_34] : memref<1x4x9x16x128xbf16, #tpu.memory_space<vmem>>, vector<1x1x9x16x128xbf16>
    %30 = vector.shape_cast %29 : vector<1x1x9x16x128xbf16> to vector<9x16x128xbf16>
    %31 = vector.shape_cast %30 : vector<9x16x128xbf16> to vector<144x128xbf16>
    %cst_35 = arith.constant dense<0.000000e+00> : vector<144x128xf32>
    %32 = tpu.matmul %31, %0, %cst_35 {dimension_numbers = #tpu.dot_dimension_numbers<[1], [0], [0], [1], [0, 0, 1, 1], [], []>} : vector<144x128xbf16>, vector<128x128xbf16>, vector<144x128xf32> -> vector<144x128xf32>
    %33 = vector.broadcast %1 : vector<1x128xf32> to vector<144x128xf32>
    %34 = arith.addf %32, %33 : vector<144x128xf32>
    %cst_36 = arith.constant 0.000000e+00 : f32
    %35 = vector.broadcast %cst_36 : f32 to vector<144x128xf32>
    %36 = arith.maximumf %34, %35 : vector<144x128xf32>
    %37 = vector.shape_cast %36 : vector<144x128xf32> to vector<9x16x128xf32>
    %38 = arith.truncf %37 : vector<9x16x128xf32> to vector<9x16x128xbf16>
    %c1_37 = arith.constant 1 : index
    %c0_38 = arith.constant 0 : index
    %c0_39 = arith.constant 0 : index
    %c0_40 = arith.constant 0 : index
    %39 = vector.load %arg11[%c1_37, %c0_38, %c0_39, %c0_40] : memref<4x9x16x128xbf16, #tpu.memory_space<vmem>>, vector<1x9x16x128xbf16>
    %40 = vector.shape_cast %39 : vector<1x9x16x128xbf16> to vector<9x16x128xbf16>
    %41 = vector.shape_cast %38 : vector<9x16x128xbf16> to vector<1x9x16x128xbf16>
    tpu.vector_store %arg11[%c1_37, %c0_38, %c0_39, %c0_40], %41 {strides = array<i32>} : memref<4x9x16x128xbf16, #tpu.memory_space<vmem>>, vector<1x9x16x128xbf16>,
    %cst_41 = arith.constant 0.000000e+00 : bf16
    %42 = vector.broadcast %cst_41 : bf16 to vector<1x16x128xbf16>
    %c1_42 = arith.constant 1 : index
    %c0_43 = arith.constant 0 : index
    %c0_44 = arith.constant 0 : index
    %c0_45 = arith.constant 0 : index
    %43 = vector.load %arg11[%c1_42, %c0_43, %c0_44, %c0_45] : memref<4x9x16x128xbf16, #tpu.memory_space<vmem>>, vector<1x1x16x128xbf16>
    %44 = vector.shape_cast %43 : vector<1x1x16x128xbf16> to vector<1x16x128xbf16>
    %45 = vector.shape_cast %42 : vector<1x16x128xbf16> to vector<1x1x16x128xbf16>
    tpu.vector_store %arg11[%c1_42, %c0_43, %c0_44, %c0_45], %45 {strides = array<i32>} : memref<4x9x16x128xbf16, #tpu.memory_space<vmem>>, vector<1x1x16x128xbf16>,
    %cst_46 = arith.constant 0.000000e+00 : bf16
    %46 = vector.broadcast %cst_46 : bf16 to vector<8x8x128xbf16>
    %c1_47 = arith.constant 1 : index
    %c1_48 = arith.constant 1 : index
    %c8 = arith.constant 8 : index
    %c0_49 = arith.constant 0 : index
    %47 = vector.load %arg11[%c1_47, %c1_48, %c8, %c0_49] : memref<4x9x16x128xbf16, #tpu.memory_space<vmem>>, vector<1x8x8x128xbf16>
    %48 = vector.shape_cast %47 : vector<1x8x8x128xbf16> to vector<8x8x128xbf16>
    %49 = vector.shape_cast %46 : vector<8x8x128xbf16> to vector<1x8x8x128xbf16>
    tpu.vector_store %arg11[%c1_47, %c1_48, %c8, %c0_49], %49 {strides = array<i32>} : memref<4x9x16x128xbf16, #tpu.memory_space<vmem>>, vector<1x8x8x128xbf16>,
    %c0_50 = arith.constant 0 : index
    %c2 = arith.constant 2 : index
    %c0_51 = arith.constant 0 : index
    %c0_52 = arith.constant 0 : index
    %c0_53 = arith.constant 0 : index
    %50 = vector.load %arg1[%c0_50, %c2, %c0_51, %c0_52, %c0_53] : memref<1x4x9x16x128xbf16, #tpu.memory_space<vmem>>, vector<1x1x9x16x128xbf16>
    %51 = vector.shape_cast %50 : vector<1x1x9x16x128xbf16> to vector<9x16x128xbf16>
    %52 = vector.shape_cast %51 : vector<9x16x128xbf16> to vector<144x128xbf16>
    %cst_54 = arith.constant dense<0.000000e+00> : vector<144x128xf32>
    %53 = tpu.matmul %52, %0, %cst_54 {dimension_numbers = #tpu.dot_dimension_numbers<[1], [0], [0], [1], [0, 0, 1, 1], [], []>} : vector<144x128xbf16>, vector<128x128xbf16>, vector<144x128xf32> -> vector<144x128xf32>
    %54 = vector.broadcast %1 : vector<1x128xf32> to vector<144x128xf32>
    %55 = arith.addf %53, %54 : vector<144x128xf32>
    %cst_55 = arith.constant 0.000000e+00 : f32
    %56 = vector.broadcast %cst_55 : f32 to vector<144x128xf32>
    %57 = arith.maximumf %55, %56 : vector<144x128xf32>
    %58 = vector.shape_cast %57 : vector<144x128xf32> to vector<9x16x128xf32>
    %59 = arith.truncf %58 : vector<9x16x128xf32> to vector<9x16x128xbf16>
    %c2_56 = arith.constant 2 : index
    %c0_57 = arith.constant 0 : index
    %c0_58 = arith.constant 0 : index
    %c0_59 = arith.constant 0 : index
    %60 = vector.load %arg11[%c2_56, %c0_57, %c0_58, %c0_59] : memref<4x9x16x128xbf16, #tpu.memory_space<vmem>>, vector<1x9x16x128xbf16>
    %61 = vector.shape_cast %60 : vector<1x9x16x128xbf16> to vector<9x16x128xbf16>
    %62 = vector.shape_cast %59 : vector<9x16x128xbf16> to vector<1x9x16x128xbf16>
    tpu.vector_store %arg11[%c2_56, %c0_57, %c0_58, %c0_59], %62 {strides = array<i32>} : memref<4x9x16x128xbf16, #tpu.memory_space<vmem>>, vector<1x9x16x128xbf16>,
    %cst_60 = arith.constant 0.000000e+00 : bf16
    %63 = vector.broadcast %cst_60 : bf16 to vector<1x16x128xbf16>
    %c2_61 = arith.constant 2 : index
    %c8_62 = arith.constant 8 : index
    %c0_63 = arith.constant 0 : index
    %c0_64 = arith.constant 0 : index
    %64 = vector.load %arg11[%c2_61, %c8_62, %c0_63, %c0_64] : memref<4x9x16x128xbf16, #tpu.memory_space<vmem>>, vector<1x1x16x128xbf16>
    %65 = vector.shape_cast %64 : vector<1x1x16x128xbf16> to vector<1x16x128xbf16>
    %66 = vector.shape_cast %63 : vector<1x16x128xbf16> to vector<1x1x16x128xbf16>
    tpu.vector_store %arg11[%c2_61, %c8_62, %c0_63, %c0_64], %66 {strides = array<i32>} : memref<4x9x16x128xbf16, #tpu.memory_space<vmem>>, vector<1x1x16x128xbf16>,
    %cst_65 = arith.constant 0.000000e+00 : bf16
    %67 = vector.broadcast %cst_65 : bf16 to vector<8x1x128xbf16>
    %c2_66 = arith.constant 2 : index
    %c0_67 = arith.constant 0 : index
    %c0_68 = arith.constant 0 : index
    %c0_69 = arith.constant 0 : index
    %68 = vector.load %arg11[%c2_66, %c0_67, %c0_68, %c0_69] : memref<4x9x16x128xbf16, #tpu.memory_space<vmem>>, vector<1x8x1x128xbf16>
    %69 = vector.shape_cast %68 : vector<1x8x1x128xbf16> to vector<8x1x128xbf16>
    %70 = vector.shape_cast %67 : vector<8x1x128xbf16> to vector<1x8x1x128xbf16>
    tpu.vector_store %arg11[%c2_66, %c0_67, %c0_68, %c0_69], %70 {strides = array<i32>} : memref<4x9x16x128xbf16, #tpu.memory_space<vmem>>, vector<1x8x1x128xbf16>,
    %cst_70 = arith.constant 0.000000e+00 : bf16
    %71 = vector.broadcast %cst_70 : bf16 to vector<8x7x128xbf16>
    %c2_71 = arith.constant 2 : index
    %c0_72 = arith.constant 0 : index
    %c9_73 = arith.constant 9 : index
    %c0_74 = arith.constant 0 : index
    %72 = vector.load %arg11[%c2_71, %c0_72, %c9_73, %c0_74] : memref<4x9x16x128xbf16, #tpu.memory_space<vmem>>, vector<1x8x7x128xbf16>
    %73 = vector.shape_cast %72 : vector<1x8x7x128xbf16> to vector<8x7x128xbf16>
    %74 = vector.shape_cast %71 : vector<8x7x128xbf16> to vector<1x8x7x128xbf16>
    tpu.vector_store %arg11[%c2_71, %c0_72, %c9_73, %c0_74], %74 {strides = array<i32>} : memref<4x9x16x128xbf16, #tpu.memory_space<vmem>>, vector<1x8x7x128xbf16>,
    %c0_75 = arith.constant 0 : index
    %c3 = arith.constant 3 : index
    %c0_76 = arith.constant 0 : index
    %c0_77 = arith.constant 0 : index
    %c0_78 = arith.constant 0 : index
    %75 = vector.load %arg1[%c0_75, %c3, %c0_76, %c0_77, %c0_78] : memref<1x4x9x16x128xbf16, #tpu.memory_space<vmem>>, vector<1x1x9x16x128xbf16>
    %76 = vector.shape_cast %75 : vector<1x1x9x16x128xbf16> to vector<9x16x128xbf16>
    %77 = vector.shape_cast %76 : vector<9x16x128xbf16> to vector<144x128xbf16>
    %cst_79 = arith.constant dense<0.000000e+00> : vector<144x128xf32>
    %78 = tpu.matmul %77, %0, %cst_79 {dimension_numbers = #tpu.dot_dimension_numbers<[1], [0], [0], [1], [0, 0, 1, 1], [], []>} : vector<144x128xbf16>, vector<128x128xbf16>, vector<144x128xf32> -> vector<144x128xf32>
    %79 = vector.broadcast %1 : vector<1x128xf32> to vector<144x128xf32>
    %80 = arith.addf %78, %79 : vector<144x128xf32>
    %cst_80 = arith.constant 0.000000e+00 : f32
    %81 = vector.broadcast %cst_80 : f32 to vector<144x128xf32>
    %82 = arith.maximumf %80, %81 : vector<144x128xf32>
    %83 = vector.shape_cast %82 : vector<144x128xf32> to vector<9x16x128xf32>
    %84 = arith.truncf %83 : vector<9x16x128xf32> to vector<9x16x128xbf16>
    %c3_81 = arith.constant 3 : index
    %c0_82 = arith.constant 0 : index
    %c0_83 = arith.constant 0 : index
    %c0_84 = arith.constant 0 : index
    %85 = vector.load %arg11[%c3_81, %c0_82, %c0_83, %c0_84] : memref<4x9x16x128xbf16, #tpu.memory_space<vmem>>, vector<1x9x16x128xbf16>
    %86 = vector.shape_cast %85 : vector<1x9x16x128xbf16> to vector<9x16x128xbf16>
    %87 = vector.shape_cast %84 : vector<9x16x128xbf16> to vector<1x9x16x128xbf16>
    tpu.vector_store %arg11[%c3_81, %c0_82, %c0_83, %c0_84], %87 {strides = array<i32>} : memref<4x9x16x128xbf16, #tpu.memory_space<vmem>>, vector<1x9x16x128xbf16>,
    %cst_85 = arith.constant 0.000000e+00 : bf16
    %88 = vector.broadcast %cst_85 : bf16 to vector<1x16x128xbf16>
    %c3_86 = arith.constant 3 : index
    %c8_87 = arith.constant 8 : index
    %c0_88 = arith.constant 0 : index
    %c0_89 = arith.constant 0 : index
    %89 = vector.load %arg11[%c3_86, %c8_87, %c0_88, %c0_89] : memref<4x9x16x128xbf16, #tpu.memory_space<vmem>>, vector<1x1x16x128xbf16>
    %90 = vector.shape_cast %89 : vector<1x1x16x128xbf16> to vector<1x16x128xbf16>
    %91 = vector.shape_cast %88 : vector<1x16x128xbf16> to vector<1x1x16x128xbf16>
    tpu.vector_store %arg11[%c3_86, %c8_87, %c0_88, %c0_89], %91 {strides = array<i32>} : memref<4x9x16x128xbf16, #tpu.memory_space<vmem>>, vector<1x1x16x128xbf16>,
    %cst_90 = arith.constant 0.000000e+00 : bf16
    %92 = vector.broadcast %cst_90 : bf16 to vector<8x8x128xbf16>
    %c3_91 = arith.constant 3 : index
    %c0_92 = arith.constant 0 : index
    %c8_93 = arith.constant 8 : index
    %c0_94 = arith.constant 0 : index
    %93 = vector.load %arg11[%c3_91, %c0_92, %c8_93, %c0_94] : memref<4x9x16x128xbf16, #tpu.memory_space<vmem>>, vector<1x8x8x128xbf16>
    %94 = vector.shape_cast %93 : vector<1x8x8x128xbf16> to vector<8x8x128xbf16>
    %95 = vector.shape_cast %92 : vector<8x8x128xbf16> to vector<1x8x8x128xbf16>
    tpu.vector_store %arg11[%c3_91, %c0_92, %c8_93, %c0_94], %95 {strides = array<i32>} : memref<4x9x16x128xbf16, #tpu.memory_space<vmem>>, vector<1x8x8x128xbf16>,
    %c0_95 = arith.constant 0 : index
    %c0_96 = arith.constant 0 : index
    %c0_97 = arith.constant 0 : index
    %c0_98 = arith.constant 0 : index
    %96 = vector.load %arg11[%c0_95, %c0_96, %c0_97, %c0_98] : memref<4x9x16x128xbf16, #tpu.memory_space<vmem>>, vector<1x8x8x128xbf16>
    %97 = vector.shape_cast %96 : vector<1x8x8x128xbf16> to vector<8x8x128xbf16>
    %98 = vector.shape_cast %97 : vector<8x8x128xbf16> to vector<64x128xbf16>
    %c0_99 = arith.constant 0 : index
    %c0_100 = arith.constant 0 : index
    %c0_101 = arith.constant 0 : index
    %c0_102 = arith.constant 0 : index
    %99 = vector.load %arg4[%c0_99, %c0_100, %c0_101, %c0_102] : memref<9x1x128x128xbf16, #tpu.memory_space<vmem>>, vector<1x1x128x128xbf16>
    %100 = vector.shape_cast %99 : vector<1x1x128x128xbf16> to vector<128x128xbf16>
    %cst_103 = arith.constant dense<0.000000e+00> : vector<64x128xf32>
    %101 = tpu.matmul %98, %100, %cst_103 {dimension_numbers = #tpu.dot_dimension_numbers<[1], [0], [0], [1], [0, 0, 1, 1], [], []>} : vector<64x128xbf16>, vector<128x128xbf16>, vector<64x128xf32> -> vector<64x128xf32>
    %c1_104 = arith.constant 1 : index
    %c0_105 = arith.constant 0 : index
    %c0_106 = arith.constant 0 : index
    %c0_107 = arith.constant 0 : index
    %102 = vector.load %arg11[%c1_104, %c0_105, %c0_106, %c0_107] : memref<4x9x16x128xbf16, #tpu.memory_space<vmem>>, vector<1x8x8x128xbf16>
    %103 = vector.shape_cast %102 : vector<1x8x8x128xbf16> to vector<8x8x128xbf16>
    %104 = vector.shape_cast %103 : vector<8x8x128xbf16> to vector<64x128xbf16>
    %c1_108 = arith.constant 1 : index
    %c0_109 = arith.constant 0 : index
    %c0_110 = arith.constant 0 : index
    %c0_111 = arith.constant 0 : index
    %105 = vector.load %arg4[%c1_108, %c0_109, %c0_110, %c0_111] : memref<9x1x128x128xbf16, #tpu.memory_space<vmem>>, vector<1x1x128x128xbf16>
    %106 = vector.shape_cast %105 : vector<1x1x128x128xbf16> to vector<128x128xbf16>
    %cst_112 = arith.constant dense<0.000000e+00> : vector<64x128xf32>
    %107 = tpu.matmul %104, %106, %cst_112 {dimension_numbers = #tpu.dot_dimension_numbers<[1], [0], [0], [1], [0, 0, 1, 1], [], []>} : vector<64x128xbf16>, vector<128x128xbf16>, vector<64x128xf32> -> vector<64x128xf32>
    %108 = arith.addf %101, %107 : vector<64x128xf32>
    %c0_113 = arith.constant 0 : index
    %c0_114 = arith.constant 0 : index
    %c1_115 = arith.constant 1 : index
    %c0_116 = arith.constant 0 : index
    %109 = vector.load %arg11[%c0_113, %c0_114, %c1_115, %c0_116] : memref<4x9x16x128xbf16, #tpu.memory_space<vmem>>, vector<1x8x8x128xbf16>
    %110 = vector.shape_cast %109 : vector<1x8x8x128xbf16> to vector<8x8x128xbf16>
    %111 = vector.shape_cast %110 : vector<8x8x128xbf16> to vector<64x128xbf16>
    %c2_117 = arith.constant 2 : index
    %c0_118 = arith.constant 0 : index
    %c0_119 = arith.constant 0 : index
    %c0_120 = arith.constant 0 : index
    %112 = vector.load %arg4[%c2_117, %c0_118, %c0_119, %c0_120] : memref<9x1x128x128xbf16, #tpu.memory_space<vmem>>, vector<1x1x128x128xbf16>
    %113 = vector.shape_cast %112 : vector<1x1x128x128xbf16> to vector<128x128xbf16>
    %cst_121 = arith.constant dense<0.000000e+00> : vector<64x128xf32>
    %114 = tpu.matmul %111, %113, %cst_121 {dimension_numbers = #tpu.dot_dimension_numbers<[1], [0], [0], [1], [0, 0, 1, 1], [], []>} : vector<64x128xbf16>, vector<128x128xbf16>, vector<64x128xf32> -> vector<64x128xf32>
    %115 = arith.addf %108, %114 : vector<64x128xf32>
    %c2_122 = arith.constant 2 : index
    %c0_123 = arith.constant 0 : index
    %c0_124 = arith.constant 0 : index
    %c0_125 = arith.constant 0 : index
    %116 = vector.load %arg11[%c2_122, %c0_123, %c0_124, %c0_125] : memref<4x9x16x128xbf16, #tpu.memory_space<vmem>>, vector<1x8x8x128xbf16>
    %117 = vector.shape_cast %116 : vector<1x8x8x128xbf16> to vector<8x8x128xbf16>
    %118 = vector.shape_cast %117 : vector<8x8x128xbf16> to vector<64x128xbf16>
    %c3_126 = arith.constant 3 : index
    %c0_127 = arith.constant 0 : index
    %c0_128 = arith.constant 0 : index
    %c0_129 = arith.constant 0 : index
    %119 = vector.load %arg4[%c3_126, %c0_127, %c0_128, %c0_129] : memref<9x1x128x128xbf16, #tpu.memory_space<vmem>>, vector<1x1x128x128xbf16>
    %120 = vector.shape_cast %119 : vector<1x1x128x128xbf16> to vector<128x128xbf16>
    %cst_130 = arith.constant dense<0.000000e+00> : vector<64x128xf32>
    %121 = tpu.matmul %118, %120, %cst_130 {dimension_numbers = #tpu.dot_dimension_numbers<[1], [0], [0], [1], [0, 0, 1, 1], [], []>} : vector<64x128xbf16>, vector<128x128xbf16>, vector<64x128xf32> -> vector<64x128xf32>
    %122 = arith.addf %115, %121 : vector<64x128xf32>
    %c3_131 = arith.constant 3 : index
    %c0_132 = arith.constant 0 : index
    %c0_133 = arith.constant 0 : index
    %c0_134 = arith.constant 0 : index
    %123 = vector.load %arg11[%c3_131, %c0_132, %c0_133, %c0_134] : memref<4x9x16x128xbf16, #tpu.memory_space<vmem>>, vector<1x8x8x128xbf16>
    %124 = vector.shape_cast %123 : vector<1x8x8x128xbf16> to vector<8x8x128xbf16>
    %125 = vector.shape_cast %124 : vector<8x8x128xbf16> to vector<64x128xbf16>
    %c4 = arith.constant 4 : index
    %c0_135 = arith.constant 0 : index
    %c0_136 = arith.constant 0 : index
    %c0_137 = arith.constant 0 : index
    %126 = vector.load %arg4[%c4, %c0_135, %c0_136, %c0_137] : memref<9x1x128x128xbf16, #tpu.memory_space<vmem>>, vector<1x1x128x128xbf16>
    %127 = vector.shape_cast %126 : vector<1x1x128x128xbf16> to vector<128x128xbf16>
    %cst_138 = arith.constant dense<0.000000e+00> : vector<64x128xf32>
    %128 = tpu.matmul %125, %127, %cst_138 {dimension_numbers = #tpu.dot_dimension_numbers<[1], [0], [0], [1], [0, 0, 1, 1], [], []>} : vector<64x128xbf16>, vector<128x128xbf16>, vector<64x128xf32> -> vector<64x128xf32>
    %129 = arith.addf %122, %128 : vector<64x128xf32>
    %c2_139 = arith.constant 2 : index
    %c0_140 = arith.constant 0 : index
    %c1_141 = arith.constant 1 : index
    %c0_142 = arith.constant 0 : index
    %130 = vector.load %arg11[%c2_139, %c0_140, %c1_141, %c0_142] : memref<4x9x16x128xbf16, #tpu.memory_space<vmem>>, vector<1x8x8x128xbf16>
    %131 = vector.shape_cast %130 : vector<1x8x8x128xbf16> to vector<8x8x128xbf16>
    %132 = vector.shape_cast %131 : vector<8x8x128xbf16> to vector<64x128xbf16>
    %c5 = arith.constant 5 : index
    %c0_143 = arith.constant 0 : index
    %c0_144 = arith.constant 0 : index
    %c0_145 = arith.constant 0 : index
    %133 = vector.load %arg4[%c5, %c0_143, %c0_144, %c0_145] : memref<9x1x128x128xbf16, #tpu.memory_space<vmem>>, vector<1x1x128x128xbf16>
    %134 = vector.shape_cast %133 : vector<1x1x128x128xbf16> to vector<128x128xbf16>
    %cst_146 = arith.constant dense<0.000000e+00> : vector<64x128xf32>
    %135 = tpu.matmul %132, %134, %cst_146 {dimension_numbers = #tpu.dot_dimension_numbers<[1], [0], [0], [1], [0, 0, 1, 1], [], []>} : vector<64x128xbf16>, vector<128x128xbf16>, vector<64x128xf32> -> vector<64x128xf32>
    %136 = arith.addf %129, %135 : vector<64x128xf32>
    %c0_147 = arith.constant 0 : index
    %c1_148 = arith.constant 1 : index
    %c0_149 = arith.constant 0 : index
    %c0_150 = arith.constant 0 : index
    %137 = vector.load %arg11[%c0_147, %c1_148, %c0_149, %c0_150] : memref<4x9x16x128xbf16, #tpu.memory_space<vmem>>, vector<1x8x8x128xbf16>
    %138 = vector.shape_cast %137 : vector<1x8x8x128xbf16> to vector<8x8x128xbf16>
    %139 = vector.shape_cast %138 : vector<8x8x128xbf16> to vector<64x128xbf16>
    %c6 = arith.constant 6 : index
    %c0_151 = arith.constant 0 : index
    %c0_152 = arith.constant 0 : index
    %c0_153 = arith.constant 0 : index
    %140 = vector.load %arg4[%c6, %c0_151, %c0_152, %c0_153] : memref<9x1x128x128xbf16, #tpu.memory_space<vmem>>, vector<1x1x128x128xbf16>
    %141 = vector.shape_cast %140 : vector<1x1x128x128xbf16> to vector<128x128xbf16>
    %cst_154 = arith.constant dense<0.000000e+00> : vector<64x128xf32>
    %142 = tpu.matmul %139, %141, %cst_154 {dimension_numbers = #tpu.dot_dimension_numbers<[1], [0], [0], [1], [0, 0, 1, 1], [], []>} : vector<64x128xbf16>, vector<128x128xbf16>, vector<64x128xf32> -> vector<64x128xf32>
    %143 = arith.addf %136, %142 : vector<64x128xf32>
    %c1_155 = arith.constant 1 : index
    %c1_156 = arith.constant 1 : index
    %c0_157 = arith.constant 0 : index
    %c0_158 = arith.constant 0 : index
    %144 = vector.load %arg11[%c1_155, %c1_156, %c0_157, %c0_158] : memref<4x9x16x128xbf16, #tpu.memory_space<vmem>>, vector<1x8x8x128xbf16>
    %145 = vector.shape_cast %144 : vector<1x8x8x128xbf16> to vector<8x8x128xbf16>
    %146 = vector.shape_cast %145 : vector<8x8x128xbf16> to vector<64x128xbf16>
    %c7 = arith.constant 7 : index
    %c0_159 = arith.constant 0 : index
    %c0_160 = arith.constant 0 : index
    %c0_161 = arith.constant 0 : index
    %147 = vector.load %arg4[%c7, %c0_159, %c0_160, %c0_161] : memref<9x1x128x128xbf16, #tpu.memory_space<vmem>>, vector<1x1x128x128xbf16>
    %148 = vector.shape_cast %147 : vector<1x1x128x128xbf16> to vector<128x128xbf16>
    %cst_162 = arith.constant dense<0.000000e+00> : vector<64x128xf32>
    %149 = tpu.matmul %146, %148, %cst_162 {dimension_numbers = #tpu.dot_dimension_numbers<[1], [0], [0], [1], [0, 0, 1, 1], [], []>} : vector<64x128xbf16>, vector<128x128xbf16>, vector<64x128xf32> -> vector<64x128xf32>
    %150 = arith.addf %143, %149 : vector<64x128xf32>
    %c0_163 = arith.constant 0 : index
    %c1_164 = arith.constant 1 : index
    %c1_165 = arith.constant 1 : index
    %c0_166 = arith.constant 0 : index
    %151 = vector.load %arg11[%c0_163, %c1_164, %c1_165, %c0_166] : memref<4x9x16x128xbf16, #tpu.memory_space<vmem>>, vector<1x8x8x128xbf16>
    %152 = vector.shape_cast %151 : vector<1x8x8x128xbf16> to vector<8x8x128xbf16>
    %153 = vector.shape_cast %152 : vector<8x8x128xbf16> to vector<64x128xbf16>
    %c8_167 = arith.constant 8 : index
    %c0_168 = arith.constant 0 : index
    %c0_169 = arith.constant 0 : index
    %c0_170 = arith.constant 0 : index
    %154 = vector.load %arg4[%c8_167, %c0_168, %c0_169, %c0_170] : memref<9x1x128x128xbf16, #tpu.memory_space<vmem>>, vector<1x1x128x128xbf16>
    %155 = vector.shape_cast %154 : vector<1x1x128x128xbf16> to vector<128x128xbf16>
    %cst_171 = arith.constant dense<0.000000e+00> : vector<64x128xf32>
    %156 = tpu.matmul %153, %155, %cst_171 {dimension_numbers = #tpu.dot_dimension_numbers<[1], [0], [0], [1], [0, 0, 1, 1], [], []>} : vector<64x128xbf16>, vector<128x128xbf16>, vector<64x128xf32> -> vector<64x128xf32>
    %157 = arith.addf %150, %156 : vector<64x128xf32>
    %158 = vector.broadcast %2 : vector<1x128xf32> to vector<64x128xf32>
    %159 = arith.addf %157, %158 : vector<64x128xf32>
    %160 = arith.truncf %159 : vector<64x128xf32> to vector<64x128xbf16>
    %c0_172 = arith.constant 0 : index
    %c0_173 = arith.constant 0 : index
    %161 = vector.load %arg6[%c0_172, %c0_173] : memref<128x128xbf16, #tpu.memory_space<vmem>>, vector<128x128xbf16>
    %cst_174 = arith.constant dense<0.000000e+00> : vector<64x128xf32>
    %162 = tpu.matmul %160, %161, %cst_174 {dimension_numbers = #tpu.dot_dimension_numbers<[1], [0], [0], [1], [0, 0, 1, 1], [], []>} : vector<64x128xbf16>, vector<128x128xbf16>, vector<64x128xf32> -> vector<64x128xf32>
    %163 = vector.broadcast %3 : vector<1x128xf32> to vector<64x128xf32>
    %164 = arith.addf %162, %163 : vector<64x128xf32>
    %c0_175 = arith.constant 0 : index
    %c3_176 = arith.constant 3 : index
    %c0_177 = arith.constant 0 : index
    %c0_178 = arith.constant 0 : index
    %c0_179 = arith.constant 0 : index
    %165 = vector.load %arg1[%c0_175, %c3_176, %c0_177, %c0_178, %c0_179] : memref<1x4x9x16x128xbf16, #tpu.memory_space<vmem>>, vector<1x1x8x8x128xbf16>
    %166 = vector.shape_cast %165 : vector<1x1x8x8x128xbf16> to vector<8x8x128xbf16>
    %167 = vector.shape_cast %166 : vector<8x8x128xbf16> to vector<64x128xbf16>
    %c0_180 = arith.constant 0 : index
    %c0_181 = arith.constant 0 : index
    %168 = vector.load %arg8[%c0_180, %c0_181] : memref<128x128xbf16, #tpu.memory_space<vmem>>, vector<128x128xbf16>
    %cst_182 = arith.constant dense<0.000000e+00> : vector<64x128xf32>
    %169 = tpu.matmul %167, %168, %cst_182 {dimension_numbers = #tpu.dot_dimension_numbers<[1], [0], [0], [1], [0, 0, 1, 1], [], []>} : vector<64x128xbf16>, vector<128x128xbf16>, vector<64x128xf32> -> vector<64x128xf32>
    %c0_183 = arith.constant 0 : index
    %c0_184 = arith.constant 0 : index
    %170 = vector.load %arg9[%c0_183, %c0_184] : memref<1x128xf32, #tpu.memory_space<vmem>>, vector<1x128xf32>
    %171 = vector.broadcast %170 : vector<1x128xf32> to vector<64x128xf32>
    %172 = arith.addf %169, %171 : vector<64x128xf32>
    %173 = arith.addf %164, %172 : vector<64x128xf32>
    %cst_185 = arith.constant 0.000000e+00 : f32
    %174 = vector.broadcast %cst_185 : f32 to vector<64x128xf32>
    %175 = arith.maximumf %173, %174 : vector<64x128xf32>
    %176 = vector.shape_cast %175 : vector<64x128xf32> to vector<8x8x128xf32>
    %177 = arith.truncf %176 : vector<8x8x128xf32> to vector<8x8x128xbf16>
    %c0_186 = arith.constant 0 : index
    %c1_187 = arith.constant 1 : index
    %c1_188 = arith.constant 1 : index
    %c0_189 = arith.constant 0 : index
    %178 = vector.load %arg10[%c0_186, %c1_187, %c1_188, %c0_189] : memref<1x10x16x128xbf16, #tpu.memory_space<vmem>>, vector<1x8x8x128xbf16>
    %179 = vector.shape_cast %178 : vector<1x8x8x128xbf16> to vector<8x8x128xbf16>
    %180 = vector.shape_cast %177 : vector<8x8x128xbf16> to vector<1x8x8x128xbf16>
    tpu.vector_store %arg10[%c0_186, %c1_187, %c1_188, %c0_189], %180 {strides = array<i32>} : memref<1x10x16x128xbf16, #tpu.memory_space<vmem>>, vector<1x8x8x128xbf16>,
    %cst_190 = arith.constant 0.000000e+00 : bf16
    %181 = vector.broadcast %cst_190 : bf16 to vector<1x16x128xbf16>
    %c0_191 = arith.constant 0 : index
    %c0_192 = arith.constant 0 : index
    %c0_193 = arith.constant 0 : index
    %c0_194 = arith.constant 0 : index
    %182 = vector.load %arg10[%c0_191, %c0_192, %c0_193, %c0_194] : memref<1x10x16x128xbf16, #tpu.memory_space<vmem>>, vector<1x1x16x128xbf16>
    %183 = vector.shape_cast %182 : vector<1x1x16x128xbf16> to vector<1x16x128xbf16>
    %184 = vector.shape_cast %181 : vector<1x16x128xbf16> to vector<1x1x16x128xbf16>
    tpu.vector_store %arg10[%c0_191, %c0_192, %c0_193, %c0_194], %184 {strides = array<i32>} : memref<1x10x16x128xbf16, #tpu.memory_space<vmem>>, vector<1x1x16x128xbf16>,
    %c0_195 = arith.constant 0 : index
    %c9_196 = arith.constant 9 : index
    %c0_197 = arith.constant 0 : index
    %c0_198 = arith.constant 0 : index
    %185 = vector.load %arg10[%c0_195, %c9_196, %c0_197, %c0_198] : memref<1x10x16x128xbf16, #tpu.memory_space<vmem>>, vector<1x1x16x128xbf16>
    %186 = vector.shape_cast %185 : vector<1x1x16x128xbf16> to vector<1x16x128xbf16>
    %187 = vector.shape_cast %181 : vector<1x16x128xbf16> to vector<1x1x16x128xbf16>
    tpu.vector_store %arg10[%c0_195, %c9_196, %c0_197, %c0_198], %187 {strides = array<i32>} : memref<1x10x16x128xbf16, #tpu.memory_space<vmem>>, vector<1x1x16x128xbf16>,
    %cst_199 = arith.constant 0.000000e+00 : bf16
    %188 = vector.broadcast %cst_199 : bf16 to vector<8x1x128xbf16>
    %c0_200 = arith.constant 0 : index
    %c1_201 = arith.constant 1 : index
    %c0_202 = arith.constant 0 : index
    %c0_203 = arith.constant 0 : index
    %189 = vector.load %arg10[%c0_200, %c1_201, %c0_202, %c0_203] : memref<1x10x16x128xbf16, #tpu.memory_space<vmem>>, vector<1x8x1x128xbf16>
    %190 = vector.shape_cast %189 : vector<1x8x1x128xbf16> to vector<8x1x128xbf16>
    %191 = vector.shape_cast %188 : vector<8x1x128xbf16> to vector<1x8x1x128xbf16>
    tpu.vector_store %arg10[%c0_200, %c1_201, %c0_202, %c0_203], %191 {strides = array<i32>} : memref<1x10x16x128xbf16, #tpu.memory_space<vmem>>, vector<1x8x1x128xbf16>,
    %cst_204 = arith.constant 0.000000e+00 : bf16
    %192 = vector.broadcast %cst_204 : bf16 to vector<8x7x128xbf16>
    %c0_205 = arith.constant 0 : index
    %c1_206 = arith.constant 1 : index
    %c9_207 = arith.constant 9 : index
    %c0_208 = arith.constant 0 : index
    %193 = vector.load %arg10[%c0_205, %c1_206, %c9_207, %c0_208] : memref<1x10x16x128xbf16, #tpu.memory_space<vmem>>, vector<1x8x7x128xbf16>
    %194 = vector.shape_cast %193 : vector<1x8x7x128xbf16> to vector<8x7x128xbf16>
    %195 = vector.shape_cast %192 : vector<8x7x128xbf16> to vector<1x8x7x128xbf16>
    tpu.vector_store %arg10[%c0_205, %c1_206, %c9_207, %c0_208], %195 {strides = array<i32>} : memref<1x10x16x128xbf16, #tpu.memory_space<vmem>>, vector<1x8x7x128xbf16>,
    return
  }
  func.func @transform_0(%arg0: i32) -> (i32, i32, i32, i32, i32) {
    %c0_i32 = arith.constant 0 : i32
    %c0_i32_0 = arith.constant 0 : i32
    %c0_i32_1 = arith.constant 0 : i32
    %c0_i32_2 = arith.constant 0 : i32
    %c0_i32_3 = arith.constant 0 : i32
    return %arg0, %c0_i32, %c0_i32_0, %c0_i32_1, %c0_i32_2 : i32, i32, i32, i32, i32
  }
  func.func @transform_1(%arg0: i32) -> (i32, i32) {
    %c0_i32 = arith.constant 0 : i32
    %c0_i32_0 = arith.constant 0 : i32
    %c0_i32_1 = arith.constant 0 : i32
    return %c0_i32, %c0_i32_0 : i32, i32
  }
  func.func @transform_2(%arg0: i32) -> (i32, i32) {
    %c0_i32 = arith.constant 0 : i32
    %c0_i32_0 = arith.constant 0 : i32
    %c0_i32_1 = arith.constant 0 : i32
    return %c0_i32, %c0_i32_0 : i32, i32
  }
  func.func @transform_3(%arg0: i32) -> (i32, i32, i32, i32) {
    %c0_i32 = arith.constant 0 : i32
    %c0_i32_0 = arith.constant 0 : i32
    %c0_i32_1 = arith.constant 0 : i32
    %c0_i32_2 = arith.constant 0 : i32
    %c0_i32_3 = arith.constant 0 : i32
    return %c0_i32, %c0_i32_0, %c0_i32_1, %c0_i32_2 : i32, i32, i32, i32
  }
  func.func @transform_4(%arg0: i32) -> (i32, i32) {
    %c0_i32 = arith.constant 0 : i32
    %c0_i32_0 = arith.constant 0 : i32
    %c0_i32_1 = arith.constant 0 : i32
    return %c0_i32, %c0_i32_0 : i32, i32
  }
  func.func @transform_5(%arg0: i32) -> (i32, i32) {
    %c0_i32 = arith.constant 0 : i32
    %c0_i32_0 = arith.constant 0 : i32
    %c0_i32_1 = arith.constant 0 : i32
    return %c0_i32, %c0_i32_0 : i32, i32
  }
  func.func @transform_6(%arg0: i32) -> (i32, i32) {
    %c0_i32 = arith.constant 0 : i32
    %c0_i32_0 = arith.constant 0 : i32
    %c0_i32_1 = arith.constant 0 : i32
    return %c0_i32, %c0_i32_0 : i32, i32
  }
  func.func @transform_7(%arg0: i32) -> (i32, i32) {
    %c0_i32 = arith.constant 0 : i32
    %c0_i32_0 = arith.constant 0 : i32
    %c0_i32_1 = arith.constant 0 : i32
    return %c0_i32, %c0_i32_0 : i32, i32
  }
  func.func @transform_8(%arg0: i32) -> (i32, i32) {
    %c0_i32 = arith.constant 0 : i32
    %c0_i32_0 = arith.constant 0 : i32
    %c0_i32_1 = arith.constant 0 : i32
    return %c0_i32, %c0_i32_0 : i32, i32
  }
  func.func @transform_9(%arg0: i32) -> (i32, i32, i32, i32) {
    %c0_i32 = arith.constant 0 : i32
    %c0_i32_0 = arith.constant 0 : i32
    %c0_i32_1 = arith.constant 0 : i32
    %c0_i32_2 = arith.constant 0 : i32
    return %arg0, %c0_i32, %c0_i32_0, %c0_i32_1 : i32, i32, i32, i32
  }
}

</mosaic_0001>

<llo_original>
// kernel: tpu_custom_call.1
$region0: #{tpu_custom_call.1}
  #allocation0 [shape = 'u32[]', space=smem, size = 0x4, offset = 0x4, fixed_abs, tag = 'smem constant byte address 0x4 - core index']
  #allocation1 [shape = 'u32[72,128]{1,0:T(1,128)}', space=vmem, size = 0x9000, scoped, tag = 'internal scratch']
  #allocation2 [shape = 'bf16[4,9,16,128]{3,2,1,0:T(8,128)(2,1)}', space=vmem, size = 0x24000, scoped, tag = 'scratch operand']
  %s0 = inlined_call_operand.hbm [shape: bf16[2,4,9,16,128], index: 0, kind: input, shape index: {}]
  %s1 = inlined_call_operand.hbm [shape: bf16[128,128], index: 1, kind: input, shape index: {}]
  %s2 = inlined_call_operand.vmem [shape: f32[1,128], index: 2, kind: input, shape index: {}]
  %s3 = inlined_call_operand.hbm [shape: bf16[9,1,128,128], index: 3, kind: input, shape index: {}]
  %s4 = inlined_call_operand.vmem [shape: f32[1,128], index: 4, kind: input, shape index: {}]
  %s5 = inlined_call_operand.hbm [shape: bf16[128,128], index: 5, kind: input, shape index: {}]
  %s6 = inlined_call_operand.vmem [shape: f32[1,128], index: 6, kind: input, shape index: {}]
  %s7 = inlined_call_operand.hbm [shape: bf16[128,128], index: 7, kind: input, shape index: {}]
  %s8 = inlined_call_operand.vmem [shape: f32[1,128], index: 8, kind: input, shape index: {}]
  %s9 = inlined_call_operand.hbm [shape: bf16[2,10,16,128], index: 9, kind: output, shape index: {}]
  %s10 = sld [smem:[#allocation0]]
  $region89: #{tpu_custom_call.1} parent=0
    _
  %s12 = ssub.s32 1, %s10
  %s13 = scalar_select 0, %s12, %s10
  $region1: #{tpu_custom_call.1} parent=0
    #allocation3 [shape = 'u8[294912]{0}', space=vmem, size = 0x48000, scoped, tag = 'input window, operand 0']
    #allocation4 [shape = 's32[2]{0}', space=sflag, size = 0x8, scoped, tag = 'scoped memory for tpu_custom_call.1']
    #allocation5 [shape = 's32[2]{0}', space=sflag, size = 0x8, scoped, tag = 'scoped memory for tpu_custom_call.1']
    #allocation6 [shape = 'u8[32768]{0}', space=vmem, size = 0x8000, scoped, tag = 'input window, operand 1, single buffered']
    #allocation7 [shape = 's32[1]{0}', space=sflag, size = 0x4, scoped, tag = 'scoped memory for tpu_custom_call.1']
    #allocation8 [shape = 'u8[294912]{0}', space=vmem, size = 0x48000, scoped, tag = 'input window, operand 3, single buffered']
    #allocation9 [shape = 'u8[32768]{0}', space=vmem, size = 0x8000, scoped, tag = 'input window, operand 5, single buffered']
    #allocation10 [shape = 's32[1]{0}', space=sflag, size = 0x4, scoped, tag = 'scoped memory for tpu_custom_call.1']
    #allocation11 [shape = 'u8[32768]{0}', space=vmem, size = 0x8000, scoped, tag = 'input window, operand 7, single buffered']
    #allocation12 [shape = 'u8[81920]{0}', space=vmem, size = 0x14000, scoped, tag = 'output window, operand 0']
    %14 = vsyncpa [#allocation4], 0
    %s15 = scalar_lea.sflag [#allocation4], 1
    %16 = vsyncpa %s15, 0
    %17 = vsyncpa [#allocation7], 0
    %18 = vsyncpa [#allocation10], 0
    %19 = vsyncpa [#allocation5], 0
    %s20 = scalar_lea.sflag [#allocation5], 1
    %21 = vsyncpa %s20, 0
    loop: start=0, step=1, limit=4
    $region2: #{tpu_custom_call.1} parent=1 // loop_pre_header
      _
    $region3: #{tpu_custom_call.1} parent=1 // loop_header
      %s23 = sphi 0, %s27
      %p24 = scmp.ge.s32.totalorder %s23, 4
      %s33 = sphi 0, %s35
      %s36 = sphi 0, %s33
      %s37 = sphi 0, %s36
      %s53 = sphi 0, %s37
      %s57 = sphi 0, %s57
      %s59 = sphi 0, %s57
      %s60 = sphi 0, %s59
      %s74 = sphi 0, %s60
      %s78 = sphi 0, %s78
      %s80 = sphi 0, %s78
      %s81 = sphi 0, %s80
      %s95 = sphi 0, %s81
      %s99 = sphi 0, %s99
      %s101 = sphi 0, %s99
      %s102 = sphi 0, %s101
      %s116 = sphi 0, %s102
      %s120 = sphi 0, %s120
      %s122 = sphi 0, %s120
      %s123 = sphi 0, %s122
      %s137 = sphi 0, %s123
      %s141 = sphi 0, %s141
      %s143 = sphi 0, %s141
      %s144 = sphi 0, %s143
      %s158 = sphi 0, %s144
      %s162 = sphi 0, %s162
      %s164 = sphi 0, %s162
      %s165 = sphi 0, %s164
      %s179 = sphi 0, %s165
      %s183 = sphi 0, %s183
      %s185 = sphi 0, %s183
      %s186 = sphi 0, %s185
      %s200 = sphi 0, %s186
      %s204 = sphi 0, %s204
      %s206 = sphi 0, %s204
      %s207 = sphi 0, %s206
      %s221 = sphi 0, %s207
      %s227 = sphi 0, %s229
      %s230 = sphi 0, %s227
      %s231 = sphi 0, %s230
      %s247 = sphi 0, %s231
    $region4: #{tpu_custom_call.1} parent=1 // loop_header_branch
      %26 = sbr.rel (%p24) target = $region8
    $region5: #{tpu_custom_call.1} parent=1 // loop_body
      %s28 = ssub.s32 %s23, 1
      %s29 = ssub.s32 %s23, 2
      %s30 = sadd.s32 %s23, 1
      %s31 = ssub.s32 %s23, %s30
      %p32 = scmp.eq.s32.totalorder %s31, 0
      %s34 = sadd.s32 %s33, 1
      %s35 = scalar_select %p32, %s33, %s34
      %p38 = pneg %p32
      %p39 = scmp.eq.s32.totalorder %s23, 1
      %p40 = por %p38, %p39
      %p41 = scmp.ne.s32.totalorder %s33, %s36
      %p42 = scmp.eq.s32.totalorder %s23, 0
      %p43 = por %p41, %p42
      %p44 = scmp.ne.s32.totalorder %s33, %s36
      %p45 = scmp.eq.s32.totalorder %s28, 1
      %p46 = por %p44, %p45
      %p47 = scmp.ne.s32.totalorder %s36, %s37
      %p48 = scmp.eq.s32.totalorder %s28, 0
      %p49 = por %p47, %p48
      %p50 = scmp.ne.s32.totalorder %s36, %s37
      %p51 = scmp.eq.s32.totalorder %s29, 1
      %p52 = por %p50, %p51
      %p54 = scmp.ne.s32.totalorder %s37, %s53
      %p55 = scmp.eq.s32.totalorder %s29, 0
      %p56 = por %p54, %p55
      %s58 = sadd.s32 %s57, 1
      %p61 = scmp.eq.s32.totalorder %s23, 1
      %p62 = scmp.ne.s32.totalorder %s57, %s59
      %p63 = scmp.eq.s32.totalorder %s23, 0
      %p64 = por %p62, %p63
      %p65 = scmp.ne.s32.totalorder %s57, %s59
      %p66 = scmp.eq.s32.totalorder %s28, 1
      %p67 = por %p65, %p66
      %p68 = scmp.ne.s32.totalorder %s59, %s60
      %p69 = scmp.eq.s32.totalorder %s28, 0
      %p70 = por %p68, %p69
      %p71 = scmp.ne.s32.totalorder %s59, %s60
      %p72 = scmp.eq.s32.totalorder %s29, 1
      %p73 = por %p71, %p72
      %p75 = scmp.ne.s32.totalorder %s60, %s74
      %p76 = scmp.eq.s32.totalorder %s29, 0
      %p77 = por %p75, %p76
      %s79 = sadd.s32 %s78, 1
      %p82 = scmp.eq.s32.totalorder %s23, 1
      %p83 = scmp.ne.s32.totalorder %s78, %s80
      %p84 = scmp.eq.s32.totalorder %s23, 0
      %p85 = por %p83, %p84
      %p86 = scmp.ne.s32.totalorder %s78, %s80
      %p87 = scmp.eq.s32.totalorder %s28, 1
      %p88 = por %p86, %p87
      %p89 = scmp.ne.s32.totalorder %s80, %s81
      %p90 = scmp.eq.s32.totalorder %s28, 0
      %p91 = por %p89, %p90
      %p92 = scmp.ne.s32.totalorder %s80, %s81
      %p93 = scmp.eq.s32.totalorder %s29, 1
      %p94 = por %p92, %p93
      %p96 = scmp.ne.s32.totalorder %s81, %s95
      %p97 = scmp.eq.s32.totalorder %s29, 0
      %p98 = por %p96, %p97
      %s100 = sadd.s32 %s99, 1
      %p103 = scmp.eq.s32.totalorder %s23, 1
      %p104 = scmp.ne.s32.totalorder %s99, %s101
      %p105 = scmp.eq.s32.totalorder %s23, 0
      %p106 = por %p104, %p105
      %p107 = scmp.ne.s32.totalorder %s99, %s101
      %p108 = scmp.eq.s32.totalorder %s28, 1
      %p109 = por %p107, %p108
      %p110 = scmp.ne.s32.totalorder %s101, %s102
      %p111 = scmp.eq.s32.totalorder %s28, 0
      %p112 = por %p110, %p111
      %p113 = scmp.ne.s32.totalorder %s101, %s102
      %p114 = scmp.eq.s32.totalorder %s29, 1
      %p115 = por %p113, %p114
      %p117 = scmp.ne.s32.totalorder %s102, %s116
      %p118 = scmp.eq.s32.totalorder %s29, 0
      %p119 = por %p117, %p118
      %s121 = sadd.s32 %s120, 1
      %p124 = scmp.eq.s32.totalorder %s23, 1
      %p125 = scmp.ne.s32.totalorder %s120, %s122
      %p126 = scmp.eq.s32.totalorder %s23, 0
      %p127 = por %p125, %p126
      %p128 = scmp.ne.s32.totalorder %s120, %s122
      %p129 = scmp.eq.s32.totalorder %s28, 1
      %p130 = por %p128, %p129
      %p131 = scmp.ne.s32.totalorder %s122, %s123
      %p132 = scmp.eq.s32.totalorder %s28, 0
      %p133 = por %p131, %p132
      %p134 = scmp.ne.s32.totalorder %s122, %s123
      %p135 = scmp.eq.s32.totalorder %s29, 1
      %p136 = por %p134, %p135
      %p138 = scmp.ne.s32.totalorder %s123, %s137
      %p139 = scmp.eq.s32.totalorder %s29, 0
      %p140 = por %p138, %p139
      %s142 = sadd.s32 %s141, 1
      %p145 = scmp.eq.s32.totalorder %s23, 1
      %p146 = scmp.ne.s32.totalorder %s141, %s143
      %p147 = scmp.eq.s32.totalorder %s23, 0
      %p148 = por %p146, %p147
      %p149 = scmp.ne.s32.totalorder %s141, %s143
      %p150 = scmp.eq.s32.totalorder %s28, 1
      %p151 = por %p149, %p150
      %p152 = scmp.ne.s32.totalorder %s143, %s144
      %p153 = scmp.eq.s32.totalorder %s28, 0
      %p154 = por %p152, %p153
      %p155 = scmp.ne.s32.totalorder %s143, %s144
      %p156 = scmp.eq.s32.totalorder %s29, 1
      %p157 = por %p155, %p156
      %p159 = scmp.ne.s32.totalorder %s144, %s158
      %p160 = scmp.eq.s32.totalorder %s29, 0
      %p161 = por %p159, %p160
      %s163 = sadd.s32 %s162, 1
      %p166 = scmp.eq.s32.totalorder %s23, 1
      %p167 = scmp.ne.s32.totalorder %s162, %s164
      %p168 = scmp.eq.s32.totalorder %s23, 0
      %p169 = por %p167, %p168
      %p170 = scmp.ne.s32.totalorder %s162, %s164
      %p171 = scmp.eq.s32.totalorder %s28, 1
      %p172 = por %p170, %p171
      %p173 = scmp.ne.s32.totalorder %s164, %s165
      %p174 = scmp.eq.s32.totalorder %s28, 0
      %p175 = por %p173, %p174
      %p176 = scmp.ne.s32.totalorder %s164, %s165
      %p177 = scmp.eq.s32.totalorder %s29, 1
      %p178 = por %p176, %p177
      %p180 = scmp.ne.s32.totalorder %s165, %s179
      %p181 = scmp.eq.s32.totalorder %s29, 0
      %p182 = por %p180, %p181
      %s184 = sadd.s32 %s183, 1
      %p187 = scmp.eq.s32.totalorder %s23, 1
      %p188 = scmp.ne.s32.totalorder %s183, %s185
      %p189 = scmp.eq.s32.totalorder %s23, 0
      %p190 = por %p188, %p189
      %p191 = scmp.ne.s32.totalorder %s183, %s185
      %p192 = scmp.eq.s32.totalorder %s28, 1
      %p193 = por %p191, %p192
      %p194 = scmp.ne.s32.totalorder %s185, %s186
      %p195 = scmp.eq.s32.totalorder %s28, 0
      %p196 = por %p194, %p195
      %p197 = scmp.ne.s32.totalorder %s185, %s186
      %p198 = scmp.eq.s32.totalorder %s29, 1
      %p199 = por %p197, %p198
      %p201 = scmp.ne.s32.totalorder %s186, %s200
      %p202 = scmp.eq.s32.totalorder %s29, 0
      %p203 = por %p201, %p202
      %s205 = sadd.s32 %s204, 1
      %p208 = scmp.eq.s32.totalorder %s23, 1
      %p209 = scmp.ne.s32.totalorder %s204, %s206
      %p210 = scmp.eq.s32.totalorder %s23, 0
      %p211 = por %p209, %p210
      %p212 = scmp.ne.s32.totalorder %s204, %s206
      %p213 = scmp.eq.s32.totalorder %s28, 1
      %p214 = por %p212, %p213
      %p215 = scmp.ne.s32.totalorder %s206, %s207
      %p216 = scmp.eq.s32.totalorder %s28, 0
      %p217 = por %p215, %p216
      %p218 = scmp.ne.s32.totalorder %s206, %s207
      %p219 = scmp.eq.s32.totalorder %s29, 1
      %p220 = por %p218, %p219
      %p222 = scmp.ne.s32.totalorder %s207, %s221
      %p223 = scmp.eq.s32.totalorder %s29, 0
      %p224 = por %p222, %p223
      %s225 = ssub.s32 %s23, %s30
      %p226 = scmp.eq.s32.totalorder %s225, 0
      %s228 = sadd.s32 %s227, 1
      %s229 = scalar_select %p226, %s227, %s228
      %p232 = pneg %p226
      %p233 = scmp.eq.s32.totalorder %s23, 1
      %p234 = por %p232, %p233
      %p235 = scmp.ne.s32.totalorder %s227, %s230
      %p236 = scmp.eq.s32.totalorder %s23, 0
      %p237 = por %p235, %p236
      %p238 = scmp.ne.s32.totalorder %s227, %s230
      %p239 = scmp.eq.s32.totalorder %s28, 1
      %p240 = por %p238, %p239
      %p241 = scmp.ne.s32.totalorder %s230, %s231
      %p242 = scmp.eq.s32.totalorder %s28, 0
      %p243 = por %p241, %p242
      %p244 = scmp.ne.s32.totalorder %s230, %s231
      %p245 = scmp.eq.s32.totalorder %s29, 1
      %p246 = por %p244, %p245
      %p248 = scmp.ne.s32.totalorder %s231, %s247
      %p249 = scmp.eq.s32.totalorder %s29, 0
      %p250 = por %p248, %p249
      %p251 = scmp.le.s32.totalorder 1, %s23
      %p252 = scmp.lt.s32.totalorder %s23, 3
      %p253 = pnand %p251, %p252
      %p254 = pneg %p253
      // Predicated region
      $region9: #{tpu_custom_call.1} parent=5 // pred_check
        _
      $region10: #{tpu_custom_call.1} parent=5 // pred_check_branch
        %256 = sbr.rel (%p253) target = $region12
      $region11: #{tpu_custom_call.1} parent=5 // pred_region
        %s257 = ssub.s32 %s23, 1
        // Predicated region
        $region13: #{tpu_custom_call.1} parent=11 // pred_check
          %p258 = pneg %p70
        $region14: #{tpu_custom_call.1} parent=11 // pred_check_branch
          %260 = sbr.rel (%p258) target = $region16
        $region15: #{tpu_custom_call.1} parent=11 // pred_region
          %262 = vsyncadd [#allocation7], 0
          %s263 = sshll.u32 %s1, 4
          %s264 = int_to_ptr.hbm [resolvable:$true] %s263
          %s265 = sshll.u32 [#allocation6], 4
          %s266 = int_to_ptr.vmem [resolvable:$true] %s265
          %271 = dma.hbm_to_vmem [thread:$0]  %s264, 1024, %s266, [#allocation7], 64, 64, 4
        $region16: #{tpu_custom_call.1} parent=11 // pred_fallthru
          _
        // Predicated region
        $region17: #{tpu_custom_call.1} parent=11 // pred_check
          %p272 = pneg %p91
        $region18: #{tpu_custom_call.1} parent=11 // pred_check_branch
          %274 = sbr.rel (%p272) target = $region20
        $region19: #{tpu_custom_call.1} parent=11 // pred_region
          _
        $region20: #{tpu_custom_call.1} parent=11 // pred_fallthru
          _
        // Predicated region
        $region21: #{tpu_custom_call.1} parent=11 // pred_check
          %p275 = pneg %p112
        $region22: #{tpu_custom_call.1} parent=11 // pred_check_branch
          %277 = sbr.rel (%p275) target = $region24
        $region23: #{tpu_custom_call.1} parent=11 // pred_region
          %279 = vsyncadd [#allocation7], 0
          %s280 = sshll.u32 %s3, 4
          %s281 = int_to_ptr.hbm [resolvable:$true] %s280
          %s282 = sshll.u32 [#allocation8], 4
          %s283 = int_to_ptr.vmem [resolvable:$true] %s282
          %288 = dma.hbm_to_vmem [thread:$0]  %s281, 9216, %s283, [#allocation7], 64, 64, 4
        $region24: #{tpu_custom_call.1} parent=11 // pred_fallthru
          _
        // Predicated region
        $region25: #{tpu_custom_call.1} parent=11 // pred_check
          %p289 = pneg %p133
        $region26: #{tpu_custom_call.1} parent=11 // pred_check_branch
          %291 = sbr.rel (%p289) target = $region28
        $region27: #{tpu_custom_call.1} parent=11 // pred_region
          _
        $region28: #{tpu_custom_call.1} parent=11 // pred_fallthru
          _
        // Predicated region
        $region29: #{tpu_custom_call.1} parent=11 // pred_check
          %p292 = pneg %p154
        $region30: #{tpu_custom_call.1} parent=11 // pred_check_branch
          %294 = sbr.rel (%p292) target = $region32
        $region31: #{tpu_custom_call.1} parent=11 // pred_region
          %296 = vsyncadd [#allocation10], 0
          %s297 = sshll.u32 %s5, 4
          %s298 = int_to_ptr.hbm [resolvable:$true] %s297
          %s299 = sshll.u32 [#allocation9], 4
          %s300 = int_to_ptr.vmem [resolvable:$true] %s299
          %305 = dma.hbm_to_vmem [thread:$0]  %s298, 1024, %s300, [#allocation10], 64, 64, 4
        $region32: #{tpu_custom_call.1} parent=11 // pred_fallthru
          _
        // Predicated region
        $region33: #{tpu_custom_call.1} parent=11 // pred_check
          %p306 = pneg %p175
        $region34: #{tpu_custom_call.1} parent=11 // pred_check_branch
          %308 = sbr.rel (%p306) target = $region36
        $region35: #{tpu_custom_call.1} parent=11 // pred_region
          _
        $region36: #{tpu_custom_call.1} parent=11 // pred_fallthru
          _
        // Predicated region
        $region37: #{tpu_custom_call.1} parent=11 // pred_check
          %p309 = pneg %p196
        $region38: #{tpu_custom_call.1} parent=11 // pred_check_branch
          %311 = sbr.rel (%p309) target = $region40
        $region39: #{tpu_custom_call.1} parent=11 // pred_region
          %313 = vsyncadd [#allocation10], 0
          %s314 = sshll.u32 %s7, 4
          %s315 = int_to_ptr.hbm [resolvable:$true] %s314
          %s316 = sshll.u32 [#allocation11], 4
          %s317 = int_to_ptr.vmem [resolvable:$true] %s316
          %322 = dma.hbm_to_vmem [thread:$0]  %s315, 1024, %s317, [#allocation10], 64, 64, 4
        $region40: #{tpu_custom_call.1} parent=11 // pred_fallthru
          _
        // Predicated region
        $region41: #{tpu_custom_call.1} parent=11 // pred_check
          %p323 = pneg %p217
        $region42: #{tpu_custom_call.1} parent=11 // pred_check_branch
          %325 = sbr.rel (%p323) target = $region44
        $region43: #{tpu_custom_call.1} parent=11 // pred_region
          _
        $region44: #{tpu_custom_call.1} parent=11 // pred_fallthru
          _
      $region12: #{tpu_custom_call.1} parent=5 // pred_fallthru
        _
      %p326 = scmp.lt.s32.totalorder %s23, 2
      // Predicated region
      $region45: #{tpu_custom_call.1} parent=5 // pred_check
        %p327 = pneg %p326
      $region46: #{tpu_custom_call.1} parent=5 // pred_check_branch
        %329 = sbr.rel (%p327) target = $region48
      $region47: #{tpu_custom_call.1} parent=5 // pred_region
        // Predicated region
        $region49: #{tpu_custom_call.1} parent=47 // pred_check
          %p330 = pneg %p43
        $region50: #{tpu_custom_call.1} parent=47 // pred_check_branch
          %332 = sbr.rel (%p330) target = $region52
        $region51: #{tpu_custom_call.1} parent=47 // pred_region
          %s333 = sand.u32 %s33, 1
          %s334 = scalar_lea.sflag [#allocation4], %s333
          %s335 = sand.u32 %s33, 1
          %s336 = smul.addr %s335, 288
          %s337 = scalar_lea.vmem [#allocation3], %s336
          %339 = vsyncadd %s334, 0
          %s340 = smul.addr %s23, 72
          %s341 = smul.addr %s340, 4
          %s342 = scalar_lea.hbm %s0, %s341
          %s343 = sshll.u32 %s342, 4
          %s344 = int_to_ptr.hbm [resolvable:$true] %s343
          %s345 = sshll.u32 %s337, 4
          %s346 = int_to_ptr.vmem [resolvable:$true] %s345
          %351 = dma.hbm_to_vmem [thread:$0]  %s344, 4608, %s346, %s334, 64, 64, 4
        $region52: #{tpu_custom_call.1} parent=47 // pred_fallthru
          _
      $region48: #{tpu_custom_call.1} parent=5 // pred_fallthru
        _
      %p352 = scmp.le.s32.totalorder 1, %s23
      %p353 = scmp.lt.s32.totalorder %s23, 3
      %p354 = pnand %p352, %p353
      %p355 = pneg %p354
      // Predicated region
      $region53: #{tpu_custom_call.1} parent=5 // pred_check
        _
      $region54: #{tpu_custom_call.1} parent=5 // pred_check_branch
        %357 = sbr.rel (%p354) target = $region56
      $region55: #{tpu_custom_call.1} parent=5 // pred_region
        %s358 = ssub.s32 %s23, 1
        %s359 = sand.u32 %s36, 1
        %s360 = scalar_lea.sflag [#allocation4], %s359
        %s361 = sand.u32 %s36, 1
        %s362 = smul.addr %s361, 288
        %s363 = scalar_lea.vmem [#allocation3], %s362
        // Predicated region
        $region57: #{tpu_custom_call.1} parent=55 // pred_check
          %p364 = pneg %p49
        $region58: #{tpu_custom_call.1} parent=55 // pred_check_branch
          %366 = sbr.rel (%p364) target = $region60
        $region59: #{tpu_custom_call.1} parent=55 // pred_region
          %368 = dma.done %s360, 4608
        $region60: #{tpu_custom_call.1} parent=55 // pred_fallthru
          _
        // Predicated region
        $region61: #{tpu_custom_call.1} parent=55 // pred_check
          %p369 = pneg %p70
        $region62: #{tpu_custom_call.1} parent=55 // pred_check_branch
          %371 = sbr.rel (%p369) target = $region64
        $region63: #{tpu_custom_call.1} parent=55 // pred_region
          %373 = dma.done [#allocation7], 1024
        $region64: #{tpu_custom_call.1} parent=55 // pred_fallthru
          _
        // Predicated region
        $region65: #{tpu_custom_call.1} parent=55 // pred_check
          %p374 = pneg %p112
        $region66: #{tpu_custom_call.1} parent=55 // pred_check_branch
          %376 = sbr.rel (%p374) target = $region68
        $region67: #{tpu_custom_call.1} parent=55 // pred_region
          %378 = dma.done [#allocation7], 9216
        $region68: #{tpu_custom_call.1} parent=55 // pred_fallthru
          _
        // Predicated region
        $region69: #{tpu_custom_call.1} parent=55 // pred_check
          %p379 = pneg %p154
        $region70: #{tpu_custom_call.1} parent=55 // pred_check_branch
          %381 = sbr.rel (%p379) target = $region72
        $region71: #{tpu_custom_call.1} parent=55 // pred_region
          %383 = dma.done [#allocation10], 1024
        $region72: #{tpu_custom_call.1} parent=55 // pred_fallthru
          _
        // Predicated region
        $region73: #{tpu_custom_call.1} parent=55 // pred_check
          %p384 = pneg %p196
        $region74: #{tpu_custom_call.1} parent=55 // pred_check_branch
          %386 = sbr.rel (%p384) target = $region76
        $region75: #{tpu_custom_call.1} parent=55 // pred_region
          %388 = dma.done [#allocation10], 1024
        $region76: #{tpu_custom_call.1} parent=55 // pred_fallthru
          _
        %s389 = sand.u32 %s36, 1
        %s390 = scalar_lea.sflag [#allocation4], %s389
        %s391 = sand.u32 %s36, 1
        %s392 = smul.addr %s391, 288
        %s393 = scalar_lea.vmem [#allocation3], %s392
        %p394 = pneg %p49
        %p395 = pneg %p46
        %p396 = pneg %p70
        %p397 = pneg %p67
        %p398 = pneg %p91
        %p399 = pneg %p88
        %p400 = pneg %p112
        %p401 = pneg %p109
        %p402 = pneg %p133
        %p403 = pneg %p130
        %p404 = pneg %p154
        %p405 = pneg %p151
        %p406 = pneg %p175
        %p407 = pneg %p172
        %p408 = pneg %p196
        %p409 = pneg %p193
        %p410 = pneg %p217
        %p411 = pneg %p214
        %p412 = pneg %p243
        %p413 = pneg %p240
        %s414 = sand.u32 %s230, 1
        %s415 = scalar_lea.sflag [#allocation5], %s414
        %s416 = sand.u32 %s230, 1
        %s417 = smul.addr %s416, 80
        %s418 = scalar_lea.vmem [#allocation12], %s417
        %v420 = vld [vmem:[#allocation6] sm:$0xf]
        %v421 = vld [vmem:[#allocation6 + $0x4] sm:$0xf]
        %v422 = vld [vmem:[#allocation6 + $0x8] sm:$0xf]
        %v423 = vld [vmem:[#allocation6 + $0xc] sm:$0xf]
        %v424 = vld [vmem:[#allocation6 + $0x10] sm:$0xf]
        %v425 = vld [vmem:[#allocation6 + $0x14] sm:$0xf]
        %v426 = vld [vmem:[#allocation6 + $0x18] sm:$0xf]
        %v427 = vld [vmem:[#allocation6 + $0x1c] sm:$0xf]
        %v428 = vld [vmem:[#allocation6 + $0x20] sm:$0xf]
        %v429 = vld [vmem:[#allocation6 + $0x24] sm:$0xf]
        %v430 = vld [vmem:[#allocation6 + $0x28] sm:$0xf]
        %v431 = vld [vmem:[#allocation6 + $0x2c] sm:$0xf]
        %v432 = vld [vmem:[#allocation6 + $0x30] sm:$0xf]
        %v433 = vld [vmem:[#allocation6 + $0x34] sm:$0xf]
        %v434 = vld [vmem:[#allocation6 + $0x38] sm:$0xf]
        %v435 = vld [vmem:[#allocation6 + $0x3c] sm:$0xf]
        %v436 = vld [vmem:[%s2] sm:$0x1]
        %v437 = vld [vmem:[%s4] sm:$0x1]
        %v438 = vld [vmem:[%s6] sm:$0x1]
        %v439 = vld [vmem:[%s363] sm:$0xf]
        %v440 = vld [vmem:[%s363 + $0x4] sm:$0xf]
        %v441 = vld [vmem:[%s363 + $0x8] sm:$0xf]
        %v442 = vld [vmem:[%s363 + $0xc] sm:$0xf]
        %v443 = vld [vmem:[%s363 + $0x10] sm:$0xf]
        %v444 = vld [vmem:[%s363 + $0x14] sm:$0xf]
        %v445 = vld [vmem:[%s363 + $0x18] sm:$0xf]
        %v446 = vld [vmem:[%s363 + $0x1c] sm:$0xf]
        %v447 = vld [vmem:[%s363 + $0x20] sm:$0xf]
        %v448 = vld [vmem:[%s363 + $0x24] sm:$0xf]
        %v449 = vld [vmem:[%s363 + $0x28] sm:$0xf]
        %v450 = vld [vmem:[%s363 + $0x2c] sm:$0xf]
        %v451 = vld [vmem:[%s363 + $0x30] sm:$0xf]
        %v452 = vld [vmem:[%s363 + $0x34] sm:$0xf]
        %v453 = vld [vmem:[%s363 + $0x38] sm:$0xf]
        %v454 = vld [vmem:[%s363 + $0x3c] sm:$0xf]
        %v455 = vld [vmem:[%s363 + $0x40] sm:$0xf]
        %v456 = vld [vmem:[%s363 + $0x44] sm:$0xf]
        %v458 = vperm.slane %v436, 0
        %v478 = vunpack.c.l.b16 %v439
        %v479 = vunpack.c.l.b16 %v440
        %v480 = vunpack.c.l.b16 %v441
        %v481 = vunpack.c.l.b16 %v442
        %v482 = vunpack.c.l.b16 %v443
        %v483 = vunpack.c.l.b16 %v444
        %v484 = vunpack.c.l.b16 %v445
        %v485 = vunpack.c.l.b16 %v446
        %v486 = vunpack.c.l.b16 %v447
        %v487 = vunpack.c.l.b16 %v448
        %v488 = vunpack.c.l.b16 %v449
        %v489 = vunpack.c.l.b16 %v450
        %v490 = vunpack.c.l.b16 %v451
        %v491 = vunpack.c.l.b16 %v452
        %v492 = vunpack.c.l.b16 %v453
        %v493 = vunpack.c.l.b16 %v454
        %v494 = vunpack.c.l.b16 %v455
        %v495 = vunpack.c.l.b16 %v456
        %v496 = vpack.c.b16 %v479, %v478
        %v497 = vpack.c.b16 %v481, %v480
        %v498 = vpack.c.b16 %v483, %v482
        %v499 = vpack.c.b16 %v485, %v484
        %v500 = vpack.c.b16 %v487, %v486
        %v501 = vpack.c.b16 %v489, %v488
        %v502 = vpack.c.b16 %v491, %v490
        %v503 = vpack.c.b16 %v493, %v492
        %v504 = vpack.c.b16 %v495, %v494
        %v530 = vunpack.c.l.b16 %v420
        %v531 = vunpack.c.l.b16 %v421
        %v532 = vunpack.c.l.b16 %v422
        %v533 = vunpack.c.l.b16 %v423
        %v534 = vunpack.c.l.b16 %v424
        %v535 = vunpack.c.l.b16 %v425
        %v536 = vunpack.c.l.b16 %v426
        %v537 = vunpack.c.l.b16 %v427
        %v538 = vunpack.c.l.b16 %v428
        %v539 = vunpack.c.l.b16 %v429
        %v540 = vunpack.c.l.b16 %v430
        %v541 = vunpack.c.l.b16 %v431
        %v542 = vunpack.c.l.b16 %v432
        %v543 = vunpack.c.l.b16 %v433
        %v544 = vunpack.c.l.b16 %v434
        %v545 = vunpack.c.l.b16 %v435
        %v546 = vpack.c.b16 %v531, %v530
        %v547 = vpack.c.b16 %v533, %v532
        %v548 = vpack.c.b16 %v535, %v534
        %v549 = vpack.c.b16 %v537, %v536
        %v550 = vpack.c.b16 %v539, %v538
        %v551 = vpack.c.b16 %v541, %v540
        %v552 = vpack.c.b16 %v543, %v542
        %v553 = vpack.c.b16 %v545, %v544
        %562 = vmatpush.bf16.msra.mxu0 %v553
        %563 = vmatpush.bf16.msra.mxu0 %v552
        %564 = vmatpush.bf16.msra.mxu0 %v551
        %565 = vmatpush.bf16.msra.mxu0 %v550
        %566 = vmatpush.bf16.msra.mxu0 %v549
        %567 = vmatpush.bf16.msra.mxu0 %v548
        %568 = vmatpush.bf16.msra.mxu0 %v547
        %569 = vmatpush.bf16.msra.mxu0 %v546
        %570 = vmatmul.bf16.gmra.mxu0 %v496
        %v571 = vpop.f32.mrf.mxu0
        %v572 = vadd.f32 %v458, %v571
        %v573 = vpop.f32.mrf.mxu0
        %v574 = vadd.f32 %v458, %v573
        %575 = vmatmul.bf16.gmra.mxu0 %v497
        %v576 = vpop.f32.mrf.mxu0
        %v577 = vadd.f32 %v458, %v576
        %v578 = vpop.f32.mrf.mxu0
        %v579 = vadd.f32 %v458, %v578
        %580 = vmatmul.bf16.gmra.mxu0 %v498
        %v581 = vpop.f32.mrf.mxu0
        %v582 = vadd.f32 %v458, %v581
        %v583 = vpop.f32.mrf.mxu0
        %v584 = vadd.f32 %v458, %v583
        %585 = vmatmul.bf16.gmra.mxu0 %v499
        %v586 = vpop.f32.mrf.mxu0
        %v587 = vadd.f32 %v458, %v586
        %v588 = vpop.f32.mrf.mxu0
        %v589 = vadd.f32 %v458, %v588
        %590 = vmatmul.bf16.gmra.mxu0 %v500
        %v591 = vpop.f32.mrf.mxu0
        %v592 = vadd.f32 %v458, %v591
        %v593 = vpop.f32.mrf.mxu0
        %v594 = vadd.f32 %v458, %v593
        %595 = vmatmul.bf16.gmra.mxu0 %v501
        %v596 = vpop.f32.mrf.mxu0
        %v597 = vadd.f32 %v458, %v596
        %v598 = vpop.f32.mrf.mxu0
        %v599 = vadd.f32 %v458, %v598
        %600 = vmatmul.bf16.gmra.mxu0 %v502
        %v601 = vpop.f32.mrf.mxu0
        %v602 = vadd.f32 %v458, %v601
        %v603 = vpop.f32.mrf.mxu0
        %v604 = vadd.f32 %v458, %v603
        %605 = vmatmul.bf16.gmra.mxu0 %v503
        %v606 = vpop.f32.mrf.mxu0
        %v607 = vadd.f32 %v458, %v606
        %v608 = vpop.f32.mrf.mxu0
        %v609 = vadd.f32 %v458, %v608
        %610 = vmatmul.bf16.gmra.mxu0 %v504
        %v611 = vpop.f32.mrf.mxu0
        %v612 = vadd.f32 %v458, %v611
        %v613 = vpop.f32.mrf.mxu0
        %v614 = vadd.f32 %v458, %v613
        %615 = vdwg.mxu0
        %v616 = vmax.f32 %v572, 0.0
        %v617 = vmax.f32 %v574, 0.0
        %v618 = vmax.f32 %v577, 0.0
        %v619 = vmax.f32 %v579, 0.0
        %v620 = vmax.f32 %v582, 0.0
        %v621 = vmax.f32 %v584, 0.0
        %v622 = vmax.f32 %v587, 0.0
        %v623 = vmax.f32 %v589, 0.0
        %v624 = vmax.f32 %v592, 0.0
        %v625 = vmax.f32 %v594, 0.0
        %v626 = vmax.f32 %v597, 0.0
        %v627 = vmax.f32 %v599, 0.0
        %v628 = vmax.f32 %v602, 0.0
        %v629 = vmax.f32 %v604, 0.0
        %v630 = vmax.f32 %v607, 0.0
        %v631 = vmax.f32 %v609, 0.0
        %v632 = vmax.f32 %v612, 0.0
        %v633 = vmax.f32 %v614, 0.0
        %v634 = vpack.c.bf16 %v616, %v616
        %v635 = vpack.c.bf16 %v617, %v617
        %v636 = vpack.c.bf16 %v618, %v618
        %v637 = vpack.c.bf16 %v619, %v619
        %v638 = vpack.c.bf16 %v620, %v620
        %v639 = vpack.c.bf16 %v621, %v621
        %v640 = vpack.c.bf16 %v622, %v622
        %v641 = vpack.c.bf16 %v623, %v623
        %v642 = vpack.c.bf16 %v624, %v624
        %v643 = vpack.c.bf16 %v625, %v625
        %v644 = vpack.c.bf16 %v626, %v626
        %v645 = vpack.c.bf16 %v627, %v627
        %v646 = vpack.c.bf16 %v628, %v628
        %v647 = vpack.c.bf16 %v629, %v629
        %v648 = vpack.c.bf16 %v630, %v630
        %v649 = vpack.c.bf16 %v631, %v631
        %v650 = vpack.c.bf16 %v632, %v632
        %v651 = vpack.c.bf16 %v633, %v633
        %652 = vst [vmem:[#allocation2] sm:$0xf] %v634
        %653 = vst [vmem:[#allocation2 + $0x4] sm:$0xf] %v635
        %654 = vst [vmem:[#allocation2 + $0x8] sm:$0xf] %v636
        %655 = vst [vmem:[#allocation2 + $0xc] sm:$0xf] %v637
        %656 = vst [vmem:[#allocation2 + $0x10] sm:$0xf] %v638
        %657 = vst [vmem:[#allocation2 + $0x14] sm:$0xf] %v639
        %658 = vst [vmem:[#allocation2 + $0x18] sm:$0xf] %v640
        %659 = vst [vmem:[#allocation2 + $0x1c] sm:$0xf] %v641
        %660 = vst [vmem:[#allocation2 + $0x20] sm:$0xf] %v642
        %661 = vst [vmem:[#allocation2 + $0x24] sm:$0xf] %v643
        %662 = vst [vmem:[#allocation2 + $0x28] sm:$0xf] %v644
        %663 = vst [vmem:[#allocation2 + $0x2c] sm:$0xf] %v645
        %664 = vst [vmem:[#allocation2 + $0x30] sm:$0xf] %v646
        %665 = vst [vmem:[#allocation2 + $0x34] sm:$0xf] %v647
        %666 = vst [vmem:[#allocation2 + $0x38] sm:$0xf] %v648
        %667 = vst [vmem:[#allocation2 + $0x3c] sm:$0xf] %v649
        %668 = vst [vmem:[#allocation2 + $0x40] sm:$0xf] %v650
        %669 = vst [vmem:[#allocation2 + $0x44] sm:$0xf] %v651
        %670 = vst [vmem:[#allocation2] sm:$0xf] 0
        %671 = vst [vmem:[#allocation2 + $0x4] sm:$0xf] 0
        %s672 = scalar_lea.vmem [#allocation2], 8
        %vm673 = vcmask 1040384
        %vm674 = vsmask.f32 256
        %vm675 = vmand %vm673, %vm674
        %v676 = vld [vmem:[%s672] sm:$0x1]
        %v677 = vsel %vm675, 0, %v676
        %678 = vst [vmem:[%s672] sm:$0x1] %v677
        %v679 = vld [vmem:[%s672 + $0x8] sm:$0x1]
        %v680 = vsel %vm675, 0, %v679
        %681 = vst [vmem:[%s672 + $0x8] sm:$0x1] %v680
        %v682 = vld [vmem:[%s672 + $0x10] sm:$0x1]
        %v683 = vsel %vm675, 0, %v682
        %684 = vst [vmem:[%s672 + $0x10] sm:$0x1] %v683
        %v685 = vld [vmem:[%s672 + $0x18] sm:$0x1]
        %v686 = vsel %vm675, 0, %v685
        %687 = vst [vmem:[%s672 + $0x18] sm:$0x1] %v686
        %v688 = vld [vmem:[%s672 + $0x20] sm:$0x1]
        %v689 = vsel %vm675, 0, %v688
        %690 = vst [vmem:[%s672 + $0x20] sm:$0x1] %v689
        %v691 = vld [vmem:[%s672 + $0x28] sm:$0x1]
        %v692 = vsel %vm675, 0, %v691
        %693 = vst [vmem:[%s672 + $0x28] sm:$0x1] %v692
        %v694 = vld [vmem:[%s672 + $0x30] sm:$0x1]
        %v695 = vsel %vm675, 0, %v694
        %696 = vst [vmem:[%s672 + $0x30] sm:$0x1] %v695
        %v697 = vld [vmem:[%s672 + $0x38] sm:$0x1]
        %v698 = vsel %vm675, 0, %v697
        %699 = vst [vmem:[%s672 + $0x38] sm:$0x1] %v698
        %vm700 = vcmask 1043456
        %vm701 = vsmask.f32 7938
        %vm702 = vmand %vm700, %vm701
        %v703 = vld [vmem:[%s672 + $0x4] sm:$0xf]
        %v704 = vsel %vm702, 0, %v703
        %705 = vst [vmem:[%s672 + $0x4] sm:$0xf] %v704
        %v706 = vld [vmem:[%s672 + $0xc] sm:$0xf]
        %v707 = vsel %vm702, 0, %v706
        %708 = vst [vmem:[%s672 + $0xc] sm:$0xf] %v707
        %v709 = vld [vmem:[%s672 + $0x14] sm:$0xf]
        %v710 = vsel %vm702, 0, %v709
        %711 = vst [vmem:[%s672 + $0x14] sm:$0xf] %v710
        %v712 = vld [vmem:[%s672 + $0x1c] sm:$0xf]
        %v713 = vsel %vm702, 0, %v712
        %714 = vst [vmem:[%s672 + $0x1c] sm:$0xf] %v713
        %v715 = vld [vmem:[%s672 + $0x24] sm:$0xf]
        %v716 = vsel %vm702, 0, %v715
        %717 = vst [vmem:[%s672 + $0x24] sm:$0xf] %v716
        %v718 = vld [vmem:[%s672 + $0x2c] sm:$0xf]
        %v719 = vsel %vm702, 0, %v718
        %720 = vst [vmem:[%s672 + $0x2c] sm:$0xf] %v719
        %v721 = vld [vmem:[%s672 + $0x34] sm:$0xf]
        %v722 = vsel %vm702, 0, %v721
        %723 = vst [vmem:[%s672 + $0x34] sm:$0xf] %v722
        %v724 = vld [vmem:[%s672 + $0x3c] sm:$0xf]
        %v725 = vsel %vm702, 0, %v724
        %726 = vst [vmem:[%s672 + $0x3c] sm:$0xf] %v725
        %s727 = scalar_lea.vmem %s363, 72 [#allocation3]
        %v728 = vld [vmem:[%s727] sm:$0xf]
        %v729 = vld [vmem:[%s727 + $0x4] sm:$0xf]
        %v730 = vld [vmem:[%s727 + $0x8] sm:$0xf]
        %v731 = vld [vmem:[%s727 + $0xc] sm:$0xf]
        %v732 = vld [vmem:[%s727 + $0x10] sm:$0xf]
        %v733 = vld [vmem:[%s727 + $0x14] sm:$0xf]
        %v734 = vld [vmem:[%s727 + $0x18] sm:$0xf]
        %v735 = vld [vmem:[%s727 + $0x1c] sm:$0xf]
        %v736 = vld [vmem:[%s727 + $0x20] sm:$0xf]
        %v737 = vld [vmem:[%s727 + $0x24] sm:$0xf]
        %v738 = vld [vmem:[%s727 + $0x28] sm:$0xf]
        %v739 = vld [vmem:[%s727 + $0x2c] sm:$0xf]
        %v740 = vld [vmem:[%s727 + $0x30] sm:$0xf]
        %v741 = vld [vmem:[%s727 + $0x34] sm:$0xf]
        %v742 = vld [vmem:[%s727 + $0x38] sm:$0xf]
        %v743 = vld [vmem:[%s727 + $0x3c] sm:$0xf]
        %v744 = vld [vmem:[%s727 + $0x40] sm:$0xf]
        %v745 = vld [vmem:[%s727 + $0x44] sm:$0xf]
        %v764 = vunpack.c.l.b16 %v728
        %v765 = vunpack.c.l.b16 %v729
        %v766 = vunpack.c.l.b16 %v730
        %v767 = vunpack.c.l.b16 %v731
        %v768 = vunpack.c.l.b16 %v732
        %v769 = vunpack.c.l.b16 %v733
        %v770 = vunpack.c.l.b16 %v734
        %v771 = vunpack.c.l.b16 %v735
        %v772 = vunpack.c.l.b16 %v736
        %v773 = vunpack.c.l.b16 %v737
        %v774 = vunpack.c.l.b16 %v738
        %v775 = vunpack.c.l.b16 %v739
        %v776 = vunpack.c.l.b16 %v740
        %v777 = vunpack.c.l.b16 %v741
        %v778 = vunpack.c.l.b16 %v742
        %v779 = vunpack.c.l.b16 %v743
        %v780 = vunpack.c.l.b16 %v744
        %v781 = vunpack.c.l.b16 %v745
        %v782 = vpack.c.b16 %v765, %v764
        %v783 = vpack.c.b16 %v767, %v766
        %v784 = vpack.c.b16 %v769, %v768
        %v785 = vpack.c.b16 %v771, %v770
        %v786 = vpack.c.b16 %v773, %v772
        %v787 = vpack.c.b16 %v775, %v774
        %v788 = vpack.c.b16 %v777, %v776
        %v789 = vpack.c.b16 %v779, %v778
        %v790 = vpack.c.b16 %v781, %v780
        %800 = vmatpush.bf16.msra.mxu0 %v553
        %801 = vmatpush.bf16.msra.mxu0 %v552
        %802 = vmatpush.bf16.msra.mxu0 %v551
        %803 = vmatpush.bf16.msra.mxu0 %v550
        %804 = vmatpush.bf16.msra.mxu0 %v549
        %805 = vmatpush.bf16.msra.mxu0 %v548
        %806 = vmatpush.bf16.msra.mxu0 %v547
        %807 = vmatpush.bf16.msra.mxu0 %v546
        %808 = vmatmul.bf16.gmra.mxu0 %v782
        %v809 = vpop.f32.mrf.mxu0
        %v810 = vadd.f32 %v458, %v809
        %v811 = vpop.f32.mrf.mxu0
        %v812 = vadd.f32 %v458, %v811
        %813 = vmatmul.bf16.gmra.mxu0 %v783
        %v814 = vpop.f32.mrf.mxu0
        %v815 = vadd.f32 %v458, %v814
        %v816 = vpop.f32.mrf.mxu0
        %v817 = vadd.f32 %v458, %v816
        %818 = vmatmul.bf16.gmra.mxu0 %v784
        %v819 = vpop.f32.mrf.mxu0
        %v820 = vadd.f32 %v458, %v819
        %v821 = vpop.f32.mrf.mxu0
        %v822 = vadd.f32 %v458, %v821
        %823 = vmatmul.bf16.gmra.mxu0 %v785
        %v824 = vpop.f32.mrf.mxu0
        %v825 = vadd.f32 %v458, %v824
        %v826 = vpop.f32.mrf.mxu0
        %v827 = vadd.f32 %v458, %v826
        %828 = vmatmul.bf16.gmra.mxu0 %v786
        %v829 = vpop.f32.mrf.mxu0
        %v830 = vadd.f32 %v458, %v829
        %v831 = vpop.f32.mrf.mxu0
        %v832 = vadd.f32 %v458, %v831
        %833 = vmatmul.bf16.gmra.mxu0 %v787
        %v834 = vpop.f32.mrf.mxu0
        %v835 = vadd.f32 %v458, %v834
        %v836 = vpop.f32.mrf.mxu0
        %v837 = vadd.f32 %v458, %v836
        %838 = vmatmul.bf16.gmra.mxu0 %v788
        %v839 = vpop.f32.mrf.mxu0
        %v840 = vadd.f32 %v458, %v839
        %v841 = vpop.f32.mrf.mxu0
        %v842 = vadd.f32 %v458, %v841
        %843 = vmatmul.bf16.gmra.mxu0 %v789
        %v844 = vpop.f32.mrf.mxu0
        %v845 = vadd.f32 %v458, %v844
        %v846 = vpop.f32.mrf.mxu0
        %v847 = vadd.f32 %v458, %v846
        %848 = vmatmul.bf16.gmra.mxu0 %v790
        %v849 = vpop.f32.mrf.mxu0
        %v850 = vadd.f32 %v458, %v849
        %v851 = vpop.f32.mrf.mxu0
        %v852 = vadd.f32 %v458, %v851
        %853 = vdwg.mxu0
        %v854 = vmax.f32 %v810, 0.0
        %v855 = vmax.f32 %v812, 0.0
        %v856 = vmax.f32 %v815, 0.0
        %v857 = vmax.f32 %v817, 0.0
        %v858 = vmax.f32 %v820, 0.0
        %v859 = vmax.f32 %v822, 0.0
        %v860 = vmax.f32 %v825, 0.0
        %v861 = vmax.f32 %v827, 0.0
        %v862 = vmax.f32 %v830, 0.0
        %v863 = vmax.f32 %v832, 0.0
        %v864 = vmax.f32 %v835, 0.0
        %v865 = vmax.f32 %v837, 0.0
        %v866 = vmax.f32 %v840, 0.0
        %v867 = vmax.f32 %v842, 0.0
        %v868 = vmax.f32 %v845, 0.0
        %v869 = vmax.f32 %v847, 0.0
        %v870 = vmax.f32 %v850, 0.0
        %v871 = vmax.f32 %v852, 0.0
        %v872 = vpack.c.bf16 %v854, %v854
        %v873 = vpack.c.bf16 %v855, %v855
        %v874 = vpack.c.bf16 %v856, %v856
        %v875 = vpack.c.bf16 %v857, %v857
        %v876 = vpack.c.bf16 %v858, %v858
        %v877 = vpack.c.bf16 %v859, %v859
        %v878 = vpack.c.bf16 %v860, %v860
        %v879 = vpack.c.bf16 %v861, %v861
        %v880 = vpack.c.bf16 %v862, %v862
        %v881 = vpack.c.bf16 %v863, %v863
        %v882 = vpack.c.bf16 %v864, %v864
        %v883 = vpack.c.bf16 %v865, %v865
        %v884 = vpack.c.bf16 %v866, %v866
        %v885 = vpack.c.bf16 %v867, %v867
        %v886 = vpack.c.bf16 %v868, %v868
        %v887 = vpack.c.bf16 %v869, %v869
        %v888 = vpack.c.bf16 %v870, %v870
        %v889 = vpack.c.bf16 %v871, %v871
        %s890 = scalar_lea.vmem [#allocation2], 72
        %891 = vst [vmem:[%s890] sm:$0xf] %v872
        %892 = vst [vmem:[%s890 + $0x4] sm:$0xf] %v873
        %893 = vst [vmem:[%s890 + $0x8] sm:$0xf] %v874
        %894 = vst [vmem:[%s890 + $0xc] sm:$0xf] %v875
        %895 = vst [vmem:[%s890 + $0x10] sm:$0xf] %v876
        %896 = vst [vmem:[%s890 + $0x14] sm:$0xf] %v877
        %897 = vst [vmem:[%s890 + $0x18] sm:$0xf] %v878
        %898 = vst [vmem:[%s890 + $0x1c] sm:$0xf] %v879
        %899 = vst [vmem:[%s890 + $0x20] sm:$0xf] %v880
        %900 = vst [vmem:[%s890 + $0x24] sm:$0xf] %v881
        %901 = vst [vmem:[%s890 + $0x28] sm:$0xf] %v882
        %902 = vst [vmem:[%s890 + $0x2c] sm:$0xf] %v883
        %903 = vst [vmem:[%s890 + $0x30] sm:$0xf] %v884
        %904 = vst [vmem:[%s890 + $0x34] sm:$0xf] %v885
        %905 = vst [vmem:[%s890 + $0x38] sm:$0xf] %v886
        %906 = vst [vmem:[%s890 + $0x3c] sm:$0xf] %v887
        %907 = vst [vmem:[%s890 + $0x40] sm:$0xf] %v888
        %908 = vst [vmem:[%s890 + $0x44] sm:$0xf] %v889
        %909 = vst [vmem:[%s890] sm:$0xf] 0
        %910 = vst [vmem:[%s890 + $0x4] sm:$0xf] 0
        %s911 = scalar_lea.vmem [#allocation2], 80
        %912 = vst [vmem:[%s911 + $0x4] sm:$0xf] 0
        %913 = vst [vmem:[%s911 + $0xc] sm:$0xf] 0
        %914 = vst [vmem:[%s911 + $0x14] sm:$0xf] 0
        %915 = vst [vmem:[%s911 + $0x1c] sm:$0xf] 0
        %916 = vst [vmem:[%s911 + $0x24] sm:$0xf] 0
        %917 = vst [vmem:[%s911 + $0x2c] sm:$0xf] 0
        %918 = vst [vmem:[%s911 + $0x34] sm:$0xf] 0
        %919 = vst [vmem:[%s911 + $0x3c] sm:$0xf] 0
        %s920 = scalar_lea.vmem %s363, 144 [#allocation3]
        %v921 = vld [vmem:[%s920] sm:$0xf]
        %v922 = vld [vmem:[%s920 + $0x4] sm:$0xf]
        %v923 = vld [vmem:[%s920 + $0x8] sm:$0xf]
        %v924 = vld [vmem:[%s920 + $0xc] sm:$0xf]
        %v925 = vld [vmem:[%s920 + $0x10] sm:$0xf]
        %v926 = vld [vmem:[%s920 + $0x14] sm:$0xf]
        %v927 = vld [vmem:[%s920 + $0x18] sm:$0xf]
        %v928 = vld [vmem:[%s920 + $0x1c] sm:$0xf]
        %v929 = vld [vmem:[%s920 + $0x20] sm:$0xf]
        %v930 = vld [vmem:[%s920 + $0x24] sm:$0xf]
        %v931 = vld [vmem:[%s920 + $0x28] sm:$0xf]
        %v932 = vld [vmem:[%s920 + $0x2c] sm:$0xf]
        %v933 = vld [vmem:[%s920 + $0x30] sm:$0xf]
        %v934 = vld [vmem:[%s920 + $0x34] sm:$0xf]
        %v935 = vld [vmem:[%s920 + $0x38] sm:$0xf]
        %v936 = vld [vmem:[%s920 + $0x3c] sm:$0xf]
        %v937 = vld [vmem:[%s920 + $0x40] sm:$0xf]
        %v938 = vld [vmem:[%s920 + $0x44] sm:$0xf]
        %v957 = vunpack.c.l.b16 %v921
        %v958 = vunpack.c.l.b16 %v922
        %v959 = vunpack.c.l.b16 %v923
        %v960 = vunpack.c.l.b16 %v924
        %v961 = vunpack.c.l.b16 %v925
        %v962 = vunpack.c.l.b16 %v926
        %v963 = vunpack.c.l.b16 %v927
        %v964 = vunpack.c.l.b16 %v928
        %v965 = vunpack.c.l.b16 %v929
        %v966 = vunpack.c.l.b16 %v930
        %v967 = vunpack.c.l.b16 %v931
        %v968 = vunpack.c.l.b16 %v932
        %v969 = vunpack.c.l.b16 %v933
        %v970 = vunpack.c.l.b16 %v934
        %v971 = vunpack.c.l.b16 %v935
        %v972 = vunpack.c.l.b16 %v936
        %v973 = vunpack.c.l.b16 %v937
        %v974 = vunpack.c.l.b16 %v938
        %v975 = vpack.c.b16 %v958, %v957
        %v976 = vpack.c.b16 %v960, %v959
        %v977 = vpack.c.b16 %v962, %v961
        %v978 = vpack.c.b16 %v964, %v963
        %v979 = vpack.c.b16 %v966, %v965
        %v980 = vpack.c.b16 %v968, %v967
        %v981 = vpack.c.b16 %v970, %v969
        %v982 = vpack.c.b16 %v972, %v971
        %v983 = vpack.c.b16 %v974, %v973
        %993 = vmatpush.bf16.msra.mxu0 %v553
        %994 = vmatpush.bf16.msra.mxu0 %v552
        %995 = vmatpush.bf16.msra.mxu0 %v551
        %996 = vmatpush.bf16.msra.mxu0 %v550
        %997 = vmatpush.bf16.msra.mxu0 %v549
        %998 = vmatpush.bf16.msra.mxu0 %v548
        %999 = vmatpush.bf16.msra.mxu0 %v547
        %1000 = vmatpush.bf16.msra.mxu0 %v546
        %1001 = vmatmul.bf16.gmra.mxu0 %v975
        %v1002 = vpop.f32.mrf.mxu0
        %v1003 = vadd.f32 %v458, %v1002
        %v1004 = vpop.f32.mrf.mxu0
        %v1005 = vadd.f32 %v458, %v1004
        %1006 = vmatmul.bf16.gmra.mxu0 %v976
        %v1007 = vpop.f32.mrf.mxu0
        %v1008 = vadd.f32 %v458, %v1007
        %v1009 = vpop.f32.mrf.mxu0
        %v1010 = vadd.f32 %v458, %v1009
        %1011 = vmatmul.bf16.gmra.mxu0 %v977
        %v1012 = vpop.f32.mrf.mxu0
        %v1013 = vadd.f32 %v458, %v1012
        %v1014 = vpop.f32.mrf.mxu0
        %v1015 = vadd.f32 %v458, %v1014
        %1016 = vmatmul.bf16.gmra.mxu0 %v978
        %v1017 = vpop.f32.mrf.mxu0
        %v1018 = vadd.f32 %v458, %v1017
        %v1019 = vpop.f32.mrf.mxu0
        %v1020 = vadd.f32 %v458, %v1019
        %1021 = vmatmul.bf16.gmra.mxu0 %v979
        %v1022 = vpop.f32.mrf.mxu0
        %v1023 = vadd.f32 %v458, %v1022
        %v1024 = vpop.f32.mrf.mxu0
        %v1025 = vadd.f32 %v458, %v1024
        %1026 = vmatmul.bf16.gmra.mxu0 %v980
        %v1027 = vpop.f32.mrf.mxu0
        %v1028 = vadd.f32 %v458, %v1027
        %v1029 = vpop.f32.mrf.mxu0
        %v1030 = vadd.f32 %v458, %v1029
        %1031 = vmatmul.bf16.gmra.mxu0 %v981
        %v1032 = vpop.f32.mrf.mxu0
        %v1033 = vadd.f32 %v458, %v1032
        %v1034 = vpop.f32.mrf.mxu0
        %v1035 = vadd.f32 %v458, %v1034
        %1036 = vmatmul.bf16.gmra.mxu0 %v982
        %v1037 = vpop.f32.mrf.mxu0
        %v1038 = vadd.f32 %v458, %v1037
        %v1039 = vpop.f32.mrf.mxu0
        %v1040 = vadd.f32 %v458, %v1039
        %1041 = vmatmul.bf16.gmra.mxu0 %v983
        %v1042 = vpop.f32.mrf.mxu0
        %v1043 = vadd.f32 %v458, %v1042
        %v1044 = vpop.f32.mrf.mxu0
        %v1045 = vadd.f32 %v458, %v1044
        %1046 = vdwg.mxu0
        %v1047 = vmax.f32 %v1003, 0.0
        %v1048 = vmax.f32 %v1005, 0.0
        %v1049 = vmax.f32 %v1008, 0.0
        %v1050 = vmax.f32 %v1010, 0.0
        %v1051 = vmax.f32 %v1013, 0.0
        %v1052 = vmax.f32 %v1015, 0.0
        %v1053 = vmax.f32 %v1018, 0.0
        %v1054 = vmax.f32 %v1020, 0.0
        %v1055 = vmax.f32 %v1023, 0.0
        %v1056 = vmax.f32 %v1025, 0.0
        %v1057 = vmax.f32 %v1028, 0.0
        %v1058 = vmax.f32 %v1030, 0.0
        %v1059 = vmax.f32 %v1033, 0.0
        %v1060 = vmax.f32 %v1035, 0.0
        %v1061 = vmax.f32 %v1038, 0.0
        %v1062 = vmax.f32 %v1040, 0.0
        %v1063 = vmax.f32 %v1043, 0.0
        %v1064 = vmax.f32 %v1045, 0.0
        %v1065 = vpack.c.bf16 %v1047, %v1047
        %v1066 = vpack.c.bf16 %v1048, %v1048
        %v1067 = vpack.c.bf16 %v1049, %v1049
        %v1068 = vpack.c.bf16 %v1050, %v1050
        %v1069 = vpack.c.bf16 %v1051, %v1051
        %v1070 = vpack.c.bf16 %v1052, %v1052
        %v1071 = vpack.c.bf16 %v1053, %v1053
        %v1072 = vpack.c.bf16 %v1054, %v1054
        %v1073 = vpack.c.bf16 %v1055, %v1055
        %v1074 = vpack.c.bf16 %v1056, %v1056
        %v1075 = vpack.c.bf16 %v1057, %v1057
        %v1076 = vpack.c.bf16 %v1058, %v1058
        %v1077 = vpack.c.bf16 %v1059, %v1059
        %v1078 = vpack.c.bf16 %v1060, %v1060
        %v1079 = vpack.c.bf16 %v1061, %v1061
        %v1080 = vpack.c.bf16 %v1062, %v1062
        %v1081 = vpack.c.bf16 %v1063, %v1063
        %v1082 = vpack.c.bf16 %v1064, %v1064
        %s1083 = scalar_lea.vmem [#allocation2], 144
        %1084 = vst [vmem:[%s1083] sm:$0xf] %v1065
        %1085 = vst [vmem:[%s1083 + $0x4] sm:$0xf] %v1066
        %1086 = vst [vmem:[%s1083 + $0x8] sm:$0xf] %v1067
        %1087 = vst [vmem:[%s1083 + $0xc] sm:$0xf] %v1068
        %1088 = vst [vmem:[%s1083 + $0x10] sm:$0xf] %v1069
        %1089 = vst [vmem:[%s1083 + $0x14] sm:$0xf] %v1070
        %1090 = vst [vmem:[%s1083 + $0x18] sm:$0xf] %v1071
        %1091 = vst [vmem:[%s1083 + $0x1c] sm:$0xf] %v1072
        %1092 = vst [vmem:[%s1083 + $0x20] sm:$0xf] %v1073
        %1093 = vst [vmem:[%s1083 + $0x24] sm:$0xf] %v1074
        %1094 = vst [vmem:[%s1083 + $0x28] sm:$0xf] %v1075
        %1095 = vst [vmem:[%s1083 + $0x2c] sm:$0xf] %v1076
        %1096 = vst [vmem:[%s1083 + $0x30] sm:$0xf] %v1077
        %1097 = vst [vmem:[%s1083 + $0x34] sm:$0xf] %v1078
        %1098 = vst [vmem:[%s1083 + $0x38] sm:$0xf] %v1079
        %1099 = vst [vmem:[%s1083 + $0x3c] sm:$0xf] %v1080
        %1100 = vst [vmem:[%s1083 + $0x40] sm:$0xf] %v1081
        %1101 = vst [vmem:[%s1083 + $0x44] sm:$0xf] %v1082
        %s1102 = scalar_lea.vmem [#allocation2], 208
        %1103 = vst [vmem:[%s1102] sm:$0xf] 0
        %1104 = vst [vmem:[%s1102 + $0x4] sm:$0xf] 0
        %v1105 = vld [vmem:[%s1083] sm:$0x1]
        %v1106 = vsel %vm675, 0, %v1105
        %1107 = vst [vmem:[%s1083] sm:$0x1] %v1106
        %v1108 = vld [vmem:[%s1083 + $0x8] sm:$0x1]
        %v1109 = vsel %vm675, 0, %v1108
        %1110 = vst [vmem:[%s1083 + $0x8] sm:$0x1] %v1109
        %v1111 = vld [vmem:[%s1083 + $0x10] sm:$0x1]
        %v1112 = vsel %vm675, 0, %v1111
        %1113 = vst [vmem:[%s1083 + $0x10] sm:$0x1] %v1112
        %v1114 = vld [vmem:[%s1083 + $0x18] sm:$0x1]
        %v1115 = vsel %vm675, 0, %v1114
        %1116 = vst [vmem:[%s1083 + $0x18] sm:$0x1] %v1115
        %v1117 = vld [vmem:[%s1083 + $0x20] sm:$0x1]
        %v1118 = vsel %vm675, 0, %v1117
        %1119 = vst [vmem:[%s1083 + $0x20] sm:$0x1] %v1118
        %v1120 = vld [vmem:[%s1083 + $0x28] sm:$0x1]
        %v1121 = vsel %vm675, 0, %v1120
        %1122 = vst [vmem:[%s1083 + $0x28] sm:$0x1] %v1121
        %v1123 = vld [vmem:[%s1083 + $0x30] sm:$0x1]
        %v1124 = vsel %vm675, 0, %v1123
        %1125 = vst [vmem:[%s1083 + $0x30] sm:$0x1] %v1124
        %v1126 = vld [vmem:[%s1083 + $0x38] sm:$0x1]
        %v1127 = vsel %vm675, 0, %v1126
        %1128 = vst [vmem:[%s1083 + $0x38] sm:$0x1] %v1127
        %v1129 = vld [vmem:[%s1083 + $0x4] sm:$0xf]
        %v1130 = vsel %vm702, 0, %v1129
        %1131 = vst [vmem:[%s1083 + $0x4] sm:$0xf] %v1130
        %v1132 = vld [vmem:[%s1083 + $0xc] sm:$0xf]
        %v1133 = vsel %vm702, 0, %v1132
        %1134 = vst [vmem:[%s1083 + $0xc] sm:$0xf] %v1133
        %v1135 = vld [vmem:[%s1083 + $0x14] sm:$0xf]
        %v1136 = vsel %vm702, 0, %v1135
        %1137 = vst [vmem:[%s1083 + $0x14] sm:$0xf] %v1136
        %v1138 = vld [vmem:[%s1083 + $0x1c] sm:$0xf]
        %v1139 = vsel %vm702, 0, %v1138
        %1140 = vst [vmem:[%s1083 + $0x1c] sm:$0xf] %v1139
        %v1141 = vld [vmem:[%s1083 + $0x24] sm:$0xf]
        %v1142 = vsel %vm702, 0, %v1141
        %1143 = vst [vmem:[%s1083 + $0x24] sm:$0xf] %v1142
        %v1144 = vld [vmem:[%s1083 + $0x2c] sm:$0xf]
        %v1145 = vsel %vm702, 0, %v1144
        %1146 = vst [vmem:[%s1083 + $0x2c] sm:$0xf] %v1145
        %v1147 = vld [vmem:[%s1083 + $0x34] sm:$0xf]
        %v1148 = vsel %vm702, 0, %v1147
        %1149 = vst [vmem:[%s1083 + $0x34] sm:$0xf] %v1148
        %v1150 = vld [vmem:[%s1083 + $0x3c] sm:$0xf]
        %v1151 = vsel %vm702, 0, %v1150
        %1152 = vst [vmem:[%s1083 + $0x3c] sm:$0xf] %v1151
        %s1153 = scalar_lea.vmem %s363, 216 [#allocation3]
        %v1154 = vld [vmem:[%s1153] sm:$0xf]
        %v1155 = vld [vmem:[%s1153 + $0x4] sm:$0xf]
        %v1156 = vld [vmem:[%s1153 + $0x8] sm:$0xf]
        %v1157 = vld [vmem:[%s1153 + $0xc] sm:$0xf]
        %v1158 = vld [vmem:[%s1153 + $0x10] sm:$0xf]
        %v1159 = vld [vmem:[%s1153 + $0x14] sm:$0xf]
        %v1160 = vld [vmem:[%s1153 + $0x18] sm:$0xf]
        %v1161 = vld [vmem:[%s1153 + $0x1c] sm:$0xf]
        %v1162 = vld [vmem:[%s1153 + $0x20] sm:$0xf]
        %v1163 = vld [vmem:[%s1153 + $0x24] sm:$0xf]
        %v1164 = vld [vmem:[%s1153 + $0x28] sm:$0xf]
        %v1165 = vld [vmem:[%s1153 + $0x2c] sm:$0xf]
        %v1166 = vld [vmem:[%s1153 + $0x30] sm:$0xf]
        %v1167 = vld [vmem:[%s1153 + $0x34] sm:$0xf]
        %v1168 = vld [vmem:[%s1153 + $0x38] sm:$0xf]
        %v1169 = vld [vmem:[%s1153 + $0x3c] sm:$0xf]
        %v1170 = vld [vmem:[%s1153 + $0x40] sm:$0xf]
        %v1171 = vld [vmem:[%s1153 + $0x44] sm:$0xf]
        %v1190 = vunpack.c.l.b16 %v1154
        %v1191 = vunpack.c.l.b16 %v1155
        %v1192 = vunpack.c.l.b16 %v1156
        %v1193 = vunpack.c.l.b16 %v1157
        %v1194 = vunpack.c.l.b16 %v1158
        %v1195 = vunpack.c.l.b16 %v1159
        %v1196 = vunpack.c.l.b16 %v1160
        %v1197 = vunpack.c.l.b16 %v1161
        %v1198 = vunpack.c.l.b16 %v1162
        %v1199 = vunpack.c.l.b16 %v1163
        %v1200 = vunpack.c.l.b16 %v1164
        %v1201 = vunpack.c.l.b16 %v1165
        %v1202 = vunpack.c.l.b16 %v1166
        %v1203 = vunpack.c.l.b16 %v1167
        %v1204 = vunpack.c.l.b16 %v1168
        %v1205 = vunpack.c.l.b16 %v1169
        %v1206 = vunpack.c.l.b16 %v1170
        %v1207 = vunpack.c.l.b16 %v1171
        %v1208 = vpack.c.b16 %v1191, %v1190
        %v1209 = vpack.c.b16 %v1193, %v1192
        %v1210 = vpack.c.b16 %v1195, %v1194
        %v1211 = vpack.c.b16 %v1197, %v1196
        %v1212 = vpack.c.b16 %v1199, %v1198
        %v1213 = vpack.c.b16 %v1201, %v1200
        %v1214 = vpack.c.b16 %v1203, %v1202
        %v1215 = vpack.c.b16 %v1205, %v1204
        %v1216 = vpack.c.b16 %v1207, %v1206
        %1226 = vmatpush.bf16.msra.mxu0 %v553
        %1227 = vmatpush.bf16.msra.mxu0 %v552
        %1228 = vmatpush.bf16.msra.mxu0 %v551
        %1229 = vmatpush.bf16.msra.mxu0 %v550
        %1230 = vmatpush.bf16.msra.mxu0 %v549
        %1231 = vmatpush.bf16.msra.mxu0 %v548
        %1232 = vmatpush.bf16.msra.mxu0 %v547
        %1233 = vmatpush.bf16.msra.mxu0 %v546
        %1234 = vmatmul.bf16.gmra.mxu0 %v1208
        %v1235 = vpop.f32.mrf.mxu0
        %v1236 = vadd.f32 %v458, %v1235
        %v1237 = vpop.f32.mrf.mxu0
        %v1238 = vadd.f32 %v458, %v1237
        %1239 = vmatmul.bf16.gmra.mxu0 %v1209
        %v1240 = vpop.f32.mrf.mxu0
        %v1241 = vadd.f32 %v458, %v1240
        %v1242 = vpop.f32.mrf.mxu0
        %v1243 = vadd.f32 %v458, %v1242
        %1244 = vmatmul.bf16.gmra.mxu0 %v1210
        %v1245 = vpop.f32.mrf.mxu0
        %v1246 = vadd.f32 %v458, %v1245
        %v1247 = vpop.f32.mrf.mxu0
        %v1248 = vadd.f32 %v458, %v1247
        %1249 = vmatmul.bf16.gmra.mxu0 %v1211
        %v1250 = vpop.f32.mrf.mxu0
        %v1251 = vadd.f32 %v458, %v1250
        %v1252 = vpop.f32.mrf.mxu0
        %v1253 = vadd.f32 %v458, %v1252
        %1254 = vmatmul.bf16.gmra.mxu0 %v1212
        %v1255 = vpop.f32.mrf.mxu0
        %v1256 = vadd.f32 %v458, %v1255
        %v1257 = vpop.f32.mrf.mxu0
        %v1258 = vadd.f32 %v458, %v1257
        %1259 = vmatmul.bf16.gmra.mxu0 %v1213
        %v1260 = vpop.f32.mrf.mxu0
        %v1261 = vadd.f32 %v458, %v1260
        %v1262 = vpop.f32.mrf.mxu0
        %v1263 = vadd.f32 %v458, %v1262
        %1264 = vmatmul.bf16.gmra.mxu0 %v1214
        %v1265 = vpop.f32.mrf.mxu0
        %v1266 = vadd.f32 %v458, %v1265
        %v1267 = vpop.f32.mrf.mxu0
        %v1268 = vadd.f32 %v458, %v1267
        %1269 = vmatmul.bf16.gmra.mxu0 %v1215
        %v1270 = vpop.f32.mrf.mxu0
        %v1271 = vadd.f32 %v458, %v1270
        %v1272 = vpop.f32.mrf.mxu0
        %v1273 = vadd.f32 %v458, %v1272
        %1274 = vmatmul.bf16.gmra.mxu0 %v1216
        %v1275 = vpop.f32.mrf.mxu0
        %v1276 = vadd.f32 %v458, %v1275
        %v1277 = vpop.f32.mrf.mxu0
        %v1278 = vadd.f32 %v458, %v1277
        %1279 = vdwg.mxu0
        %v1280 = vmax.f32 %v1236, 0.0
        %v1281 = vmax.f32 %v1238, 0.0
        %v1282 = vmax.f32 %v1241, 0.0
        %v1283 = vmax.f32 %v1243, 0.0
        %v1284 = vmax.f32 %v1246, 0.0
        %v1285 = vmax.f32 %v1248, 0.0
        %v1286 = vmax.f32 %v1251, 0.0
        %v1287 = vmax.f32 %v1253, 0.0
        %v1288 = vmax.f32 %v1256, 0.0
        %v1289 = vmax.f32 %v1258, 0.0
        %v1290 = vmax.f32 %v1261, 0.0
        %v1291 = vmax.f32 %v1263, 0.0
        %v1292 = vmax.f32 %v1266, 0.0
        %v1293 = vmax.f32 %v1268, 0.0
        %v1294 = vmax.f32 %v1271, 0.0
        %v1295 = vmax.f32 %v1273, 0.0
        %v1296 = vmax.f32 %v1276, 0.0
        %v1297 = vmax.f32 %v1278, 0.0
        %v1298 = vpack.c.bf16 %v1280, %v1280
        %v1299 = vpack.c.bf16 %v1281, %v1281
        %v1300 = vpack.c.bf16 %v1282, %v1282
        %v1301 = vpack.c.bf16 %v1283, %v1283
        %v1302 = vpack.c.bf16 %v1284, %v1284
        %v1303 = vpack.c.bf16 %v1285, %v1285
        %v1304 = vpack.c.bf16 %v1286, %v1286
        %v1305 = vpack.c.bf16 %v1287, %v1287
        %v1306 = vpack.c.bf16 %v1288, %v1288
        %v1307 = vpack.c.bf16 %v1289, %v1289
        %v1308 = vpack.c.bf16 %v1290, %v1290
        %v1309 = vpack.c.bf16 %v1291, %v1291
        %v1310 = vpack.c.bf16 %v1292, %v1292
        %v1311 = vpack.c.bf16 %v1293, %v1293
        %v1312 = vpack.c.bf16 %v1294, %v1294
        %v1313 = vpack.c.bf16 %v1295, %v1295
        %v1314 = vpack.c.bf16 %v1296, %v1296
        %v1315 = vpack.c.bf16 %v1297, %v1297
        %s1316 = scalar_lea.vmem [#allocation2], 216
        %1317 = vst [vmem:[%s1316] sm:$0xf] %v1298
        %1318 = vst [vmem:[%s1316 + $0x4] sm:$0xf] %v1299
        %1319 = vst [vmem:[%s1316 + $0x8] sm:$0xf] %v1300
        %1320 = vst [vmem:[%s1316 + $0xc] sm:$0xf] %v1301
        %1321 = vst [vmem:[%s1316 + $0x10] sm:$0xf] %v1302
        %1322 = vst [vmem:[%s1316 + $0x14] sm:$0xf] %v1303
        %1323 = vst [vmem:[%s1316 + $0x18] sm:$0xf] %v1304
        %1324 = vst [vmem:[%s1316 + $0x1c] sm:$0xf] %v1305
        %1325 = vst [vmem:[%s1316 + $0x20] sm:$0xf] %v1306
        %1326 = vst [vmem:[%s1316 + $0x24] sm:$0xf] %v1307
        %1327 = vst [vmem:[%s1316 + $0x28] sm:$0xf] %v1308
        %1328 = vst [vmem:[%s1316 + $0x2c] sm:$0xf] %v1309
        %1329 = vst [vmem:[%s1316 + $0x30] sm:$0xf] %v1310
        %1330 = vst [vmem:[%s1316 + $0x34] sm:$0xf] %v1311
        %1331 = vst [vmem:[%s1316 + $0x38] sm:$0xf] %v1312
        %1332 = vst [vmem:[%s1316 + $0x3c] sm:$0xf] %v1313
        %1333 = vst [vmem:[%s1316 + $0x40] sm:$0xf] %v1314
        %1334 = vst [vmem:[%s1316 + $0x44] sm:$0xf] %v1315
        %s1335 = scalar_lea.vmem [#allocation2], 280
        %1336 = vst [vmem:[%s1335] sm:$0xf] 0
        %1337 = vst [vmem:[%s1335 + $0x4] sm:$0xf] 0
        %1338 = vst [vmem:[%s1316 + $0x4] sm:$0xf] 0
        %1339 = vst [vmem:[%s1316 + $0xc] sm:$0xf] 0
        %1340 = vst [vmem:[%s1316 + $0x14] sm:$0xf] 0
        %1341 = vst [vmem:[%s1316 + $0x1c] sm:$0xf] 0
        %1342 = vst [vmem:[%s1316 + $0x24] sm:$0xf] 0
        %1343 = vst [vmem:[%s1316 + $0x2c] sm:$0xf] 0
        %1344 = vst [vmem:[%s1316 + $0x34] sm:$0xf] 0
        %1345 = vst [vmem:[%s1316 + $0x3c] sm:$0xf] 0
        %v1346 = vld [vmem:[#allocation2] sm:$0xf]
        %v1347 = vld [vmem:[#allocation2 + $0x8] sm:$0xf]
        %v1348 = vld [vmem:[#allocation2 + $0x10] sm:$0xf]
        %v1349 = vld [vmem:[#allocation2 + $0x18] sm:$0xf]
        %v1350 = vld [vmem:[#allocation2 + $0x20] sm:$0xf]
        %v1351 = vld [vmem:[#allocation2 + $0x28] sm:$0xf]
        %v1352 = vld [vmem:[#allocation2 + $0x30] sm:$0xf]
        %v1353 = vld [vmem:[#allocation2 + $0x38] sm:$0xf]
        %v1354 = vld [vmem:[#allocation8] sm:$0xf]
        %v1355 = vld [vmem:[#allocation8 + $0x4] sm:$0xf]
        %v1356 = vld [vmem:[#allocation8 + $0x8] sm:$0xf]
        %v1357 = vld [vmem:[#allocation8 + $0xc] sm:$0xf]
        %v1358 = vld [vmem:[#allocation8 + $0x10] sm:$0xf]
        %v1359 = vld [vmem:[#allocation8 + $0x14] sm:$0xf]
        %v1360 = vld [vmem:[#allocation8 + $0x18] sm:$0xf]
        %v1361 = vld [vmem:[#allocation8 + $0x1c] sm:$0xf]
        %v1362 = vld [vmem:[#allocation8 + $0x20] sm:$0xf]
        %v1363 = vld [vmem:[#allocation8 + $0x24] sm:$0xf]
        %v1364 = vld [vmem:[#allocation8 + $0x28] sm:$0xf]
        %v1365 = vld [vmem:[#allocation8 + $0x2c] sm:$0xf]
        %v1366 = vld [vmem:[#allocation8 + $0x30] sm:$0xf]
        %v1367 = vld [vmem:[#allocation8 + $0x34] sm:$0xf]
        %v1368 = vld [vmem:[#allocation8 + $0x38] sm:$0xf]
        %v1369 = vld [vmem:[#allocation8 + $0x3c] sm:$0xf]
        %v1370 = vld [vmem:[%s890] sm:$0xf]
        %v1371 = vld [vmem:[%s890 + $0x8] sm:$0xf]
        %v1372 = vld [vmem:[%s890 + $0x10] sm:$0xf]
        %v1373 = vld [vmem:[%s890 + $0x18] sm:$0xf]
        %v1374 = vld [vmem:[%s890 + $0x20] sm:$0xf]
        %v1375 = vld [vmem:[%s890 + $0x28] sm:$0xf]
        %v1376 = vld [vmem:[%s890 + $0x30] sm:$0xf]
        %v1377 = vld [vmem:[%s890 + $0x38] sm:$0xf]
        %s1378 = scalar_lea.vmem [#allocation8], 64
        %v1379 = vld [vmem:[%s1378] sm:$0xf]
        %v1380 = vld [vmem:[%s1378 + $0x4] sm:$0xf]
        %v1381 = vld [vmem:[%s1378 + $0x8] sm:$0xf]
        %v1382 = vld [vmem:[%s1378 + $0xc] sm:$0xf]
        %v1383 = vld [vmem:[%s1378 + $0x10] sm:$0xf]
        %v1384 = vld [vmem:[%s1378 + $0x14] sm:$0xf]
        %v1385 = vld [vmem:[%s1378 + $0x18] sm:$0xf]
        %v1386 = vld [vmem:[%s1378 + $0x1c] sm:$0xf]
        %v1387 = vld [vmem:[%s1378 + $0x20] sm:$0xf]
        %v1388 = vld [vmem:[%s1378 + $0x24] sm:$0xf]
        %v1389 = vld [vmem:[%s1378 + $0x28] sm:$0xf]
        %v1390 = vld [vmem:[%s1378 + $0x2c] sm:$0xf]
        %v1391 = vld [vmem:[%s1378 + $0x30] sm:$0xf]
        %v1392 = vld [vmem:[%s1378 + $0x34] sm:$0xf]
        %v1393 = vld [vmem:[%s1378 + $0x38] sm:$0xf]
        %v1394 = vld [vmem:[%s1378 + $0x3c] sm:$0xf]
        %v1403 = vunpack.c.l.b16 %v1370
        %v1404 = vunpack.c.l.b16 %v1371
        %v1405 = vunpack.c.l.b16 %v1372
        %v1406 = vunpack.c.l.b16 %v1373
        %v1407 = vunpack.c.l.b16 %v1374
        %v1408 = vunpack.c.l.b16 %v1375
        %v1409 = vunpack.c.l.b16 %v1376
        %v1410 = vunpack.c.l.b16 %v1377
        %v1411 = vpack.c.b16 %v1404, %v1403
        %v1412 = vpack.c.b16 %v1406, %v1405
        %v1413 = vpack.c.b16 %v1408, %v1407
        %v1414 = vpack.c.b16 %v1410, %v1409
        %v1435 = vunpack.c.l.b16 %v1379
        %v1436 = vunpack.c.l.b16 %v1380
        %v1437 = vunpack.c.l.b16 %v1381
        %v1438 = vunpack.c.l.b16 %v1382
        %v1439 = vunpack.c.l.b16 %v1383
        %v1440 = vunpack.c.l.b16 %v1384
        %v1441 = vunpack.c.l.b16 %v1385
        %v1442 = vunpack.c.l.b16 %v1386
        %v1443 = vunpack.c.l.b16 %v1387
        %v1444 = vunpack.c.l.b16 %v1388
        %v1445 = vunpack.c.l.b16 %v1389
        %v1446 = vunpack.c.l.b16 %v1390
        %v1447 = vunpack.c.l.b16 %v1391
        %v1448 = vunpack.c.l.b16 %v1392
        %v1449 = vunpack.c.l.b16 %v1393
        %v1450 = vunpack.c.l.b16 %v1394
        %v1451 = vpack.c.b16 %v1436, %v1435
        %v1452 = vpack.c.b16 %v1438, %v1437
        %v1453 = vpack.c.b16 %v1440, %v1439
        %v1454 = vpack.c.b16 %v1442, %v1441
        %v1455 = vpack.c.b16 %v1444, %v1443
        %v1456 = vpack.c.b16 %v1446, %v1445
        %v1457 = vpack.c.b16 %v1448, %v1447
        %v1458 = vpack.c.b16 %v1450, %v1449
        %1467 = vmatpush.bf16.msra.mxu0 %v1458
        %1468 = vmatpush.bf16.msra.mxu0 %v1457
        %1469 = vmatpush.bf16.msra.mxu0 %v1456
        %1470 = vmatpush.bf16.msra.mxu0 %v1455
        %1471 = vmatpush.bf16.msra.mxu0 %v1454
        %1472 = vmatpush.bf16.msra.mxu0 %v1453
        %1473 = vmatpush.bf16.msra.mxu0 %v1452
        %1474 = vmatpush.bf16.msra.mxu0 %v1451
        %1475 = vmatmul.bf16.gmra.mxu0 %v1411
        %v1476 = vpop.f32.mrf.mxu0
        %v1477 = vadd.f32 0.0, %v1476
        %v1478 = vpop.f32.mrf.mxu0
        %v1479 = vadd.f32 0.0, %v1478
        %1480 = vmatmul.bf16.gmra.mxu0 %v1412
        %v1481 = vpop.f32.mrf.mxu0
        %v1482 = vadd.f32 0.0, %v1481
        %v1483 = vpop.f32.mrf.mxu0
        %v1484 = vadd.f32 0.0, %v1483
        %1485 = vmatmul.bf16.gmra.mxu0 %v1413
        %v1486 = vpop.f32.mrf.mxu0
        %v1487 = vadd.f32 0.0, %v1486
        %v1488 = vpop.f32.mrf.mxu0
        %v1489 = vadd.f32 0.0, %v1488
        %1490 = vmatmul.bf16.gmra.mxu0 %v1414
        %v1491 = vpop.f32.mrf.mxu0
        %v1492 = vadd.f32 0.0, %v1491
        %v1493 = vpop.f32.mrf.mxu0
        %v1494 = vadd.f32 0.0, %v1493
        %1495 = vdwg.mxu0
        %v1504 = vunpack.c.l.b16 %v1346
        %v1505 = vunpack.c.l.b16 %v1347
        %v1506 = vunpack.c.l.b16 %v1348
        %v1507 = vunpack.c.l.b16 %v1349
        %v1508 = vunpack.c.l.b16 %v1350
        %v1509 = vunpack.c.l.b16 %v1351
        %v1510 = vunpack.c.l.b16 %v1352
        %v1511 = vunpack.c.l.b16 %v1353
        %v1512 = vpack.c.b16 %v1505, %v1504
        %v1513 = vpack.c.b16 %v1507, %v1506
        %v1514 = vpack.c.b16 %v1509, %v1508
        %v1515 = vpack.c.b16 %v1511, %v1510
        %v1536 = vunpack.c.l.b16 %v1354
        %v1537 = vunpack.c.l.b16 %v1355
        %v1538 = vunpack.c.l.b16 %v1356
        %v1539 = vunpack.c.l.b16 %v1357
        %v1540 = vunpack.c.l.b16 %v1358
        %v1541 = vunpack.c.l.b16 %v1359
        %v1542 = vunpack.c.l.b16 %v1360
        %v1543 = vunpack.c.l.b16 %v1361
        %v1544 = vunpack.c.l.b16 %v1362
        %v1545 = vunpack.c.l.b16 %v1363
        %v1546 = vunpack.c.l.b16 %v1364
        %v1547 = vunpack.c.l.b16 %v1365
        %v1548 = vunpack.c.l.b16 %v1366
        %v1549 = vunpack.c.l.b16 %v1367
        %v1550 = vunpack.c.l.b16 %v1368
        %v1551 = vunpack.c.l.b16 %v1369
        %v1552 = vpack.c.b16 %v1537, %v1536
        %v1553 = vpack.c.b16 %v1539, %v1538
        %v1554 = vpack.c.b16 %v1541, %v1540
        %v1555 = vpack.c.b16 %v1543, %v1542
        %v1556 = vpack.c.b16 %v1545, %v1544
        %v1557 = vpack.c.b16 %v1547, %v1546
        %v1558 = vpack.c.b16 %v1549, %v1548
        %v1559 = vpack.c.b16 %v1551, %v1550
        %1568 = vmatpush.bf16.msra.mxu0 %v1559
        %1569 = vmatpush.bf16.msra.mxu0 %v1558
        %1570 = vmatpush.bf16.msra.mxu0 %v1557
        %1571 = vmatpush.bf16.msra.mxu0 %v1556
        %1572 = vmatpush.bf16.msra.mxu0 %v1555
        %1573 = vmatpush.bf16.msra.mxu0 %v1554
        %1574 = vmatpush.bf16.msra.mxu0 %v1553
        %1575 = vmatpush.bf16.msra.mxu0 %v1552
        %1576 = vmatmul.bf16.gmra.mxu0 %v1512
        %v1577 = vpop.f32.mrf.mxu0
        %v1578 = vadd.f32 %v1477, %v1577
        %v1579 = vpop.f32.mrf.mxu0
        %v1580 = vadd.f32 %v1479, %v1579
        %1581 = vmatmul.bf16.gmra.mxu0 %v1513
        %v1582 = vpop.f32.mrf.mxu0
        %v1583 = vadd.f32 %v1482, %v1582
        %v1584 = vpop.f32.mrf.mxu0
        %v1585 = vadd.f32 %v1484, %v1584
        %1586 = vmatmul.bf16.gmra.mxu0 %v1514
        %v1587 = vpop.f32.mrf.mxu0
        %v1588 = vadd.f32 %v1487, %v1587
        %v1589 = vpop.f32.mrf.mxu0
        %v1590 = vadd.f32 %v1489, %v1589
        %1591 = vmatmul.bf16.gmra.mxu0 %v1515
        %v1592 = vpop.f32.mrf.mxu0
        %v1593 = vadd.f32 %v1492, %v1592
        %v1594 = vpop.f32.mrf.mxu0
        %v1595 = vadd.f32 %v1494, %v1594
        %1596 = vdwg.mxu0
        %v1597 = vld [vmem:[#allocation2] sm:$0xf]
        %v1598 = vld [vmem:[#allocation2 + $0x4] sm:$0x1]
        %v1599 = vld [vmem:[#allocation2 + $0x8] sm:$0xf]
        %v1600 = vld [vmem:[#allocation2 + $0xc] sm:$0x1]
        %v1601 = vld [vmem:[#allocation2 + $0x10] sm:$0xf]
        %v1602 = vld [vmem:[#allocation2 + $0x14] sm:$0x1]
        %v1603 = vld [vmem:[#allocation2 + $0x18] sm:$0xf]
        %v1604 = vld [vmem:[#allocation2 + $0x1c] sm:$0x1]
        %v1605 = vld [vmem:[#allocation2 + $0x20] sm:$0xf]
        %v1606 = vld [vmem:[#allocation2 + $0x24] sm:$0x1]
        %v1607 = vld [vmem:[#allocation2 + $0x28] sm:$0xf]
        %v1608 = vld [vmem:[#allocation2 + $0x2c] sm:$0x1]
        %v1609 = vld [vmem:[#allocation2 + $0x30] sm:$0xf]
        %v1610 = vld [vmem:[#allocation2 + $0x34] sm:$0x1]
        %v1611 = vld [vmem:[#allocation2 + $0x38] sm:$0xf]
        %v1612 = vld [vmem:[#allocation2 + $0x3c] sm:$0x1]
        %vm1613 = vsmask.f32 3328
        %vm1614 = vsmask.f32 7440
        %vm1615 = vmor %vm1613, %vm1614
        %v1617 = vshrl.u32 %v1597, 16
        %v1619 = vrot.slane %v1617, 4
        %v1620 = vshll.u32 %v1597, 16
        %v1622 = vrot.slane %v1620, 5
        %v1623 = vor.u32 %v1619, %v1622
        %v1624 = vrot.slane %v1623, 4
        %v1626 = vshll.u32 %v1598, 16
        %v1628 = vrot.slane %v1626, 5
        %v1629 = vsel %vm1615, %v1624, %v1628
        %v1631 = vshrl.u32 %v1599, 16
        %v1633 = vrot.slane %v1631, 4
        %v1634 = vshll.u32 %v1599, 16
        %v1636 = vrot.slane %v1634, 5
        %v1637 = vor.u32 %v1633, %v1636
        %v1638 = vrot.slane %v1637, 4
        %v1640 = vshll.u32 %v1600, 16
        %v1642 = vrot.slane %v1640, 5
        %v1643 = vsel %vm1615, %v1638, %v1642
        %v1645 = vshrl.u32 %v1601, 16
        %v1647 = vrot.slane %v1645, 4
        %v1648 = vshll.u32 %v1601, 16
        %v1650 = vrot.slane %v1648, 5
        %v1651 = vor.u32 %v1647, %v1650
        %v1652 = vrot.slane %v1651, 4
        %v1654 = vshll.u32 %v1602, 16
        %v1656 = vrot.slane %v1654, 5
        %v1657 = vsel %vm1615, %v1652, %v1656
        %v1659 = vshrl.u32 %v1603, 16
        %v1661 = vrot.slane %v1659, 4
        %v1662 = vshll.u32 %v1603, 16
        %v1664 = vrot.slane %v1662, 5
        %v1665 = vor.u32 %v1661, %v1664
        %v1666 = vrot.slane %v1665, 4
        %v1668 = vshll.u32 %v1604, 16
        %v1670 = vrot.slane %v1668, 5
        %v1671 = vsel %vm1615, %v1666, %v1670
        %v1673 = vshrl.u32 %v1605, 16
        %v1675 = vrot.slane %v1673, 4
        %v1676 = vshll.u32 %v1605, 16
        %v1678 = vrot.slane %v1676, 5
        %v1679 = vor.u32 %v1675, %v1678
        %v1680 = vrot.slane %v1679, 4
        %v1682 = vshll.u32 %v1606, 16
        %v1684 = vrot.slane %v1682, 5
        %v1685 = vsel %vm1615, %v1680, %v1684
        %v1687 = vshrl.u32 %v1607, 16
        %v1689 = vrot.slane %v1687, 4
        %v1690 = vshll.u32 %v1607, 16
        %v1692 = vrot.slane %v1690, 5
        %v1693 = vor.u32 %v1689, %v1692
        %v1694 = vrot.slane %v1693, 4
        %v1696 = vshll.u32 %v1608, 16
        %v1698 = vrot.slane %v1696, 5
        %v1699 = vsel %vm1615, %v1694, %v1698
        %v1701 = vshrl.u32 %v1609, 16
        %v1703 = vrot.slane %v1701, 4
        %v1704 = vshll.u32 %v1609, 16
        %v1706 = vrot.slane %v1704, 5
        %v1707 = vor.u32 %v1703, %v1706
        %v1708 = vrot.slane %v1707, 4
        %v1710 = vshll.u32 %v1610, 16
        %v1712 = vrot.slane %v1710, 5
        %v1713 = vsel %vm1615, %v1708, %v1712
        %v1715 = vshrl.u32 %v1611, 16
        %v1717 = vrot.slane %v1715, 4
        %v1718 = vshll.u32 %v1611, 16
        %v1720 = vrot.slane %v1718, 5
        %v1721 = vor.u32 %v1717, %v1720
        %v1722 = vrot.slane %v1721, 4
        %v1724 = vshll.u32 %v1612, 16
        %v1726 = vrot.slane %v1724, 5
        %v1727 = vsel %vm1615, %v1722, %v1726
        %s1728 = scalar_lea.vmem [#allocation8], 128
        %v1729 = vld [vmem:[%s1728] sm:$0xf]
        %v1730 = vld [vmem:[%s1728 + $0x4] sm:$0xf]
        %v1731 = vld [vmem:[%s1728 + $0x8] sm:$0xf]
        %v1732 = vld [vmem:[%s1728 + $0xc] sm:$0xf]
        %v1733 = vld [vmem:[%s1728 + $0x10] sm:$0xf]
        %v1734 = vld [vmem:[%s1728 + $0x14] sm:$0xf]
        %v1735 = vld [vmem:[%s1728 + $0x18] sm:$0xf]
        %v1736 = vld [vmem:[%s1728 + $0x1c] sm:$0xf]
        %v1737 = vld [vmem:[%s1728 + $0x20] sm:$0xf]
        %v1738 = vld [vmem:[%s1728 + $0x24] sm:$0xf]
        %v1739 = vld [vmem:[%s1728 + $0x28] sm:$0xf]
        %v1740 = vld [vmem:[%s1728 + $0x2c] sm:$0xf]
        %v1741 = vld [vmem:[%s1728 + $0x30] sm:$0xf]
        %v1742 = vld [vmem:[%s1728 + $0x34] sm:$0xf]
        %v1743 = vld [vmem:[%s1728 + $0x38] sm:$0xf]
        %v1744 = vld [vmem:[%s1728 + $0x3c] sm:$0xf]
        %v1745 = vunpack.c.l.b16 %v1629
        %v1746 = vunpack.c.l.b16 %v1643
        %v1747 = vunpack.c.l.b16 %v1657
        %v1748 = vunpack.c.l.b16 %v1671
        %v1749 = vunpack.c.l.b16 %v1685
        %v1750 = vunpack.c.l.b16 %v1699
        %v1751 = vunpack.c.l.b16 %v1713
        %v1752 = vunpack.c.l.b16 %v1727
        %v1753 = vpack.c.b16 %v1746, %v1745
        %v1754 = vpack.c.b16 %v1748, %v1747
        %v1755 = vpack.c.b16 %v1750, %v1749
        %v1756 = vpack.c.b16 %v1752, %v1751
        %v1777 = vunpack.c.l.b16 %v1729
        %v1778 = vunpack.c.l.b16 %v1730
        %v1779 = vunpack.c.l.b16 %v1731
        %v1780 = vunpack.c.l.b16 %v1732
        %v1781 = vunpack.c.l.b16 %v1733
        %v1782 = vunpack.c.l.b16 %v1734
        %v1783 = vunpack.c.l.b16 %v1735
        %v1784 = vunpack.c.l.b16 %v1736
        %v1785 = vunpack.c.l.b16 %v1737
        %v1786 = vunpack.c.l.b16 %v1738
        %v1787 = vunpack.c.l.b16 %v1739
        %v1788 = vunpack.c.l.b16 %v1740
        %v1789 = vunpack.c.l.b16 %v1741
        %v1790 = vunpack.c.l.b16 %v1742
        %v1791 = vunpack.c.l.b16 %v1743
        %v1792 = vunpack.c.l.b16 %v1744
        %v1793 = vpack.c.b16 %v1778, %v1777
        %v1794 = vpack.c.b16 %v1780, %v1779
        %v1795 = vpack.c.b16 %v1782, %v1781
        %v1796 = vpack.c.b16 %v1784, %v1783
        %v1797 = vpack.c.b16 %v1786, %v1785
        %v1798 = vpack.c.b16 %v1788, %v1787
        %v1799 = vpack.c.b16 %v1790, %v1789
        %v1800 = vpack.c.b16 %v1792, %v1791
        %1809 = vmatpush.bf16.msra.mxu0 %v1800
        %1810 = vmatpush.bf16.msra.mxu0 %v1799
        %1811 = vmatpush.bf16.msra.mxu0 %v1798
        %1812 = vmatpush.bf16.msra.mxu0 %v1797
        %1813 = vmatpush.bf16.msra.mxu0 %v1796
        %1814 = vmatpush.bf16.msra.mxu0 %v1795
        %1815 = vmatpush.bf16.msra.mxu0 %v1794
        %1816 = vmatpush.bf16.msra.mxu0 %v1793
        %1817 = vmatmul.bf16.gmra.mxu0 %v1753
        %v1818 = vpop.f32.mrf.mxu0
        %v1819 = vadd.f32 0.0, %v1818
        %v1820 = vpop.f32.mrf.mxu0
        %v1821 = vadd.f32 0.0, %v1820
        %1822 = vmatmul.bf16.gmra.mxu0 %v1754
        %v1823 = vpop.f32.mrf.mxu0
        %v1824 = vadd.f32 0.0, %v1823
        %v1825 = vpop.f32.mrf.mxu0
        %v1826 = vadd.f32 0.0, %v1825
        %1827 = vmatmul.bf16.gmra.mxu0 %v1755
        %v1828 = vpop.f32.mrf.mxu0
        %v1829 = vadd.f32 0.0, %v1828
        %v1830 = vpop.f32.mrf.mxu0
        %v1831 = vadd.f32 0.0, %v1830
        %1832 = vmatmul.bf16.gmra.mxu0 %v1756
        %v1833 = vpop.f32.mrf.mxu0
        %v1834 = vadd.f32 0.0, %v1833
        %v1835 = vpop.f32.mrf.mxu0
        %v1836 = vadd.f32 0.0, %v1835
        %1837 = vdwg.mxu0
        %v1838 = vadd.f32 %v1578, %v1819
        %v1839 = vadd.f32 %v1580, %v1821
        %v1840 = vadd.f32 %v1583, %v1824
        %v1841 = vadd.f32 %v1585, %v1826
        %v1842 = vadd.f32 %v1588, %v1829
        %v1843 = vadd.f32 %v1590, %v1831
        %v1844 = vadd.f32 %v1593, %v1834
        %v1845 = vadd.f32 %v1595, %v1836
        %v1846 = vld [vmem:[%s1083] sm:$0xf]
        %v1847 = vld [vmem:[%s1083 + $0x8] sm:$0xf]
        %v1848 = vld [vmem:[%s1083 + $0x10] sm:$0xf]
        %v1849 = vld [vmem:[%s1083 + $0x18] sm:$0xf]
        %v1850 = vld [vmem:[%s1083 + $0x20] sm:$0xf]
        %v1851 = vld [vmem:[%s1083 + $0x28] sm:$0xf]
        %v1852 = vld [vmem:[%s1083 + $0x30] sm:$0xf]
        %v1853 = vld [vmem:[%s1083 + $0x38] sm:$0xf]
        %s1854 = scalar_lea.vmem [#allocation8], 192
        %v1855 = vld [vmem:[%s1854] sm:$0xf]
        %v1856 = vld [vmem:[%s1854 + $0x4] sm:$0xf]
        %v1857 = vld [vmem:[%s1854 + $0x8] sm:$0xf]
        %v1858 = vld [vmem:[%s1854 + $0xc] sm:$0xf]
        %v1859 = vld [vmem:[%s1854 + $0x10] sm:$0xf]
        %v1860 = vld [vmem:[%s1854 + $0x14] sm:$0xf]
        %v1861 = vld [vmem:[%s1854 + $0x18] sm:$0xf]
        %v1862 = vld [vmem:[%s1854 + $0x1c] sm:$0xf]
        %v1863 = vld [vmem:[%s1854 + $0x20] sm:$0xf]
        %v1864 = vld [vmem:[%s1854 + $0x24] sm:$0xf]
        %v1865 = vld [vmem:[%s1854 + $0x28] sm:$0xf]
        %v1866 = vld [vmem:[%s1854 + $0x2c] sm:$0xf]
        %v1867 = vld [vmem:[%s1854 + $0x30] sm:$0xf]
        %v1868 = vld [vmem:[%s1854 + $0x34] sm:$0xf]
        %v1869 = vld [vmem:[%s1854 + $0x38] sm:$0xf]
        %v1870 = vld [vmem:[%s1854 + $0x3c] sm:$0xf]
        %v1879 = vunpack.c.l.b16 %v1846
        %v1880 = vunpack.c.l.b16 %v1847
        %v1881 = vunpack.c.l.b16 %v1848
        %v1882 = vunpack.c.l.b16 %v1849
        %v1883 = vunpack.c.l.b16 %v1850
        %v1884 = vunpack.c.l.b16 %v1851
        %v1885 = vunpack.c.l.b16 %v1852
        %v1886 = vunpack.c.l.b16 %v1853
        %v1887 = vpack.c.b16 %v1880, %v1879
        %v1888 = vpack.c.b16 %v1882, %v1881
        %v1889 = vpack.c.b16 %v1884, %v1883
        %v1890 = vpack.c.b16 %v1886, %v1885
        %v1911 = vunpack.c.l.b16 %v1855
        %v1912 = vunpack.c.l.b16 %v1856
        %v1913 = vunpack.c.l.b16 %v1857
        %v1914 = vunpack.c.l.b16 %v1858
        %v1915 = vunpack.c.l.b16 %v1859
        %v1916 = vunpack.c.l.b16 %v1860
        %v1917 = vunpack.c.l.b16 %v1861
        %v1918 = vunpack.c.l.b16 %v1862
        %v1919 = vunpack.c.l.b16 %v1863
        %v1920 = vunpack.c.l.b16 %v1864
        %v1921 = vunpack.c.l.b16 %v1865
        %v1922 = vunpack.c.l.b16 %v1866
        %v1923 = vunpack.c.l.b16 %v1867
        %v1924 = vunpack.c.l.b16 %v1868
        %v1925 = vunpack.c.l.b16 %v1869
        %v1926 = vunpack.c.l.b16 %v1870
        %v1927 = vpack.c.b16 %v1912, %v1911
        %v1928 = vpack.c.b16 %v1914, %v1913
        %v1929 = vpack.c.b16 %v1916, %v1915
        %v1930 = vpack.c.b16 %v1918, %v1917
        %v1931 = vpack.c.b16 %v1920, %v1919
        %v1932 = vpack.c.b16 %v1922, %v1921
        %v1933 = vpack.c.b16 %v1924, %v1923
        %v1934 = vpack.c.b16 %v1926, %v1925
        %1943 = vmatpush.bf16.msra.mxu0 %v1934
        %1944 = vmatpush.bf16.msra.mxu0 %v1933
        %1945 = vmatpush.bf16.msra.mxu0 %v1932
        %1946 = vmatpush.bf16.msra.mxu0 %v1931
        %1947 = vmatpush.bf16.msra.mxu0 %v1930
        %1948 = vmatpush.bf16.msra.mxu0 %v1929
        %1949 = vmatpush.bf16.msra.mxu0 %v1928
        %1950 = vmatpush.bf16.msra.mxu0 %v1927
        %1951 = vmatmul.bf16.gmra.mxu0 %v1887
        %v1952 = vpop.f32.mrf.mxu0
        %v1953 = vadd.f32 0.0, %v1952
        %v1954 = vpop.f32.mrf.mxu0
        %v1955 = vadd.f32 0.0, %v1954
        %1956 = vmatmul.bf16.gmra.mxu0 %v1888
        %v1957 = vpop.f32.mrf.mxu0
        %v1958 = vadd.f32 0.0, %v1957
        %v1959 = vpop.f32.mrf.mxu0
        %v1960 = vadd.f32 0.0, %v1959
        %1961 = vmatmul.bf16.gmra.mxu0 %v1889
        %v1962 = vpop.f32.mrf.mxu0
        %v1963 = vadd.f32 0.0, %v1962
        %v1964 = vpop.f32.mrf.mxu0
        %v1965 = vadd.f32 0.0, %v1964
        %1966 = vmatmul.bf16.gmra.mxu0 %v1890
        %v1967 = vpop.f32.mrf.mxu0
        %v1968 = vadd.f32 0.0, %v1967
        %v1969 = vpop.f32.mrf.mxu0
        %v1970 = vadd.f32 0.0, %v1969
        %1971 = vdwg.mxu0
        %v1972 = vadd.f32 %v1838, %v1953
        %v1973 = vadd.f32 %v1839, %v1955
        %v1974 = vadd.f32 %v1840, %v1958
        %v1975 = vadd.f32 %v1841, %v1960
        %v1976 = vadd.f32 %v1842, %v1963
        %v1977 = vadd.f32 %v1843, %v1965
        %v1978 = vadd.f32 %v1844, %v1968
        %v1979 = vadd.f32 %v1845, %v1970
        %v1980 = vld [vmem:[%s1316] sm:$0xf]
        %v1981 = vld [vmem:[%s1316 + $0x8] sm:$0xf]
        %v1982 = vld [vmem:[%s1316 + $0x10] sm:$0xf]
        %v1983 = vld [vmem:[%s1316 + $0x18] sm:$0xf]
        %v1984 = vld [vmem:[%s1316 + $0x20] sm:$0xf]
        %v1985 = vld [vmem:[%s1316 + $0x28] sm:$0xf]
        %v1986 = vld [vmem:[%s1316 + $0x30] sm:$0xf]
        %v1987 = vld [vmem:[%s1316 + $0x38] sm:$0xf]
        %s1988 = scalar_lea.vmem [#allocation8], 256
        %v1989 = vld [vmem:[%s1988] sm:$0xf]
        %v1990 = vld [vmem:[%s1988 + $0x4] sm:$0xf]
        %v1991 = vld [vmem:[%s1988 + $0x8] sm:$0xf]
        %v1992 = vld [vmem:[%s1988 + $0xc] sm:$0xf]
        %v1993 = vld [vmem:[%s1988 + $0x10] sm:$0xf]
        %v1994 = vld [vmem:[%s1988 + $0x14] sm:$0xf]
        %v1995 = vld [vmem:[%s1988 + $0x18] sm:$0xf]
        %v1996 = vld [vmem:[%s1988 + $0x1c] sm:$0xf]
        %v1997 = vld [vmem:[%s1988 + $0x20] sm:$0xf]
        %v1998 = vld [vmem:[%s1988 + $0x24] sm:$0xf]
        %v1999 = vld [vmem:[%s1988 + $0x28] sm:$0xf]
        %v2000 = vld [vmem:[%s1988 + $0x2c] sm:$0xf]
        %v2001 = vld [vmem:[%s1988 + $0x30] sm:$0xf]
        %v2002 = vld [vmem:[%s1988 + $0x34] sm:$0xf]
        %v2003 = vld [vmem:[%s1988 + $0x38] sm:$0xf]
        %v2004 = vld [vmem:[%s1988 + $0x3c] sm:$0xf]
        %v2013 = vunpack.c.l.b16 %v1980
        %v2014 = vunpack.c.l.b16 %v1981
        %v2015 = vunpack.c.l.b16 %v1982
        %v2016 = vunpack.c.l.b16 %v1983
        %v2017 = vunpack.c.l.b16 %v1984
        %v2018 = vunpack.c.l.b16 %v1985
        %v2019 = vunpack.c.l.b16 %v1986
        %v2020 = vunpack.c.l.b16 %v1987
        %v2021 = vpack.c.b16 %v2014, %v2013
        %v2022 = vpack.c.b16 %v2016, %v2015
        %v2023 = vpack.c.b16 %v2018, %v2017
        %v2024 = vpack.c.b16 %v2020, %v2019
        %v2045 = vunpack.c.l.b16 %v1989
        %v2046 = vunpack.c.l.b16 %v1990
        %v2047 = vunpack.c.l.b16 %v1991
        %v2048 = vunpack.c.l.b16 %v1992
        %v2049 = vunpack.c.l.b16 %v1993
        %v2050 = vunpack.c.l.b16 %v1994
        %v2051 = vunpack.c.l.b16 %v1995
        %v2052 = vunpack.c.l.b16 %v1996
        %v2053 = vunpack.c.l.b16 %v1997
        %v2054 = vunpack.c.l.b16 %v1998
        %v2055 = vunpack.c.l.b16 %v1999
        %v2056 = vunpack.c.l.b16 %v2000
        %v2057 = vunpack.c.l.b16 %v2001
        %v2058 = vunpack.c.l.b16 %v2002
        %v2059 = vunpack.c.l.b16 %v2003
        %v2060 = vunpack.c.l.b16 %v2004
        %v2061 = vpack.c.b16 %v2046, %v2045
        %v2062 = vpack.c.b16 %v2048, %v2047
        %v2063 = vpack.c.b16 %v2050, %v2049
        %v2064 = vpack.c.b16 %v2052, %v2051
        %v2065 = vpack.c.b16 %v2054, %v2053
        %v2066 = vpack.c.b16 %v2056, %v2055
        %v2067 = vpack.c.b16 %v2058, %v2057
        %v2068 = vpack.c.b16 %v2060, %v2059
        %2077 = vmatpush.bf16.msra.mxu0 %v2068
        %2078 = vmatpush.bf16.msra.mxu0 %v2067
        %2079 = vmatpush.bf16.msra.mxu0 %v2066
        %2080 = vmatpush.bf16.msra.mxu0 %v2065
        %2081 = vmatpush.bf16.msra.mxu0 %v2064
        %2082 = vmatpush.bf16.msra.mxu0 %v2063
        %2083 = vmatpush.bf16.msra.mxu0 %v2062
        %2084 = vmatpush.bf16.msra.mxu0 %v2061
        %2085 = vmatmul.bf16.gmra.mxu0 %v2021
        %v2086 = vpop.f32.mrf.mxu0
        %v2087 = vadd.f32 0.0, %v2086
        %v2088 = vpop.f32.mrf.mxu0
        %v2089 = vadd.f32 0.0, %v2088
        %2090 = vmatmul.bf16.gmra.mxu0 %v2022
        %v2091 = vpop.f32.mrf.mxu0
        %v2092 = vadd.f32 0.0, %v2091
        %v2093 = vpop.f32.mrf.mxu0
        %v2094 = vadd.f32 0.0, %v2093
        %2095 = vmatmul.bf16.gmra.mxu0 %v2023
        %v2096 = vpop.f32.mrf.mxu0
        %v2097 = vadd.f32 0.0, %v2096
        %v2098 = vpop.f32.mrf.mxu0
        %v2099 = vadd.f32 0.0, %v2098
        %2100 = vmatmul.bf16.gmra.mxu0 %v2024
        %v2101 = vpop.f32.mrf.mxu0
        %v2102 = vadd.f32 0.0, %v2101
        %v2103 = vpop.f32.mrf.mxu0
        %v2104 = vadd.f32 0.0, %v2103
        %2105 = vdwg.mxu0
        %v2106 = vadd.f32 %v1972, %v2087
        %v2107 = vadd.f32 %v1973, %v2089
        %v2108 = vadd.f32 %v1974, %v2092
        %v2109 = vadd.f32 %v1975, %v2094
        %v2110 = vadd.f32 %v1976, %v2097
        %v2111 = vadd.f32 %v1977, %v2099
        %v2112 = vadd.f32 %v1978, %v2102
        %v2113 = vadd.f32 %v1979, %v2104
        %v2114 = vld [vmem:[%s1083] sm:$0xf]
        %v2115 = vld [vmem:[%s1083 + $0x4] sm:$0x1]
        %v2116 = vld [vmem:[%s1083 + $0x8] sm:$0xf]
        %v2117 = vld [vmem:[%s1083 + $0xc] sm:$0x1]
        %v2118 = vld [vmem:[%s1083 + $0x10] sm:$0xf]
        %v2119 = vld [vmem:[%s1083 + $0x14] sm:$0x1]
        %v2120 = vld [vmem:[%s1083 + $0x18] sm:$0xf]
        %v2121 = vld [vmem:[%s1083 + $0x1c] sm:$0x1]
        %v2122 = vld [vmem:[%s1083 + $0x20] sm:$0xf]
        %v2123 = vld [vmem:[%s1083 + $0x24] sm:$0x1]
        %v2124 = vld [vmem:[%s1083 + $0x28] sm:$0xf]
        %v2125 = vld [vmem:[%s1083 + $0x2c] sm:$0x1]
        %v2126 = vld [vmem:[%s1083 + $0x30] sm:$0xf]
        %v2127 = vld [vmem:[%s1083 + $0x34] sm:$0x1]
        %v2128 = vld [vmem:[%s1083 + $0x38] sm:$0xf]
        %v2129 = vld [vmem:[%s1083 + $0x3c] sm:$0x1]
        %v2131 = vshrl.u32 %v2114, 16
        %v2133 = vrot.slane %v2131, 4
        %v2134 = vshll.u32 %v2114, 16
        %v2136 = vrot.slane %v2134, 5
        %v2137 = vor.u32 %v2133, %v2136
        %v2138 = vrot.slane %v2137, 4
        %v2140 = vshll.u32 %v2115, 16
        %v2142 = vrot.slane %v2140, 5
        %v2143 = vsel %vm1615, %v2138, %v2142
        %v2145 = vshrl.u32 %v2116, 16
        %v2147 = vrot.slane %v2145, 4
        %v2148 = vshll.u32 %v2116, 16
        %v2150 = vrot.slane %v2148, 5
        %v2151 = vor.u32 %v2147, %v2150
        %v2152 = vrot.slane %v2151, 4
        %v2154 = vshll.u32 %v2117, 16
        %v2156 = vrot.slane %v2154, 5
        %v2157 = vsel %vm1615, %v2152, %v2156
        %v2159 = vshrl.u32 %v2118, 16
        %v2161 = vrot.slane %v2159, 4
        %v2162 = vshll.u32 %v2118, 16
        %v2164 = vrot.slane %v2162, 5
        %v2165 = vor.u32 %v2161, %v2164
        %v2166 = vrot.slane %v2165, 4
        %v2168 = vshll.u32 %v2119, 16
        %v2170 = vrot.slane %v2168, 5
        %v2171 = vsel %vm1615, %v2166, %v2170
        %v2173 = vshrl.u32 %v2120, 16
        %v2175 = vrot.slane %v2173, 4
        %v2176 = vshll.u32 %v2120, 16
        %v2178 = vrot.slane %v2176, 5
        %v2179 = vor.u32 %v2175, %v2178
        %v2180 = vrot.slane %v2179, 4
        %v2182 = vshll.u32 %v2121, 16
        %v2184 = vrot.slane %v2182, 5
        %v2185 = vsel %vm1615, %v2180, %v2184
        %v2187 = vshrl.u32 %v2122, 16
        %v2189 = vrot.slane %v2187, 4
        %v2190 = vshll.u32 %v2122, 16
        %v2192 = vrot.slane %v2190, 5
        %v2193 = vor.u32 %v2189, %v2192
        %v2194 = vrot.slane %v2193, 4
        %v2196 = vshll.u32 %v2123, 16
        %v2198 = vrot.slane %v2196, 5
        %v2199 = vsel %vm1615, %v2194, %v2198
        %v2201 = vshrl.u32 %v2124, 16
        %v2203 = vrot.slane %v2201, 4
        %v2204 = vshll.u32 %v2124, 16
        %v2206 = vrot.slane %v2204, 5
        %v2207 = vor.u32 %v2203, %v2206
        %v2208 = vrot.slane %v2207, 4
        %v2210 = vshll.u32 %v2125, 16
        %v2212 = vrot.slane %v2210, 5
        %v2213 = vsel %vm1615, %v2208, %v2212
        %v2215 = vshrl.u32 %v2126, 16
        %v2217 = vrot.slane %v2215, 4
        %v2218 = vshll.u32 %v2126, 16
        %v2220 = vrot.slane %v2218, 5
        %v2221 = vor.u32 %v2217, %v2220
        %v2222 = vrot.slane %v2221, 4
        %v2224 = vshll.u32 %v2127, 16
        %v2226 = vrot.slane %v2224, 5
        %v2227 = vsel %vm1615, %v2222, %v2226
        %v2229 = vshrl.u32 %v2128, 16
        %v2231 = vrot.slane %v2229, 4
        %v2232 = vshll.u32 %v2128, 16
        %v2234 = vrot.slane %v2232, 5
        %v2235 = vor.u32 %v2231, %v2234
        %v2236 = vrot.slane %v2235, 4
        %v2238 = vshll.u32 %v2129, 16
        %v2240 = vrot.slane %v2238, 5
        %v2241 = vsel %vm1615, %v2236, %v2240
        %s2242 = scalar_lea.vmem [#allocation8], 320
        %v2243 = vld [vmem:[%s2242] sm:$0xf]
        %v2244 = vld [vmem:[%s2242 + $0x4] sm:$0xf]
        %v2245 = vld [vmem:[%s2242 + $0x8] sm:$0xf]
        %v2246 = vld [vmem:[%s2242 + $0xc] sm:$0xf]
        %v2247 = vld [vmem:[%s2242 + $0x10] sm:$0xf]
        %v2248 = vld [vmem:[%s2242 + $0x14] sm:$0xf]
        %v2249 = vld [vmem:[%s2242 + $0x18] sm:$0xf]
        %v2250 = vld [vmem:[%s2242 + $0x1c] sm:$0xf]
        %v2251 = vld [vmem:[%s2242 + $0x20] sm:$0xf]
        %v2252 = vld [vmem:[%s2242 + $0x24] sm:$0xf]
        %v2253 = vld [vmem:[%s2242 + $0x28] sm:$0xf]
        %v2254 = vld [vmem:[%s2242 + $0x2c] sm:$0xf]
        %v2255 = vld [vmem:[%s2242 + $0x30] sm:$0xf]
        %v2256 = vld [vmem:[%s2242 + $0x34] sm:$0xf]
        %v2257 = vld [vmem:[%s2242 + $0x38] sm:$0xf]
        %v2258 = vld [vmem:[%s2242 + $0x3c] sm:$0xf]
        %v2259 = vunpack.c.l.b16 %v2143
        %v2260 = vunpack.c.l.b16 %v2157
        %v2261 = vunpack.c.l.b16 %v2171
        %v2262 = vunpack.c.l.b16 %v2185
        %v2263 = vunpack.c.l.b16 %v2199
        %v2264 = vunpack.c.l.b16 %v2213
        %v2265 = vunpack.c.l.b16 %v2227
        %v2266 = vunpack.c.l.b16 %v2241
        %v2267 = vpack.c.b16 %v2260, %v2259
        %v2268 = vpack.c.b16 %v2262, %v2261
        %v2269 = vpack.c.b16 %v2264, %v2263
        %v2270 = vpack.c.b16 %v2266, %v2265
        %v2291 = vunpack.c.l.b16 %v2243
        %v2292 = vunpack.c.l.b16 %v2244
        %v2293 = vunpack.c.l.b16 %v2245
        %v2294 = vunpack.c.l.b16 %v2246
        %v2295 = vunpack.c.l.b16 %v2247
        %v2296 = vunpack.c.l.b16 %v2248
        %v2297 = vunpack.c.l.b16 %v2249
        %v2298 = vunpack.c.l.b16 %v2250
        %v2299 = vunpack.c.l.b16 %v2251
        %v2300 = vunpack.c.l.b16 %v2252
        %v2301 = vunpack.c.l.b16 %v2253
        %v2302 = vunpack.c.l.b16 %v2254
        %v2303 = vunpack.c.l.b16 %v2255
        %v2304 = vunpack.c.l.b16 %v2256
        %v2305 = vunpack.c.l.b16 %v2257
        %v2306 = vunpack.c.l.b16 %v2258
        %v2307 = vpack.c.b16 %v2292, %v2291
        %v2308 = vpack.c.b16 %v2294, %v2293
        %v2309 = vpack.c.b16 %v2296, %v2295
        %v2310 = vpack.c.b16 %v2298, %v2297
        %v2311 = vpack.c.b16 %v2300, %v2299
        %v2312 = vpack.c.b16 %v2302, %v2301
        %v2313 = vpack.c.b16 %v2304, %v2303
        %v2314 = vpack.c.b16 %v2306, %v2305
        %2323 = vmatpush.bf16.msra.mxu0 %v2314
        %2324 = vmatpush.bf16.msra.mxu0 %v2313
        %2325 = vmatpush.bf16.msra.mxu0 %v2312
        %2326 = vmatpush.bf16.msra.mxu0 %v2311
        %2327 = vmatpush.bf16.msra.mxu0 %v2310
        %2328 = vmatpush.bf16.msra.mxu0 %v2309
        %2329 = vmatpush.bf16.msra.mxu0 %v2308
        %2330 = vmatpush.bf16.msra.mxu0 %v2307
        %2331 = vmatmul.bf16.gmra.mxu0 %v2267
        %v2332 = vpop.f32.mrf.mxu0
        %v2333 = vadd.f32 0.0, %v2332
        %v2334 = vpop.f32.mrf.mxu0
        %v2335 = vadd.f32 0.0, %v2334
        %2336 = vmatmul.bf16.gmra.mxu0 %v2268
        %v2337 = vpop.f32.mrf.mxu0
        %v2338 = vadd.f32 0.0, %v2337
        %v2339 = vpop.f32.mrf.mxu0
        %v2340 = vadd.f32 0.0, %v2339
        %2341 = vmatmul.bf16.gmra.mxu0 %v2269
        %v2342 = vpop.f32.mrf.mxu0
        %v2343 = vadd.f32 0.0, %v2342
        %v2344 = vpop.f32.mrf.mxu0
        %v2345 = vadd.f32 0.0, %v2344
        %2346 = vmatmul.bf16.gmra.mxu0 %v2270
        %v2347 = vpop.f32.mrf.mxu0
        %v2348 = vadd.f32 0.0, %v2347
        %v2349 = vpop.f32.mrf.mxu0
        %v2350 = vadd.f32 0.0, %v2349
        %2351 = vdwg.mxu0
        %v2352 = vadd.f32 %v2106, %v2333
        %v2353 = vadd.f32 %v2107, %v2335
        %v2354 = vadd.f32 %v2108, %v2338
        %v2355 = vadd.f32 %v2109, %v2340
        %v2356 = vadd.f32 %v2110, %v2343
        %v2357 = vadd.f32 %v2111, %v2345
        %v2358 = vadd.f32 %v2112, %v2348
        %v2359 = vadd.f32 %v2113, %v2350
        %v2360 = vld [vmem:[%s672] sm:$0xf]
        %v2361 = vld [vmem:[%s672 + $0x8] sm:$0xf]
        %v2362 = vld [vmem:[%s672 + $0x10] sm:$0xf]
        %v2363 = vld [vmem:[%s672 + $0x18] sm:$0xf]
        %v2364 = vld [vmem:[%s672 + $0x20] sm:$0xf]
        %v2365 = vld [vmem:[%s672 + $0x28] sm:$0xf]
        %v2366 = vld [vmem:[%s672 + $0x30] sm:$0xf]
        %v2367 = vld [vmem:[%s672 + $0x38] sm:$0xf]
        %s2368 = scalar_lea.vmem [#allocation8], 384
        %v2369 = vld [vmem:[%s2368] sm:$0xf]
        %v2370 = vld [vmem:[%s2368 + $0x4] sm:$0xf]
        %v2371 = vld [vmem:[%s2368 + $0x8] sm:$0xf]
        %v2372 = vld [vmem:[%s2368 + $0xc] sm:$0xf]
        %v2373 = vld [vmem:[%s2368 + $0x10] sm:$0xf]
        %v2374 = vld [vmem:[%s2368 + $0x14] sm:$0xf]
        %v2375 = vld [vmem:[%s2368 + $0x18] sm:$0xf]
        %v2376 = vld [vmem:[%s2368 + $0x1c] sm:$0xf]
        %v2377 = vld [vmem:[%s2368 + $0x20] sm:$0xf]
        %v2378 = vld [vmem:[%s2368 + $0x24] sm:$0xf]
        %v2379 = vld [vmem:[%s2368 + $0x28] sm:$0xf]
        %v2380 = vld [vmem:[%s2368 + $0x2c] sm:$0xf]
        %v2381 = vld [vmem:[%s2368 + $0x30] sm:$0xf]
        %v2382 = vld [vmem:[%s2368 + $0x34] sm:$0xf]
        %v2383 = vld [vmem:[%s2368 + $0x38] sm:$0xf]
        %v2384 = vld [vmem:[%s2368 + $0x3c] sm:$0xf]
        %v2393 = vunpack.c.l.b16 %v2360
        %v2394 = vunpack.c.l.b16 %v2361
        %v2395 = vunpack.c.l.b16 %v2362
        %v2396 = vunpack.c.l.b16 %v2363
        %v2397 = vunpack.c.l.b16 %v2364
        %v2398 = vunpack.c.l.b16 %v2365
        %v2399 = vunpack.c.l.b16 %v2366
        %v2400 = vunpack.c.l.b16 %v2367
        %v2401 = vpack.c.b16 %v2394, %v2393
        %v2402 = vpack.c.b16 %v2396, %v2395
        %v2403 = vpack.c.b16 %v2398, %v2397
        %v2404 = vpack.c.b16 %v2400, %v2399
        %v2425 = vunpack.c.l.b16 %v2369
        %v2426 = vunpack.c.l.b16 %v2370
        %v2427 = vunpack.c.l.b16 %v2371
        %v2428 = vunpack.c.l.b16 %v2372
        %v2429 = vunpack.c.l.b16 %v2373
        %v2430 = vunpack.c.l.b16 %v2374
        %v2431 = vunpack.c.l.b16 %v2375
        %v2432 = vunpack.c.l.b16 %v2376
        %v2433 = vunpack.c.l.b16 %v2377
        %v2434 = vunpack.c.l.b16 %v2378
        %v2435 = vunpack.c.l.b16 %v2379
        %v2436 = vunpack.c.l.b16 %v2380
        %v2437 = vunpack.c.l.b16 %v2381
        %v2438 = vunpack.c.l.b16 %v2382
        %v2439 = vunpack.c.l.b16 %v2383
        %v2440 = vunpack.c.l.b16 %v2384
        %v2441 = vpack.c.b16 %v2426, %v2425
        %v2442 = vpack.c.b16 %v2428, %v2427
        %v2443 = vpack.c.b16 %v2430, %v2429
        %v2444 = vpack.c.b16 %v2432, %v2431
        %v2445 = vpack.c.b16 %v2434, %v2433
        %v2446 = vpack.c.b16 %v2436, %v2435
        %v2447 = vpack.c.b16 %v2438, %v2437
        %v2448 = vpack.c.b16 %v2440, %v2439
        %2457 = vmatpush.bf16.msra.mxu0 %v2448
        %2458 = vmatpush.bf16.msra.mxu0 %v2447
        %2459 = vmatpush.bf16.msra.mxu0 %v2446
        %2460 = vmatpush.bf16.msra.mxu0 %v2445
        %2461 = vmatpush.bf16.msra.mxu0 %v2444
        %2462 = vmatpush.bf16.msra.mxu0 %v2443
        %2463 = vmatpush.bf16.msra.mxu0 %v2442
        %2464 = vmatpush.bf16.msra.mxu0 %v2441
        %2465 = vmatmul.bf16.gmra.mxu0 %v2401
        %v2466 = vpop.f32.mrf.mxu0
        %v2467 = vadd.f32 0.0, %v2466
        %v2468 = vpop.f32.mrf.mxu0
        %v2469 = vadd.f32 0.0, %v2468
        %2470 = vmatmul.bf16.gmra.mxu0 %v2402
        %v2471 = vpop.f32.mrf.mxu0
        %v2472 = vadd.f32 0.0, %v2471
        %v2473 = vpop.f32.mrf.mxu0
        %v2474 = vadd.f32 0.0, %v2473
        %2475 = vmatmul.bf16.gmra.mxu0 %v2403
        %v2476 = vpop.f32.mrf.mxu0
        %v2477 = vadd.f32 0.0, %v2476
        %v2478 = vpop.f32.mrf.mxu0
        %v2479 = vadd.f32 0.0, %v2478
        %2480 = vmatmul.bf16.gmra.mxu0 %v2404
        %v2481 = vpop.f32.mrf.mxu0
        %v2482 = vadd.f32 0.0, %v2481
        %v2483 = vpop.f32.mrf.mxu0
        %v2484 = vadd.f32 0.0, %v2483
        %2485 = vdwg.mxu0
        %v2486 = vadd.f32 %v2352, %v2467
        %v2487 = vadd.f32 %v2353, %v2469
        %v2488 = vadd.f32 %v2354, %v2472
        %v2489 = vadd.f32 %v2355, %v2474
        %v2490 = vadd.f32 %v2356, %v2477
        %v2491 = vadd.f32 %v2357, %v2479
        %v2492 = vadd.f32 %v2358, %v2482
        %v2493 = vadd.f32 %v2359, %v2484
        %v2494 = vld [vmem:[%s911] sm:$0xf]
        %v2495 = vld [vmem:[%s911 + $0x8] sm:$0xf]
        %v2496 = vld [vmem:[%s911 + $0x10] sm:$0xf]
        %v2497 = vld [vmem:[%s911 + $0x18] sm:$0xf]
        %v2498 = vld [vmem:[%s911 + $0x20] sm:$0xf]
        %v2499 = vld [vmem:[%s911 + $0x28] sm:$0xf]
        %v2500 = vld [vmem:[%s911 + $0x30] sm:$0xf]
        %v2501 = vld [vmem:[%s911 + $0x38] sm:$0xf]
        %s2502 = scalar_lea.vmem [#allocation8], 448
        %v2503 = vld [vmem:[%s2502] sm:$0xf]
        %v2504 = vld [vmem:[%s2502 + $0x4] sm:$0xf]
        %v2505 = vld [vmem:[%s2502 + $0x8] sm:$0xf]
        %v2506 = vld [vmem:[%s2502 + $0xc] sm:$0xf]
        %v2507 = vld [vmem:[%s2502 + $0x10] sm:$0xf]
        %v2508 = vld [vmem:[%s2502 + $0x14] sm:$0xf]
        %v2509 = vld [vmem:[%s2502 + $0x18] sm:$0xf]
        %v2510 = vld [vmem:[%s2502 + $0x1c] sm:$0xf]
        %v2511 = vld [vmem:[%s2502 + $0x20] sm:$0xf]
        %v2512 = vld [vmem:[%s2502 + $0x24] sm:$0xf]
        %v2513 = vld [vmem:[%s2502 + $0x28] sm:$0xf]
        %v2514 = vld [vmem:[%s2502 + $0x2c] sm:$0xf]
        %v2515 = vld [vmem:[%s2502 + $0x30] sm:$0xf]
        %v2516 = vld [vmem:[%s2502 + $0x34] sm:$0xf]
        %v2517 = vld [vmem:[%s2502 + $0x38] sm:$0xf]
        %v2518 = vld [vmem:[%s2502 + $0x3c] sm:$0xf]
        %v2527 = vunpack.c.l.b16 %v2494
        %v2528 = vunpack.c.l.b16 %v2495
        %v2529 = vunpack.c.l.b16 %v2496
        %v2530 = vunpack.c.l.b16 %v2497
        %v2531 = vunpack.c.l.b16 %v2498
        %v2532 = vunpack.c.l.b16 %v2499
        %v2533 = vunpack.c.l.b16 %v2500
        %v2534 = vunpack.c.l.b16 %v2501
        %v2535 = vpack.c.b16 %v2528, %v2527
        %v2536 = vpack.c.b16 %v2530, %v2529
        %v2537 = vpack.c.b16 %v2532, %v2531
        %v2538 = vpack.c.b16 %v2534, %v2533
        %v2559 = vunpack.c.l.b16 %v2503
        %v2560 = vunpack.c.l.b16 %v2504
        %v2561 = vunpack.c.l.b16 %v2505
        %v2562 = vunpack.c.l.b16 %v2506
        %v2563 = vunpack.c.l.b16 %v2507
        %v2564 = vunpack.c.l.b16 %v2508
        %v2565 = vunpack.c.l.b16 %v2509
        %v2566 = vunpack.c.l.b16 %v2510
        %v2567 = vunpack.c.l.b16 %v2511
        %v2568 = vunpack.c.l.b16 %v2512
        %v2569 = vunpack.c.l.b16 %v2513
        %v2570 = vunpack.c.l.b16 %v2514
        %v2571 = vunpack.c.l.b16 %v2515
        %v2572 = vunpack.c.l.b16 %v2516
        %v2573 = vunpack.c.l.b16 %v2517
        %v2574 = vunpack.c.l.b16 %v2518
        %v2575 = vpack.c.b16 %v2560, %v2559
        %v2576 = vpack.c.b16 %v2562, %v2561
        %v2577 = vpack.c.b16 %v2564, %v2563
        %v2578 = vpack.c.b16 %v2566, %v2565
        %v2579 = vpack.c.b16 %v2568, %v2567
        %v2580 = vpack.c.b16 %v2570, %v2569
        %v2581 = vpack.c.b16 %v2572, %v2571
        %v2582 = vpack.c.b16 %v2574, %v2573
        %2591 = vmatpush.bf16.msra.mxu0 %v2582
        %2592 = vmatpush.bf16.msra.mxu0 %v2581
        %2593 = vmatpush.bf16.msra.mxu0 %v2580
        %2594 = vmatpush.bf16.msra.mxu0 %v2579
        %2595 = vmatpush.bf16.msra.mxu0 %v2578
        %2596 = vmatpush.bf16.msra.mxu0 %v2577
        %2597 = vmatpush.bf16.msra.mxu0 %v2576
        %2598 = vmatpush.bf16.msra.mxu0 %v2575
        %2599 = vmatmul.bf16.gmra.mxu0 %v2535
        %v2600 = vpop.f32.mrf.mxu0
        %v2601 = vadd.f32 0.0, %v2600
        %v2602 = vpop.f32.mrf.mxu0
        %v2603 = vadd.f32 0.0, %v2602
        %2604 = vmatmul.bf16.gmra.mxu0 %v2536
        %v2605 = vpop.f32.mrf.mxu0
        %v2606 = vadd.f32 0.0, %v2605
        %v2607 = vpop.f32.mrf.mxu0
        %v2608 = vadd.f32 0.0, %v2607
        %2609 = vmatmul.bf16.gmra.mxu0 %v2537
        %v2610 = vpop.f32.mrf.mxu0
        %v2611 = vadd.f32 0.0, %v2610
        %v2612 = vpop.f32.mrf.mxu0
        %v2613 = vadd.f32 0.0, %v2612
        %2614 = vmatmul.bf16.gmra.mxu0 %v2538
        %v2615 = vpop.f32.mrf.mxu0
        %v2616 = vadd.f32 0.0, %v2615
        %v2617 = vpop.f32.mrf.mxu0
        %v2618 = vadd.f32 0.0, %v2617
        %2619 = vdwg.mxu0
        %v2620 = vadd.f32 %v2486, %v2601
        %v2621 = vadd.f32 %v2487, %v2603
        %v2622 = vadd.f32 %v2488, %v2606
        %v2623 = vadd.f32 %v2489, %v2608
        %v2624 = vadd.f32 %v2490, %v2611
        %v2625 = vadd.f32 %v2491, %v2613
        %v2626 = vadd.f32 %v2492, %v2616
        %v2627 = vadd.f32 %v2493, %v2618
        %v2628 = vld [vmem:[%s672] sm:$0xf]
        %v2629 = vld [vmem:[%s672 + $0x4] sm:$0x1]
        %v2630 = vld [vmem:[%s672 + $0x8] sm:$0xf]
        %v2631 = vld [vmem:[%s672 + $0xc] sm:$0x1]
        %v2632 = vld [vmem:[%s672 + $0x10] sm:$0xf]
        %v2633 = vld [vmem:[%s672 + $0x14] sm:$0x1]
        %v2634 = vld [vmem:[%s672 + $0x18] sm:$0xf]
        %v2635 = vld [vmem:[%s672 + $0x1c] sm:$0x1]
        %v2636 = vld [vmem:[%s672 + $0x20] sm:$0xf]
        %v2637 = vld [vmem:[%s672 + $0x24] sm:$0x1]
        %v2638 = vld [vmem:[%s672 + $0x28] sm:$0xf]
        %v2639 = vld [vmem:[%s672 + $0x2c] sm:$0x1]
        %v2640 = vld [vmem:[%s672 + $0x30] sm:$0xf]
        %v2641 = vld [vmem:[%s672 + $0x34] sm:$0x1]
        %v2642 = vld [vmem:[%s672 + $0x38] sm:$0xf]
        %v2643 = vld [vmem:[%s672 + $0x3c] sm:$0x1]
        %v2645 = vshrl.u32 %v2628, 16
        %v2647 = vrot.slane %v2645, 4
        %v2648 = vshll.u32 %v2628, 16
        %v2650 = vrot.slane %v2648, 5
        %v2651 = vor.u32 %v2647, %v2650
        %v2652 = vrot.slane %v2651, 4
        %v2654 = vshll.u32 %v2629, 16
        %v2656 = vrot.slane %v2654, 5
        %v2657 = vsel %vm1615, %v2652, %v2656
        %v2659 = vshrl.u32 %v2630, 16
        %v2661 = vrot.slane %v2659, 4
        %v2662 = vshll.u32 %v2630, 16
        %v2664 = vrot.slane %v2662, 5
        %v2665 = vor.u32 %v2661, %v2664
        %v2666 = vrot.slane %v2665, 4
        %v2668 = vshll.u32 %v2631, 16
        %v2670 = vrot.slane %v2668, 5
        %v2671 = vsel %vm1615, %v2666, %v2670
        %v2673 = vshrl.u32 %v2632, 16
        %v2675 = vrot.slane %v2673, 4
        %v2676 = vshll.u32 %v2632, 16
        %v2678 = vrot.slane %v2676, 5
        %v2679 = vor.u32 %v2675, %v2678
        %v2680 = vrot.slane %v2679, 4
        %v2682 = vshll.u32 %v2633, 16
        %v2684 = vrot.slane %v2682, 5
        %v2685 = vsel %vm1615, %v2680, %v2684
        %v2687 = vshrl.u32 %v2634, 16
        %v2689 = vrot.slane %v2687, 4
        %v2690 = vshll.u32 %v2634, 16
        %v2692 = vrot.slane %v2690, 5
        %v2693 = vor.u32 %v2689, %v2692
        %v2694 = vrot.slane %v2693, 4
        %v2696 = vshll.u32 %v2635, 16
        %v2698 = vrot.slane %v2696, 5
        %v2699 = vsel %vm1615, %v2694, %v2698
        %v2701 = vshrl.u32 %v2636, 16
        %v2703 = vrot.slane %v2701, 4
        %v2704 = vshll.u32 %v2636, 16
        %v2706 = vrot.slane %v2704, 5
        %v2707 = vor.u32 %v2703, %v2706
        %v2708 = vrot.slane %v2707, 4
        %v2710 = vshll.u32 %v2637, 16
        %v2712 = vrot.slane %v2710, 5
        %v2713 = vsel %vm1615, %v2708, %v2712
        %v2715 = vshrl.u32 %v2638, 16
        %v2717 = vrot.slane %v2715, 4
        %v2718 = vshll.u32 %v2638, 16
        %v2720 = vrot.slane %v2718, 5
        %v2721 = vor.u32 %v2717, %v2720
        %v2722 = vrot.slane %v2721, 4
        %v2724 = vshll.u32 %v2639, 16
        %v2726 = vrot.slane %v2724, 5
        %v2727 = vsel %vm1615, %v2722, %v2726
        %v2729 = vshrl.u32 %v2640, 16
        %v2731 = vrot.slane %v2729, 4
        %v2732 = vshll.u32 %v2640, 16
        %v2734 = vrot.slane %v2732, 5
        %v2735 = vor.u32 %v2731, %v2734
        %v2736 = vrot.slane %v2735, 4
        %v2738 = vshll.u32 %v2641, 16
        %v2740 = vrot.slane %v2738, 5
        %v2741 = vsel %vm1615, %v2736, %v2740
        %v2743 = vshrl.u32 %v2642, 16
        %v2745 = vrot.slane %v2743, 4
        %v2746 = vshll.u32 %v2642, 16
        %v2748 = vrot.slane %v2746, 5
        %v2749 = vor.u32 %v2745, %v2748
        %v2750 = vrot.slane %v2749, 4
        %v2752 = vshll.u32 %v2643, 16
        %v2754 = vrot.slane %v2752, 5
        %v2755 = vsel %vm1615, %v2750, %v2754
        %s2756 = scalar_lea.vmem [#allocation8], 512
        %v2757 = vld [vmem:[%s2756] sm:$0xf]
        %v2758 = vld [vmem:[%s2756 + $0x4] sm:$0xf]
        %v2759 = vld [vmem:[%s2756 + $0x8] sm:$0xf]
        %v2760 = vld [vmem:[%s2756 + $0xc] sm:$0xf]
        %v2761 = vld [vmem:[%s2756 + $0x10] sm:$0xf]
        %v2762 = vld [vmem:[%s2756 + $0x14] sm:$0xf]
        %v2763 = vld [vmem:[%s2756 + $0x18] sm:$0xf]
        %v2764 = vld [vmem:[%s2756 + $0x1c] sm:$0xf]
        %v2765 = vld [vmem:[%s2756 + $0x20] sm:$0xf]
        %v2766 = vld [vmem:[%s2756 + $0x24] sm:$0xf]
        %v2767 = vld [vmem:[%s2756 + $0x28] sm:$0xf]
        %v2768 = vld [vmem:[%s2756 + $0x2c] sm:$0xf]
        %v2769 = vld [vmem:[%s2756 + $0x30] sm:$0xf]
        %v2770 = vld [vmem:[%s2756 + $0x34] sm:$0xf]
        %v2771 = vld [vmem:[%s2756 + $0x38] sm:$0xf]
        %v2772 = vld [vmem:[%s2756 + $0x3c] sm:$0xf]
        %v2773 = vunpack.c.l.b16 %v2657
        %v2774 = vunpack.c.l.b16 %v2671
        %v2775 = vunpack.c.l.b16 %v2685
        %v2776 = vunpack.c.l.b16 %v2699
        %v2777 = vunpack.c.l.b16 %v2713
        %v2778 = vunpack.c.l.b16 %v2727
        %v2779 = vunpack.c.l.b16 %v2741
        %v2780 = vunpack.c.l.b16 %v2755
        %v2781 = vpack.c.b16 %v2774, %v2773
        %v2782 = vpack.c.b16 %v2776, %v2775
        %v2783 = vpack.c.b16 %v2778, %v2777
        %v2784 = vpack.c.b16 %v2780, %v2779
        %v2805 = vunpack.c.l.b16 %v2757
        %v2806 = vunpack.c.l.b16 %v2758
        %v2807 = vunpack.c.l.b16 %v2759
        %v2808 = vunpack.c.l.b16 %v2760
        %v2809 = vunpack.c.l.b16 %v2761
        %v2810 = vunpack.c.l.b16 %v2762
        %v2811 = vunpack.c.l.b16 %v2763
        %v2812 = vunpack.c.l.b16 %v2764
        %v2813 = vunpack.c.l.b16 %v2765
        %v2814 = vunpack.c.l.b16 %v2766
        %v2815 = vunpack.c.l.b16 %v2767
        %v2816 = vunpack.c.l.b16 %v2768
        %v2817 = vunpack.c.l.b16 %v2769
        %v2818 = vunpack.c.l.b16 %v2770
        %v2819 = vunpack.c.l.b16 %v2771
        %v2820 = vunpack.c.l.b16 %v2772
        %v2821 = vpack.c.b16 %v2806, %v2805
        %v2822 = vpack.c.b16 %v2808, %v2807
        %v2823 = vpack.c.b16 %v2810, %v2809
        %v2824 = vpack.c.b16 %v2812, %v2811
        %v2825 = vpack.c.b16 %v2814, %v2813
        %v2826 = vpack.c.b16 %v2816, %v2815
        %v2827 = vpack.c.b16 %v2818, %v2817
        %v2828 = vpack.c.b16 %v2820, %v2819
        %2837 = vmatpush.bf16.msra.mxu0 %v2828
        %2838 = vmatpush.bf16.msra.mxu0 %v2827
        %2839 = vmatpush.bf16.msra.mxu0 %v2826
        %2840 = vmatpush.bf16.msra.mxu0 %v2825
        %2841 = vmatpush.bf16.msra.mxu0 %v2824
        %2842 = vmatpush.bf16.msra.mxu0 %v2823
        %2843 = vmatpush.bf16.msra.mxu0 %v2822
        %2844 = vmatpush.bf16.msra.mxu0 %v2821
        %2845 = vmatmul.bf16.gmra.mxu0 %v2781
        %v2846 = vpop.f32.mrf.mxu0
        %v2847 = vadd.f32 0.0, %v2846
        %v2848 = vpop.f32.mrf.mxu0
        %v2849 = vadd.f32 0.0, %v2848
        %2850 = vmatmul.bf16.gmra.mxu0 %v2782
        %v2851 = vpop.f32.mrf.mxu0
        %v2852 = vadd.f32 0.0, %v2851
        %v2853 = vpop.f32.mrf.mxu0
        %v2854 = vadd.f32 0.0, %v2853
        %2855 = vmatmul.bf16.gmra.mxu0 %v2783
        %v2856 = vpop.f32.mrf.mxu0
        %v2857 = vadd.f32 0.0, %v2856
        %v2858 = vpop.f32.mrf.mxu0
        %v2859 = vadd.f32 0.0, %v2858
        %2860 = vmatmul.bf16.gmra.mxu0 %v2784
        %v2861 = vpop.f32.mrf.mxu0
        %v2862 = vadd.f32 0.0, %v2861
        %v2863 = vpop.f32.mrf.mxu0
        %v2864 = vadd.f32 0.0, %v2863
        %2865 = vdwg.mxu0
        %v2866 = vadd.f32 %v2620, %v2847
        %v2867 = vadd.f32 %v2621, %v2849
        %v2868 = vadd.f32 %v2622, %v2852
        %v2869 = vadd.f32 %v2623, %v2854
        %v2870 = vadd.f32 %v2624, %v2857
        %v2871 = vadd.f32 %v2625, %v2859
        %v2872 = vadd.f32 %v2626, %v2862
        %v2873 = vadd.f32 %v2627, %v2864
        %v2875 = vperm.slane %v437, 0
        %v2877 = vadd.f32 %v2866, %v2875
        %v2878 = vadd.f32 %v2867, %v2875
        %v2879 = vadd.f32 %v2868, %v2875
        %v2880 = vadd.f32 %v2869, %v2875
        %v2881 = vadd.f32 %v2870, %v2875
        %v2882 = vadd.f32 %v2871, %v2875
        %v2883 = vadd.f32 %v2872, %v2875
        %v2884 = vadd.f32 %v2873, %v2875
        %v2885 = vpack.c.bf16 %v2878, %v2877
        %v2886 = vpack.c.bf16 %v2880, %v2879
        %v2887 = vpack.c.bf16 %v2882, %v2881
        %v2888 = vpack.c.bf16 %v2884, %v2883
        %v2889 = vld [vmem:[#allocation9] sm:$0xf]
        %v2890 = vld [vmem:[#allocation9 + $0x4] sm:$0xf]
        %v2891 = vld [vmem:[#allocation9 + $0x8] sm:$0xf]
        %v2892 = vld [vmem:[#allocation9 + $0xc] sm:$0xf]
        %v2893 = vld [vmem:[#allocation9 + $0x10] sm:$0xf]
        %v2894 = vld [vmem:[#allocation9 + $0x14] sm:$0xf]
        %v2895 = vld [vmem:[#allocation9 + $0x18] sm:$0xf]
        %v2896 = vld [vmem:[#allocation9 + $0x1c] sm:$0xf]
        %v2897 = vld [vmem:[#allocation9 + $0x20] sm:$0xf]
        %v2898 = vld [vmem:[#allocation9 + $0x24] sm:$0xf]
        %v2899 = vld [vmem:[#allocation9 + $0x28] sm:$0xf]
        %v2900 = vld [vmem:[#allocation9 + $0x2c] sm:$0xf]
        %v2901 = vld [vmem:[#allocation9 + $0x30] sm:$0xf]
        %v2902 = vld [vmem:[#allocation9 + $0x34] sm:$0xf]
        %v2903 = vld [vmem:[#allocation9 + $0x38] sm:$0xf]
        %v2904 = vld [vmem:[#allocation9 + $0x3c] sm:$0xf]
        %v2906 = vperm.slane %v438, 0
        %v2924 = vunpack.c.l.b16 %v2889
        %v2925 = vunpack.c.l.b16 %v2890
        %v2926 = vunpack.c.l.b16 %v2891
        %v2927 = vunpack.c.l.b16 %v2892
        %v2928 = vunpack.c.l.b16 %v2893
        %v2929 = vunpack.c.l.b16 %v2894
        %v2930 = vunpack.c.l.b16 %v2895
        %v2931 = vunpack.c.l.b16 %v2896
        %v2932 = vunpack.c.l.b16 %v2897
        %v2933 = vunpack.c.l.b16 %v2898
        %v2934 = vunpack.c.l.b16 %v2899
        %v2935 = vunpack.c.l.b16 %v2900
        %v2936 = vunpack.c.l.b16 %v2901
        %v2937 = vunpack.c.l.b16 %v2902
        %v2938 = vunpack.c.l.b16 %v2903
        %v2939 = vunpack.c.l.b16 %v2904
        %v2940 = vpack.c.b16 %v2925, %v2924
        %v2941 = vpack.c.b16 %v2927, %v2926
        %v2942 = vpack.c.b16 %v2929, %v2928
        %v2943 = vpack.c.b16 %v2931, %v2930
        %v2944 = vpack.c.b16 %v2933, %v2932
        %v2945 = vpack.c.b16 %v2935, %v2934
        %v2946 = vpack.c.b16 %v2937, %v2936
        %v2947 = vpack.c.b16 %v2939, %v2938
        %2956 = vmatpush.bf16.msra.mxu0 %v2947
        %2957 = vmatpush.bf16.msra.mxu0 %v2946
        %2958 = vmatpush.bf16.msra.mxu0 %v2945
        %2959 = vmatpush.bf16.msra.mxu0 %v2944
        %2960 = vmatpush.bf16.msra.mxu0 %v2943
        %2961 = vmatpush.bf16.msra.mxu0 %v2942
        %2962 = vmatpush.bf16.msra.mxu0 %v2941
        %2963 = vmatpush.bf16.msra.mxu0 %v2940
        %2964 = vmatmul.bf16.gmra.mxu0 %v2885
        %v2965 = vpop.f32.mrf.mxu0
        %v2966 = vadd.f32 %v2906, %v2965
        %v2967 = vpop.f32.mrf.mxu0
        %v2968 = vadd.f32 %v2906, %v2967
        %2969 = vmatmul.bf16.gmra.mxu0 %v2886
        %v2970 = vpop.f32.mrf.mxu0
        %v2971 = vadd.f32 %v2906, %v2970
        %v2972 = vpop.f32.mrf.mxu0
        %v2973 = vadd.f32 %v2906, %v2972
        %2974 = vmatmul.bf16.gmra.mxu0 %v2887
        %v2975 = vpop.f32.mrf.mxu0
        %v2976 = vadd.f32 %v2906, %v2975
        %v2977 = vpop.f32.mrf.mxu0
        %v2978 = vadd.f32 %v2906, %v2977
        %2979 = vmatmul.bf16.gmra.mxu0 %v2888
        %v2980 = vpop.f32.mrf.mxu0
        %v2981 = vadd.f32 %v2906, %v2980
        %v2982 = vpop.f32.mrf.mxu0
        %v2983 = vadd.f32 %v2906, %v2982
        %2984 = vdwg.mxu0
        %v2985 = vld [vmem:[%s1153] sm:$0xf]
        %v2986 = vld [vmem:[%s1153 + $0x8] sm:$0xf]
        %v2987 = vld [vmem:[%s1153 + $0x10] sm:$0xf]
        %v2988 = vld [vmem:[%s1153 + $0x18] sm:$0xf]
        %v2989 = vld [vmem:[%s1153 + $0x20] sm:$0xf]
        %v2990 = vld [vmem:[%s1153 + $0x28] sm:$0xf]
        %v2991 = vld [vmem:[%s1153 + $0x30] sm:$0xf]
        %v2992 = vld [vmem:[%s1153 + $0x38] sm:$0xf]
        %v2993 = vld [vmem:[#allocation11] sm:$0xf]
        %v2994 = vld [vmem:[#allocation11 + $0x4] sm:$0xf]
        %v2995 = vld [vmem:[#allocation11 + $0x8] sm:$0xf]
        %v2996 = vld [vmem:[#allocation11 + $0xc] sm:$0xf]
        %v2997 = vld [vmem:[#allocation11 + $0x10] sm:$0xf]
        %v2998 = vld [vmem:[#allocation11 + $0x14] sm:$0xf]
        %v2999 = vld [vmem:[#allocation11 + $0x18] sm:$0xf]
        %v3000 = vld [vmem:[#allocation11 + $0x1c] sm:$0xf]
        %v3001 = vld [vmem:[#allocation11 + $0x20] sm:$0xf]
        %v3002 = vld [vmem:[#allocation11 + $0x24] sm:$0xf]
        %v3003 = vld [vmem:[#allocation11 + $0x28] sm:$0xf]
        %v3004 = vld [vmem:[#allocation11 + $0x2c] sm:$0xf]
        %v3005 = vld [vmem:[#allocation11 + $0x30] sm:$0xf]
        %v3006 = vld [vmem:[#allocation11 + $0x34] sm:$0xf]
        %v3007 = vld [vmem:[#allocation11 + $0x38] sm:$0xf]
        %v3008 = vld [vmem:[#allocation11 + $0x3c] sm:$0xf]
        %v3009 = vld [vmem:[%s8] sm:$0x1]
        %v3011 = vperm.slane %v3009, 0
        %v3021 = vunpack.c.l.b16 %v2985
        %v3022 = vunpack.c.l.b16 %v2986
        %v3023 = vunpack.c.l.b16 %v2987
        %v3024 = vunpack.c.l.b16 %v2988
        %v3025 = vunpack.c.l.b16 %v2989
        %v3026 = vunpack.c.l.b16 %v2990
        %v3027 = vunpack.c.l.b16 %v2991
        %v3028 = vunpack.c.l.b16 %v2992
        %v3029 = vpack.c.b16 %v3022, %v3021
        %v3030 = vpack.c.b16 %v3024, %v3023
        %v3031 = vpack.c.b16 %v3026, %v3025
        %v3032 = vpack.c.b16 %v3028, %v3027
        %v3053 = vunpack.c.l.b16 %v2993
        %v3054 = vunpack.c.l.b16 %v2994
        %v3055 = vunpack.c.l.b16 %v2995
        %v3056 = vunpack.c.l.b16 %v2996
        %v3057 = vunpack.c.l.b16 %v2997
        %v3058 = vunpack.c.l.b16 %v2998
        %v3059 = vunpack.c.l.b16 %v2999
        %v3060 = vunpack.c.l.b16 %v3000
        %v3061 = vunpack.c.l.b16 %v3001
        %v3062 = vunpack.c.l.b16 %v3002
        %v3063 = vunpack.c.l.b16 %v3003
        %v3064 = vunpack.c.l.b16 %v3004
        %v3065 = vunpack.c.l.b16 %v3005
        %v3066 = vunpack.c.l.b16 %v3006
        %v3067 = vunpack.c.l.b16 %v3007
        %v3068 = vunpack.c.l.b16 %v3008
        %v3069 = vpack.c.b16 %v3054, %v3053
        %v3070 = vpack.c.b16 %v3056, %v3055
        %v3071 = vpack.c.b16 %v3058, %v3057
        %v3072 = vpack.c.b16 %v3060, %v3059
        %v3073 = vpack.c.b16 %v3062, %v3061
        %v3074 = vpack.c.b16 %v3064, %v3063
        %v3075 = vpack.c.b16 %v3066, %v3065
        %v3076 = vpack.c.b16 %v3068, %v3067
        %3085 = vmatpush.bf16.msra.mxu0 %v3076
        %3086 = vmatpush.bf16.msra.mxu0 %v3075
        %3087 = vmatpush.bf16.msra.mxu0 %v3074
        %3088 = vmatpush.bf16.msra.mxu0 %v3073
        %3089 = vmatpush.bf16.msra.mxu0 %v3072
        %3090 = vmatpush.bf16.msra.mxu0 %v3071
        %3091 = vmatpush.bf16.msra.mxu0 %v3070
        %3092 = vmatpush.bf16.msra.mxu0 %v3069
        %3093 = vmatmul.bf16.gmra.mxu0 %v3029
        %v3094 = vpop.f32.mrf.mxu0
        %v3095 = vadd.f32 %v3011, %v3094
        %v3096 = vpop.f32.mrf.mxu0
        %v3097 = vadd.f32 %v3011, %v3096
        %3098 = vmatmul.bf16.gmra.mxu0 %v3030
        %v3099 = vpop.f32.mrf.mxu0
        %v3100 = vadd.f32 %v3011, %v3099
        %v3101 = vpop.f32.mrf.mxu0
        %v3102 = vadd.f32 %v3011, %v3101
        %3103 = vmatmul.bf16.gmra.mxu0 %v3031
        %v3104 = vpop.f32.mrf.mxu0
        %v3105 = vadd.f32 %v3011, %v3104
        %v3106 = vpop.f32.mrf.mxu0
        %v3107 = vadd.f32 %v3011, %v3106
        %3108 = vmatmul.bf16.gmra.mxu0 %v3032
        %v3109 = vpop.f32.mrf.mxu0
        %v3110 = vadd.f32 %v3011, %v3109
        %v3111 = vpop.f32.mrf.mxu0
        %v3112 = vadd.f32 %v3011, %v3111
        %3113 = vdwg.mxu0
        %v3114 = vadd.f32 %v2966, %v3095
        %v3115 = vadd.f32 %v2968, %v3097
        %v3116 = vadd.f32 %v2971, %v3100
        %v3117 = vadd.f32 %v2973, %v3102
        %v3118 = vadd.f32 %v2976, %v3105
        %v3119 = vadd.f32 %v2978, %v3107
        %v3120 = vadd.f32 %v2981, %v3110
        %v3121 = vadd.f32 %v2983, %v3112
        %v3122 = vmax.f32 %v3114, 0.0
        %v3123 = vmax.f32 %v3115, 0.0
        %v3124 = vmax.f32 %v3116, 0.0
        %v3125 = vmax.f32 %v3117, 0.0
        %v3126 = vmax.f32 %v3118, 0.0
        %v3127 = vmax.f32 %v3119, 0.0
        %v3128 = vmax.f32 %v3120, 0.0
        %v3129 = vmax.f32 %v3121, 0.0
        %v3130 = vpack.c.bf16 %v3122, %v3122
        %v3131 = vpack.c.bf16 %v3123, %v3123
        %v3132 = vpack.c.bf16 %v3124, %v3124
        %v3133 = vpack.c.bf16 %v3125, %v3125
        %v3134 = vpack.c.bf16 %v3126, %v3126
        %v3135 = vpack.c.bf16 %v3127, %v3127
        %v3136 = vpack.c.bf16 %v3128, %v3128
        %v3137 = vpack.c.bf16 %v3129, %v3129
        %v3139 = vshrl.u32 %v3130, 16
        %v3141 = vrot.slane %v3139, 7
        %v3142 = vshll.u32 %v3130, 16
        %v3144 = vor.u32 %v3141, %v3142
        %v3145 = vrot.slane %v3141, 4
        %v3147 = vshrl.u32 %v3131, 16
        %v3149 = vrot.slane %v3147, 7
        %v3150 = vshll.u32 %v3131, 16
        %v3152 = vor.u32 %v3149, %v3150
        %v3153 = vrot.slane %v3149, 4
        %v3155 = vshrl.u32 %v3132, 16
        %v3157 = vrot.slane %v3155, 7
        %v3158 = vshll.u32 %v3132, 16
        %v3160 = vor.u32 %v3157, %v3158
        %v3161 = vrot.slane %v3157, 4
        %v3163 = vshrl.u32 %v3133, 16
        %v3165 = vrot.slane %v3163, 7
        %v3166 = vshll.u32 %v3133, 16
        %v3168 = vor.u32 %v3165, %v3166
        %v3169 = vrot.slane %v3165, 4
        %v3171 = vshrl.u32 %v3134, 16
        %v3173 = vrot.slane %v3171, 7
        %v3174 = vshll.u32 %v3134, 16
        %v3176 = vor.u32 %v3173, %v3174
        %v3177 = vrot.slane %v3173, 4
        %v3179 = vshrl.u32 %v3135, 16
        %v3181 = vrot.slane %v3179, 7
        %v3182 = vshll.u32 %v3135, 16
        %v3184 = vor.u32 %v3181, %v3182
        %v3185 = vrot.slane %v3181, 4
        %v3187 = vshrl.u32 %v3136, 16
        %v3189 = vrot.slane %v3187, 7
        %v3190 = vshll.u32 %v3136, 16
        %v3192 = vor.u32 %v3189, %v3190
        %v3193 = vrot.slane %v3189, 4
        %v3195 = vshrl.u32 %v3137, 16
        %v3197 = vrot.slane %v3195, 7
        %v3198 = vshll.u32 %v3137, 16
        %v3200 = vor.u32 %v3197, %v3198
        %v3201 = vrot.slane %v3197, 4
        %s3218 = scalar_lea.vmem %s418, 8 [#allocation12]
        %v3219 = vld [vmem:[%s3218] sm:$0xf]
        %v3220 = vsel %vm702, %v3144, %v3219
        %3221 = vst [vmem:[%s3218] sm:$0xf] %v3220
        %v3222 = vld [vmem:[%s3218 + $0x4] sm:$0x1]
        %v3223 = vsel %vm675, %v3145, %v3222
        %3224 = vst [vmem:[%s3218 + $0x4] sm:$0x1] %v3223
        %v3225 = vld [vmem:[%s3218 + $0x8] sm:$0xf]
        %v3226 = vsel %vm702, %v3152, %v3225
        %3227 = vst [vmem:[%s3218 + $0x8] sm:$0xf] %v3226
        %v3228 = vld [vmem:[%s3218 + $0xc] sm:$0x1]
        %v3229 = vsel %vm675, %v3153, %v3228
        %3230 = vst [vmem:[%s3218 + $0xc] sm:$0x1] %v3229
        %v3231 = vld [vmem:[%s3218 + $0x10] sm:$0xf]
        %v3232 = vsel %vm702, %v3160, %v3231
        %3233 = vst [vmem:[%s3218 + $0x10] sm:$0xf] %v3232
        %v3234 = vld [vmem:[%s3218 + $0x14] sm:$0x1]
        %v3235 = vsel %vm675, %v3161, %v3234
        %3236 = vst [vmem:[%s3218 + $0x14] sm:$0x1] %v3235
        %v3237 = vld [vmem:[%s3218 + $0x18] sm:$0xf]
        %v3238 = vsel %vm702, %v3168, %v3237
        %3239 = vst [vmem:[%s3218 + $0x18] sm:$0xf] %v3238
        %v3240 = vld [vmem:[%s3218 + $0x1c] sm:$0x1]
        %v3241 = vsel %vm675, %v3169, %v3240
        %3242 = vst [vmem:[%s3218 + $0x1c] sm:$0x1] %v3241
        %v3243 = vld [vmem:[%s3218 + $0x20] sm:$0xf]
        %v3244 = vsel %vm702, %v3176, %v3243
        %3245 = vst [vmem:[%s3218 + $0x20] sm:$0xf] %v3244
        %v3246 = vld [vmem:[%s3218 + $0x24] sm:$0x1]
        %v3247 = vsel %vm675, %v3177, %v3246
        %3248 = vst [vmem:[%s3218 + $0x24] sm:$0x1] %v3247
        %v3249 = vld [vmem:[%s3218 + $0x28] sm:$0xf]
        %v3250 = vsel %vm702, %v3184, %v3249
        %3251 = vst [vmem:[%s3218 + $0x28] sm:$0xf] %v3250
        %v3252 = vld [vmem:[%s3218 + $0x2c] sm:$0x1]
        %v3253 = vsel %vm675, %v3185, %v3252
        %3254 = vst [vmem:[%s3218 + $0x2c] sm:$0x1] %v3253
        %v3255 = vld [vmem:[%s3218 + $0x30] sm:$0xf]
        %v3256 = vsel %vm702, %v3192, %v3255
        %3257 = vst [vmem:[%s3218 + $0x30] sm:$0xf] %v3256
        %v3258 = vld [vmem:[%s3218 + $0x34] sm:$0x1]
        %v3259 = vsel %vm675, %v3193, %v3258
        %3260 = vst [vmem:[%s3218 + $0x34] sm:$0x1] %v3259
        %v3261 = vld [vmem:[%s3218 + $0x38] sm:$0xf]
        %v3262 = vsel %vm702, %v3200, %v3261
        %3263 = vst [vmem:[%s3218 + $0x38] sm:$0xf] %v3262
        %v3264 = vld [vmem:[%s3218 + $0x3c] sm:$0x1]
        %v3265 = vsel %vm675, %v3201, %v3264
        %3266 = vst [vmem:[%s3218 + $0x3c] sm:$0x1] %v3265
        %3267 = vst [vmem:[%s418] sm:$0xf] 0
        %3268 = vst [vmem:[%s418 + $0x4] sm:$0xf] 0
        %s3269 = scalar_lea.vmem %s418, 72 [#allocation12]
        %3270 = vst [vmem:[%s3269] sm:$0xf] 0
        %3271 = vst [vmem:[%s3269 + $0x4] sm:$0xf] 0
        %v3272 = vld [vmem:[%s3218] sm:$0x1]
        %v3273 = vsel %vm675, 0, %v3272
        %3274 = vst [vmem:[%s3218] sm:$0x1] %v3273
        %v3275 = vld [vmem:[%s3218 + $0x8] sm:$0x1]
        %v3276 = vsel %vm675, 0, %v3275
        %3277 = vst [vmem:[%s3218 + $0x8] sm:$0x1] %v3276
        %v3278 = vld [vmem:[%s3218 + $0x10] sm:$0x1]
        %v3279 = vsel %vm675, 0, %v3278
        %3280 = vst [vmem:[%s3218 + $0x10] sm:$0x1] %v3279
        %v3281 = vld [vmem:[%s3218 + $0x18] sm:$0x1]
        %v3282 = vsel %vm675, 0, %v3281
        %3283 = vst [vmem:[%s3218 + $0x18] sm:$0x1] %v3282
        %v3284 = vld [vmem:[%s3218 + $0x20] sm:$0x1]
        %v3285 = vsel %vm675, 0, %v3284
        %3286 = vst [vmem:[%s3218 + $0x20] sm:$0x1] %v3285
        %v3287 = vld [vmem:[%s3218 + $0x28] sm:$0x1]
        %v3288 = vsel %vm675, 0, %v3287
        %3289 = vst [vmem:[%s3218 + $0x28] sm:$0x1] %v3288
        %v3290 = vld [vmem:[%s3218 + $0x30] sm:$0x1]
        %v3291 = vsel %vm675, 0, %v3290
        %3292 = vst [vmem:[%s3218 + $0x30] sm:$0x1] %v3291
        %v3293 = vld [vmem:[%s3218 + $0x38] sm:$0x1]
        %v3294 = vsel %vm675, 0, %v3293
        %3295 = vst [vmem:[%s3218 + $0x38] sm:$0x1] %v3294
        %v3296 = vld [vmem:[%s3218 + $0x4] sm:$0xf]
        %v3297 = vsel %vm702, 0, %v3296
        %3298 = vst [vmem:[%s3218 + $0x4] sm:$0xf] %v3297
        %v3299 = vld [vmem:[%s3218 + $0xc] sm:$0xf]
        %v3300 = vsel %vm702, 0, %v3299
        %3301 = vst [vmem:[%s3218 + $0xc] sm:$0xf] %v3300
        %v3302 = vld [vmem:[%s3218 + $0x14] sm:$0xf]
        %v3303 = vsel %vm702, 0, %v3302
        %3304 = vst [vmem:[%s3218 + $0x14] sm:$0xf] %v3303
        %v3305 = vld [vmem:[%s3218 + $0x1c] sm:$0xf]
        %v3306 = vsel %vm702, 0, %v3305
        %3307 = vst [vmem:[%s3218 + $0x1c] sm:$0xf] %v3306
        %v3308 = vld [vmem:[%s3218 + $0x24] sm:$0xf]
        %v3309 = vsel %vm702, 0, %v3308
        %3310 = vst [vmem:[%s3218 + $0x24] sm:$0xf] %v3309
        %v3311 = vld [vmem:[%s3218 + $0x2c] sm:$0xf]
        %v3312 = vsel %vm702, 0, %v3311
        %3313 = vst [vmem:[%s3218 + $0x2c] sm:$0xf] %v3312
        %v3314 = vld [vmem:[%s3218 + $0x34] sm:$0xf]
        %v3315 = vsel %vm702, 0, %v3314
        %3316 = vst [vmem:[%s3218 + $0x34] sm:$0xf] %v3315
        %v3317 = vld [vmem:[%s3218 + $0x3c] sm:$0xf]
        %v3318 = vsel %vm702, 0, %v3317
        %3319 = vst [vmem:[%s3218 + $0x3c] sm:$0xf] %v3318
        %s3320 = sand.u32 %s230, 1
        %s3321 = scalar_lea.sflag [#allocation5], %s3320
        %s3322 = sand.u32 %s230, 1
        %s3323 = smul.addr %s3322, 80
        %s3324 = scalar_lea.vmem [#allocation12], %s3323
        // Predicated region
        $region77: #{tpu_custom_call.1} parent=55 // pred_check
          %p3325 = pneg %p240
        $region78: #{tpu_custom_call.1} parent=55 // pred_check_branch
          %3327 = sbr.rel (%p3325) target = $region80
        $region79: #{tpu_custom_call.1} parent=55 // pred_region
          %3329 = vsyncadd %s3321, 0
          %s3330 = smul.addr %s28, 20
          %s3331 = smul.addr %s3330, 4
          %s3332 = scalar_lea.hbm %s9, %s3331
          %s3333 = sshll.u32 %s3324, 4
          %s3334 = int_to_ptr.vmem [resolvable:$true] %s3333
          %s3335 = sshll.u32 %s3332, 4
          %s3336 = int_to_ptr.hbm [resolvable:$true] %s3335
          %3341 = dma.vmem_to_hbm [thread:$0]  %s3334, 1280, %s3336, %s3321, 64, 64, 4
        $region80: #{tpu_custom_call.1} parent=55 // pred_fallthru
          _
      $region56: #{tpu_custom_call.1} parent=5 // pred_fallthru
        _
      %p3342 = scmp.le.s32.totalorder 2, %s23
      // Predicated region
      $region81: #{tpu_custom_call.1} parent=5 // pred_check
        %p3343 = pneg %p3342
      $region82: #{tpu_custom_call.1} parent=5 // pred_check_branch
        %3345 = sbr.rel (%p3343) target = $region84
      $region83: #{tpu_custom_call.1} parent=5 // pred_region
        %s3346 = ssub.s32 %s23, 2
        // Predicated region
        $region85: #{tpu_custom_call.1} parent=83 // pred_check
          %p3347 = pneg %p246
        $region86: #{tpu_custom_call.1} parent=83 // pred_check_branch
          %3349 = sbr.rel (%p3347) target = $region88
        $region87: #{tpu_custom_call.1} parent=83 // pred_region
          %s3350 = sand.u32 %s231, 1
          %s3351 = scalar_lea.sflag [#allocation5], %s3350
          %s3352 = sand.u32 %s231, 1
          %s3353 = smul.addr %s3352, 80
          %s3354 = scalar_lea.vmem [#allocation12], %s3353
          %3356 = dma.done %s3351, 1280
        $region88: #{tpu_custom_call.1} parent=83 // pred_fallthru
          _
      $region84: #{tpu_custom_call.1} parent=5 // pred_fallthru
        _
    $region6: #{tpu_custom_call.1} parent=1 // loop_footer
      %s27 = sadd.s32 1, %s23
    $region7: #{tpu_custom_call.1} parent=1 // loop_footer_branch
      %22 = sbr.rel target = $region3
    $region8: #{tpu_custom_call.1} parent=1 // loop_exit
      _
    %3357 = vsyncpa [#allocation4], 1
    %s3358 = scalar_lea.sflag [#allocation4], 1
    %3359 = vsyncpa %s3358, 1
    %3360 = vsyncpa [#allocation7], 1
    %3361 = vsyncpa [#allocation10], 1
    %3362 = vsyncpa [#allocation5], 1
    %s3363 = scalar_lea.sflag [#allocation5], 1
    %3364 = vsyncpa %s3363, 1

</llo_original>
